<compile_context>
chip_gen: v6e
topology: v6e:2x2x1
jax: 0.10.0
libtpu: 0.0.40
codegen_flags: <defaults>
</compile_context>

<pallas_src>
import functools
import math

import jax
import jax.numpy as jnp
from jax.experimental import pallas as pl
from jax.experimental.pallas import tpu as pltpu

# ----------------------------- config (small BERT) --------------------------
VOCAB = 100
TYPE_VOCAB = 2
MAX_POS = 16
HIDDEN = 32
N_HEADS = 4
D_HEAD = HIDDEN // N_HEADS
INTERMEDIATE = 64
N_LAYERS = 2
LN_EPS = 1e-12
ATTN_SCALE = 1.0 / math.sqrt(D_HEAD)


# ------------------------------- kernel helpers ------------------------------
def _layernorm(x, g, b):
    mu = jnp.mean(x, axis=-1, keepdims=True)
    xc = x - mu
    var = jnp.mean(xc * xc, axis=-1, keepdims=True)
    return xc * jax.lax.rsqrt(var + LN_EPS) * g + b


def _gelu(y):
    c = math.sqrt(2.0 / math.pi)
    return 0.5 * y * (1.0 + jnp.tanh(c * (y + 0.044715 * y * y * y)))


# ------------------------------- fused kernel --------------------------------
def _encoder_kernel(tok_ref, typ_ref, bias_ref,
                    word_ref, type_ref, pos_ref,
                    emb_g_ref, emb_b_ref,
                    wqkv_ref, bqkv_ref, wo_ref, bo_ref,
                    ln1_g_ref, ln1_b_ref,
                    w1_ref, b1_ref, w2_ref, b2_ref,
                    ln2_g_ref, ln2_b_ref,
                    pool_w_ref, pool_b_ref,
                    o_ref, *, batch, seq):
    """Embedding lookup -> LN -> N_LAYERS transformer layers -> pooler, all in VMEM."""
    f32 = jnp.float32
    rows = batch * seq

    # ---- fused embedding lookup via one-hot MXU matmuls (no XLA gather) ----
    tok = tok_ref[...]                                     # (B*S, 1) int32
    typ = typ_ref[...]                                     # (B*S, 1) int32
    word_oh = (tok == jax.lax.broadcasted_iota(jnp.int32, (rows, VOCAB), 1)).astype(f32)
    type_oh = (typ == jax.lax.broadcasted_iota(jnp.int32, (rows, TYPE_VOCAB), 1)).astype(f32)
    pos = jnp.concatenate([pos_ref[...]] * batch, axis=0)  # (B*S, H)
    emb = (jnp.dot(word_oh, word_ref[...], preferred_element_type=f32)
           + jnp.dot(type_oh, type_ref[...], preferred_element_type=f32)
           + pos)

    # Embedding LayerNorm (no residual, no zero-array DMA).
    x = _layernorm(emb, emb_g_ref[...], emb_b_ref[...])    # (B*S, H)

    # Hoisted additive attention-mask bias (broadcast done once, reused by
    # every layer / head).
    bias = jnp.broadcast_to(bias_ref[...], (batch, seq, seq))   # (B, S, S)

    for li in range(N_LAYERS):                              # static unroll
        # ---- fused QKV projection: one MXU pass, 96-lane-wide output ----
        qkv = jnp.dot(x, wqkv_ref[li], preferred_element_type=f32) + bqkv_ref[li]
        qkv3 = qkv.reshape(batch, seq, 3 * HIDDEN)          # (B, S, 3H)
        # Contiguous 32-lane slabs (offsets 0 / 32 / 64), split per head below.
        q_all = qkv3[:, :, 0:HIDDEN]
        k_all = qkv3[:, :, HIDDEN:2 * HIDDEN]
        v_all = qkv3[:, :, 2 * HIDDEN:3 * HIDDEN]

        # ---- multi-head attention (attention scale pre-folded into wq/bq) ----
        ctx_heads = []
        for h in range(N_HEADS):                            # static unroll
            hs = slice(h * D_HEAD, (h + 1) * D_HEAD)
            s = jnp.einsum("bqd,bkd->bqk", q_all[:, :, hs], k_all[:, :, hs],
                           preferred_element_type=f32)
            s = s + bias
            s = s - jnp.max(s, axis=-1, keepdims=True)
            p = jnp.exp(s)
            p = p / jnp.sum(p, axis=-1, keepdims=True)       # exact softmax
            ctx_heads.append(
                jnp.einsum("bqk,bkd->bqd", p, v_all[:, :, hs],
                           preferred_element_type=f32))
        ctx = jnp.concatenate(ctx_heads, axis=-1).reshape(rows, HIDDEN)

        # ---- attention output proj + residual + LayerNorm (fused epilogue) ----
        attn_out = jnp.dot(ctx, wo_ref[li], preferred_element_type=f32) + bo_ref[li]
        x = _layernorm(attn_out + x, ln1_g_ref[li], ln1_b_ref[li])

        # ---- FFN (gelu) + residual + LayerNorm (fused epilogue) ----
        ff = _gelu(jnp.dot(x, w1_ref[li], preferred_element_type=f32) + b1_ref[li])
        ff = jnp.dot(ff, w2_ref[li], preferred_element_type=f32) + b2_ref[li]
        x = _layernorm(ff + x, ln2_g_ref[li], ln2_b_ref[li])

    # ---- pooler: tanh(W @ h_[CLS] + b), CLS rows via reshape (no per-b concat) ----
    cls = x.reshape(batch, seq, HIDDEN)[:, 0, :]             # (B, H)
    o_ref[...] = jnp.tanh(
        jnp.dot(cls, pool_w_ref[...], preferred_element_type=f32) + pool_b_ref[...])


def _full_spec(shape):
    nd = len(shape)
    return pl.BlockSpec(shape, lambda i, _nd=nd: (0,) * _nd)


def encoder_pallas(token_ids_2d, type_ids_2d, bias, packed, batch, seq):
    kern = functools.partial(_encoder_kernel, batch=batch, seq=seq)
    args = (token_ids_2d, type_ids_2d, bias,
            packed["word_emb"], packed["type_emb"], packed["pos_emb"][:seq],
            packed["emb_ln_g"], packed["emb_ln_b"],
            packed["wqkv"], packed["bqkv"], packed["wo"], packed["bo"],
            packed["ln1_g"], packed["ln1_b"],
            packed["w1"], packed["b1"], packed["w2"], packed["b2"],
            packed["ln2_g"], packed["ln2_b"],
            packed["pool_w"], packed["pool_b"])
    return pl.pallas_call(
        kern,
        out_shape=jax.ShapeDtypeStruct((batch, HIDDEN), jnp.float32),
        grid=(1,),
        in_specs=[_full_spec(a.shape) for a in args],
        out_specs=_full_spec((batch, HIDDEN)),
        compiler_params=pltpu.CompilerParams(
            dimension_semantics=("arbitrary",)),
    )(*args)


# ------------------------------- model glue ---------------------------------
def init_params(key):
    def nrm(k, shape):
        return 0.02 * jax.random.normal(k, shape, dtype=jnp.float32)

    keys = jax.random.split(key, 4 + N_LAYERS)
    params = {
        "word_emb": nrm(keys[0], (VOCAB, HIDDEN)),
        "pos_emb": nrm(keys[1], (MAX_POS, HIDDEN)),
        "type_emb": nrm(keys[2], (TYPE_VOCAB, HIDDEN)),
        "emb_ln_g": jnp.ones((HIDDEN,), jnp.float32),
        "emb_ln_b": jnp.zeros((HIDDEN,), jnp.float32),
        "pool_w": nrm(keys[3], (HIDDEN, HIDDEN)),
        "pool_b": jnp.zeros((HIDDEN,), jnp.float32),
        "layers": [],
    }
    for li in range(N_LAYERS):
        lk = jax.random.split(keys[4 + li], 6)
        params["layers"].append({
            "wq": nrm(lk[0], (HIDDEN, HIDDEN)), "bq": jnp.zeros((HIDDEN,), jnp.float32),
            "wk": nrm(lk[1], (HIDDEN, HIDDEN)), "bk": jnp.zeros((HIDDEN,), jnp.float32),
            "wv": nrm(lk[2], (HIDDEN, HIDDEN)), "bv": jnp.zeros((HIDDEN,), jnp.float32),
            "wo": nrm(lk[3], (HIDDEN, HIDDEN)), "bo": jnp.zeros((HIDDEN,), jnp.float32),
            "ln1_g": jnp.ones((HIDDEN,), jnp.float32), "ln1_b": jnp.zeros((HIDDEN,), jnp.float32),
            "w1": nrm(lk[4], (HIDDEN, INTERMEDIATE)), "b1": jnp.zeros((INTERMEDIATE,), jnp.float32),
            "w2": nrm(lk[5], (INTERMEDIATE, HIDDEN)), "b2": jnp.zeros((HIDDEN,), jnp.float32),
            "ln2_g": jnp.ones((HIDDEN,), jnp.float32), "ln2_b": jnp.zeros((HIDDEN,), jnp.float32),
        })
    return params


def pack_params(params):
    """Stack per-layer weights along a leading layer axis; fuse wq|wk|wv and
    fold the 1/sqrt(d_head) attention scale into wq / bq (host-side constant
    fold, zero runtime cost)."""
    ls = params["layers"]
    packed = {
        "word_emb": params["word_emb"],
        "pos_emb": params["pos_emb"],
        "type_emb": params["type_emb"],
        "emb_ln_g": params["emb_ln_g"].reshape(1, HIDDEN),
        "emb_ln_b": params["emb_ln_b"].reshape(1, HIDDEN),
        "pool_w": params["pool_w"],
        "pool_b": params["pool_b"].reshape(1, HIDDEN),
        "wqkv": jnp.stack([jnp.concatenate(
            [p["wq"] * ATTN_SCALE, p["wk"], p["wv"]], axis=1) for p in ls]),
        "bqkv": jnp.stack([jnp.concatenate(
            [p["bq"] * ATTN_SCALE, p["bk"], p["bv"]])[None, :] for p in ls]),
        "wo": jnp.stack([p["wo"] for p in ls]),
        "bo": jnp.stack([p["bo"][None, :] for p in ls]),
        "ln1_g": jnp.stack([p["ln1_g"][None, :] for p in ls]),
        "ln1_b": jnp.stack([p["ln1_b"][None, :] for p in ls]),
        "w1": jnp.stack([p["w1"] for p in ls]),
        "b1": jnp.stack([p["b1"][None, :] for p in ls]),
        "w2": jnp.stack([p["w2"] for p in ls]),
        "b2": jnp.stack([p["b2"][None, :] for p in ls]),
        "ln2_g": jnp.stack([p["ln2_g"][None, :] for p in ls]),
        "ln2_b": jnp.stack([p["ln2_b"][None, :] for p in ls]),
    }
    return packed


def text_encoder_forward(packed, token_ids, token_type_ids, attention_mask):
    """Returns pooler_output: (B, HIDDEN)  (== tanh(W @ h_[CLS] + b))."""
    B, S = token_ids.shape
    # Token ids go straight into the kernel (embedding gather fused in-kernel).
    tok2d = token_ids.reshape(B * S, 1).astype(jnp.int32)
    typ2d = token_type_ids.reshape(B * S, 1).astype(jnp.int32)
    # Additive attention-mask bias, broadcast over query positions in-kernel.
    bias = ((1.0 - attention_mask.astype(jnp.float32)) * -1e9).reshape(B, 1, S)
    return encoder_pallas(tok2d, typ2d, bias, packed, B, S)


if __name__ == "__main__":
    key = jax.random.PRNGKey(0)
    pkey, tkey = jax.random.split(key)
    params = init_params(pkey)
    packed = pack_params(params)

    B, S = 2, 8
    token_ids = jax.random.randint(tkey, (B, S), 0, VOCAB, dtype=jnp.int32)
    token_type_ids = jnp.zeros((B, S), dtype=jnp.int32)
    attention_mask = jnp.ones((B, S), dtype=jnp.int32)   # no padding in this example

    fwd = jax.jit(text_encoder_forward)
    pooled = fwd(packed, token_ids, token_type_ids, attention_mask)
    jax.block_until_ready(pooled)

    assert pooled.shape == (B, HIDDEN)
    assert bool(jnp.all(jnp.isfinite(pooled)))
    print("KERNEL_OK")
</pallas_src>

<mosaic_0001>
module attributes {stable_mosaic.version = 11 : i64} {
  func.func @_encoder_kernel(%arg0: i32, %arg1: memref<16x1xi32, #tpu.memory_space<vmem>>, %arg2: memref<16x1xi32, #tpu.memory_space<vmem>>, %arg3: memref<2x1x8xf32, #tpu.memory_space<vmem>>, %arg4: memref<100x32xf32, #tpu.memory_space<vmem>>, %arg5: memref<2x32xf32, #tpu.memory_space<vmem>>, %arg6: memref<8x32xf32, #tpu.memory_space<vmem>>, %arg7: memref<1x32xf32, #tpu.memory_space<vmem>>, %arg8: memref<1x32xf32, #tpu.memory_space<vmem>>, %arg9: memref<2x32x96xf32, #tpu.memory_space<vmem>>, %arg10: memref<2x1x96xf32, #tpu.memory_space<vmem>>, %arg11: memref<2x32x32xf32, #tpu.memory_space<vmem>>, %arg12: memref<2x1x32xf32, #tpu.memory_space<vmem>>, %arg13: memref<2x1x32xf32, #tpu.memory_space<vmem>>, %arg14: memref<2x1x32xf32, #tpu.memory_space<vmem>>, %arg15: memref<2x32x64xf32, #tpu.memory_space<vmem>>, %arg16: memref<2x1x64xf32, #tpu.memory_space<vmem>>, %arg17: memref<2x64x32xf32, #tpu.memory_space<vmem>>, %arg18: memref<2x1x32xf32, #tpu.memory_space<vmem>>, %arg19: memref<2x1x32xf32, #tpu.memory_space<vmem>>, %arg20: memref<2x1x32xf32, #tpu.memory_space<vmem>>, %arg21: memref<32x32xf32, #tpu.memory_space<vmem>>, %arg22: memref<1x32xf32, #tpu.memory_space<vmem>>, %arg23: memref<2x32xf32, #tpu.memory_space<vmem>>) attributes {dimension_semantics = [#tpu.dimension_semantics<arbitrary>], iteration_bounds = array<i64: 1>, scalar_prefetch = 0 : i64, scratch_operands = 0 : i64, tpu.core_type = #tpu.core_type<tc>, window_params = [{pipeline_mode = #tpu.pipeline_mode<synchronous>, transform_indices = @transform_0, window_bounds = array<i64: 16, 1>}, {pipeline_mode = #tpu.pipeline_mode<synchronous>, transform_indices = @transform_1, window_bounds = array<i64: 16, 1>}, {pipeline_mode = #tpu.pipeline_mode<synchronous>, transform_indices = @transform_2, window_bounds = array<i64: 2, 1, 8>}, {pipeline_mode = #tpu.pipeline_mode<synchronous>, transform_indices = @transform_3, window_bounds = array<i64: 100, 32>}, {pipeline_mode = #tpu.pipeline_mode<synchronous>, transform_indices = @transform_4, window_bounds = array<i64: 2, 32>}, {pipeline_mode = #tpu.pipeline_mode<synchronous>, transform_indices = @transform_5, window_bounds = array<i64: 8, 32>}, {pipeline_mode = #tpu.pipeline_mode<synchronous>, transform_indices = @transform_6, window_bounds = array<i64: 1, 32>}, {pipeline_mode = #tpu.pipeline_mode<synchronous>, transform_indices = @transform_7, window_bounds = array<i64: 1, 32>}, {pipeline_mode = #tpu.pipeline_mode<synchronous>, transform_indices = @transform_8, window_bounds = array<i64: 2, 32, 96>}, {pipeline_mode = #tpu.pipeline_mode<synchronous>, transform_indices = @transform_9, window_bounds = array<i64: 2, 1, 96>}, {pipeline_mode = #tpu.pipeline_mode<synchronous>, transform_indices = @transform_10, window_bounds = array<i64: 2, 32, 32>}, {pipeline_mode = #tpu.pipeline_mode<synchronous>, transform_indices = @transform_11, window_bounds = array<i64: 2, 1, 32>}, {pipeline_mode = #tpu.pipeline_mode<synchronous>, transform_indices = @transform_12, window_bounds = array<i64: 2, 1, 32>}, {pipeline_mode = #tpu.pipeline_mode<synchronous>, transform_indices = @transform_13, window_bounds = array<i64: 2, 1, 32>}, {pipeline_mode = #tpu.pipeline_mode<synchronous>, transform_indices = @transform_14, window_bounds = array<i64: 2, 32, 64>}, {pipeline_mode = #tpu.pipeline_mode<synchronous>, transform_indices = @transform_15, window_bounds = array<i64: 2, 1, 64>}, {pipeline_mode = #tpu.pipeline_mode<synchronous>, transform_indices = @transform_16, window_bounds = array<i64: 2, 64, 32>}, {pipeline_mode = #tpu.pipeline_mode<synchronous>, transform_indices = @transform_17, window_bounds = array<i64: 2, 1, 32>}, {pipeline_mode = #tpu.pipeline_mode<synchronous>, transform_indices = @transform_18, window_bounds = array<i64: 2, 1, 32>}, {pipeline_mode = #tpu.pipeline_mode<synchronous>, transform_indices = @transform_19, window_bounds = array<i64: 2, 1, 32>}, {pipeline_mode = #tpu.pipeline_mode<synchronous>, transform_indices = @transform_20, window_bounds = array<i64: 32, 32>}, {pipeline_mode = #tpu.pipeline_mode<synchronous>, transform_indices = @transform_21, window_bounds = array<i64: 1, 32>}, {pipeline_mode = #tpu.pipeline_mode<synchronous>, transform_indices = @transform_22, window_bounds = array<i64: 2, 32>}]} {
    %c0 = arith.constant 0 : index
    %c0_0 = arith.constant 0 : index
    %0 = vector.load %arg1[%c0, %c0_0] : memref<16x1xi32, #tpu.memory_space<vmem>>, vector<16x1xi32>
    %c0_1 = arith.constant 0 : index
    %c0_2 = arith.constant 0 : index
    %1 = vector.load %arg2[%c0_1, %c0_2] : memref<16x1xi32, #tpu.memory_space<vmem>>, vector<16x1xi32>
    %2 = tpu.iota {dimensions = array<i32: 1>} : vector<16x100xi32>
    %3 = vector.broadcast %0 : vector<16x1xi32> to vector<16x100xi32>
    %4 = arith.cmpi eq, %3, %2 : vector<16x100xi32>
    %5 = arith.extui %4 : vector<16x100xi1> to vector<16x100xi32>
    %6 = arith.sitofp %5 : vector<16x100xi32> to vector<16x100xf32>
    %7 = tpu.iota {dimensions = array<i32: 1>} : vector<16x2xi32>
    %8 = vector.broadcast %1 : vector<16x1xi32> to vector<16x2xi32>
    %9 = arith.cmpi eq, %8, %7 : vector<16x2xi32>
    %10 = arith.extui %9 : vector<16x2xi1> to vector<16x2xi32>
    %11 = arith.sitofp %10 : vector<16x2xi32> to vector<16x2xf32>
    %c0_3 = arith.constant 0 : index
    %c0_4 = arith.constant 0 : index
    %12 = vector.load %arg6[%c0_3, %c0_4] : memref<8x32xf32, #tpu.memory_space<vmem>>, vector<8x32xf32>
    %13 = tpu.concatenate %12, %12 in 0 : vector<8x32xf32>, vector<8x32xf32> -> vector<16x32xf32>
    %c0_5 = arith.constant 0 : index
    %c0_6 = arith.constant 0 : index
    %14 = vector.load %arg4[%c0_5, %c0_6] : memref<100x32xf32, #tpu.memory_space<vmem>>, vector<100x32xf32>
    %cst = arith.constant dense<0.000000e+00> : vector<16x32xf32>
    %15 = tpu.matmul %6, %14, %cst {dimension_numbers = #tpu.dot_dimension_numbers<[1], [0], [0], [1], [0, 0, 1, 1], [], []>} : vector<16x100xf32>, vector<100x32xf32>, vector<16x32xf32> -> vector<16x32xf32>
    %c0_7 = arith.constant 0 : index
    %c0_8 = arith.constant 0 : index
    %16 = vector.load %arg5[%c0_7, %c0_8] : memref<2x32xf32, #tpu.memory_space<vmem>>, vector<2x32xf32>
    %cst_9 = arith.constant dense<0.000000e+00> : vector<16x32xf32>
    %17 = tpu.matmul %11, %16, %cst_9 {dimension_numbers = #tpu.dot_dimension_numbers<[1], [0], [0], [1], [0, 0, 1, 1], [], []>} : vector<16x2xf32>, vector<2x32xf32>, vector<16x32xf32> -> vector<16x32xf32>
    %18 = arith.addf %15, %17 : vector<16x32xf32>
    %19 = arith.addf %18, %13 : vector<16x32xf32>
    %c0_10 = arith.constant 0 : index
    %c0_11 = arith.constant 0 : index
    %20 = vector.load %arg7[%c0_10, %c0_11] : memref<1x32xf32, #tpu.memory_space<vmem>>, vector<1x32xf32>
    %c0_12 = arith.constant 0 : index
    %c0_13 = arith.constant 0 : index
    %21 = vector.load %arg8[%c0_12, %c0_13] : memref<1x32xf32, #tpu.memory_space<vmem>>, vector<1x32xf32>
    %cst_14 = arith.constant dense<0.000000e+00> : vector<16xf32>
    %22 = vector.multi_reduction <add>, %19, %cst_14 [1] : vector<16x32xf32> to vector<16xf32>
    %23 = vector.shape_cast %22 : vector<16xf32> to vector<16x1xf32>
    %cst_15 = arith.constant 3.200000e+01 : f32
    %24 = vector.broadcast %cst_15 : f32 to vector<16x1xf32>
    %25 = arith.divf %23, %24 : vector<16x1xf32>
    %26 = vector.broadcast %25 : vector<16x1xf32> to vector<16x32xf32>
    %27 = arith.subf %19, %26 : vector<16x32xf32>
    %28 = arith.mulf %27, %27 : vector<16x32xf32>
    %cst_16 = arith.constant dense<0.000000e+00> : vector<16xf32>
    %29 = vector.multi_reduction <add>, %28, %cst_16 [1] : vector<16x32xf32> to vector<16xf32>
    %30 = vector.shape_cast %29 : vector<16xf32> to vector<16x1xf32>
    %cst_17 = arith.constant 3.200000e+01 : f32
    %31 = vector.broadcast %cst_17 : f32 to vector<16x1xf32>
    %32 = arith.divf %30, %31 : vector<16x1xf32>
    %cst_18 = arith.constant 9.99999996E-13 : f32
    %33 = vector.broadcast %cst_18 : f32 to vector<16x1xf32>
    %34 = arith.addf %32, %33 : vector<16x1xf32>
    %35 = math.rsqrt %34 : vector<16x1xf32>
    %36 = vector.broadcast %35 : vector<16x1xf32> to vector<16x32xf32>
    %37 = arith.mulf %27, %36 : vector<16x32xf32>
    %38 = vector.broadcast %20 : vector<1x32xf32> to vector<16x32xf32>
    %39 = arith.mulf %37, %38 : vector<16x32xf32>
    %40 = vector.broadcast %21 : vector<1x32xf32> to vector<16x32xf32>
    %41 = arith.addf %39, %40 : vector<16x32xf32>
    %c0_19 = arith.constant 0 : index
    %c0_20 = arith.constant 0 : index
    %c0_21 = arith.constant 0 : index
    %42 = vector.load %arg3[%c0_19, %c0_20, %c0_21] : memref<2x1x8xf32, #tpu.memory_space<vmem>>, vector<2x1x8xf32>
    %43 = vector.shape_cast %42 : vector<2x1x8xf32> to vector<2x1x8xf32>
    %44 = vector.broadcast %43 : vector<2x1x8xf32> to vector<2x8x8xf32>
    %c0_22 = arith.constant 0 : index
    %c0_23 = arith.constant 0 : index
    %c0_24 = arith.constant 0 : index
    %45 = vector.load %arg9[%c0_22, %c0_23, %c0_24] : memref<2x32x96xf32, #tpu.memory_space<vmem>>, vector<1x32x96xf32>
    %46 = vector.shape_cast %45 : vector<1x32x96xf32> to vector<32x96xf32>
    %cst_25 = arith.constant dense<0.000000e+00> : vector<16x96xf32>
    %47 = tpu.matmul %41, %46, %cst_25 {dimension_numbers = #tpu.dot_dimension_numbers<[1], [0], [0], [1], [0, 0, 1, 1], [], []>} : vector<16x32xf32>, vector<32x96xf32>, vector<16x96xf32> -> vector<16x96xf32>
    %c0_26 = arith.constant 0 : index
    %c0_27 = arith.constant 0 : index
    %c0_28 = arith.constant 0 : index
    %48 = vector.load %arg10[%c0_26, %c0_27, %c0_28] : memref<2x1x96xf32, #tpu.memory_space<vmem>>, vector<1x1x96xf32>
    %49 = vector.shape_cast %48 : vector<1x1x96xf32> to vector<1x96xf32>
    %50 = vector.broadcast %49 : vector<1x96xf32> to vector<16x96xf32>
    %51 = arith.addf %47, %50 : vector<16x96xf32>
    %52 = vector.shape_cast %51 : vector<16x96xf32> to vector<2x8x96xf32>
    %53 = vector.extract_strided_slice %52 {offsets = [0, 0, 0], sizes = [2, 8, 32], strides = [1, 1, 1]} : vector<2x8x96xf32> to vector<2x8x32xf32>
    %54 = vector.extract_strided_slice %52 {offsets = [0, 0, 32], sizes = [2, 8, 32], strides = [1, 1, 1]} : vector<2x8x96xf32> to vector<2x8x32xf32>
    %55 = vector.extract_strided_slice %52 {offsets = [0, 0, 64], sizes = [2, 8, 32], strides = [1, 1, 1]} : vector<2x8x96xf32> to vector<2x8x32xf32>
    %56 = vector.extract_strided_slice %53 {offsets = [0, 0, 0], sizes = [2, 8, 8], strides = [1, 1, 1]} : vector<2x8x32xf32> to vector<2x8x8xf32>
    %57 = vector.extract_strided_slice %54 {offsets = [0, 0, 0], sizes = [2, 8, 8], strides = [1, 1, 1]} : vector<2x8x32xf32> to vector<2x8x8xf32>
    "tpu.trace_start"() <{level = 10 : i32, message = "bqd,bkd->bqk"}> : () -> ()
    %cst_29 = arith.constant dense<0.000000e+00> : vector<2x8x8xf32>
    %58 = tpu.matmul %56, %57, %cst_29 {dimension_numbers = #tpu.dot_dimension_numbers<[2], [2], [1], [1], [0, 0, 0, 1, 1, 1], [0], [0]>} : vector<2x8x8xf32>, vector<2x8x8xf32>, vector<2x8x8xf32> -> vector<2x8x8xf32>
    "tpu.trace_stop"() : () -> ()
    %59 = arith.addf %58, %44 : vector<2x8x8xf32>
    %cst_30 = arith.constant dense<0xFF800000> : vector<2x8xf32>
    %60 = vector.multi_reduction <maximumf>, %59, %cst_30 [2] : vector<2x8x8xf32> to vector<2x8xf32>
    %61 = vector.shape_cast %60 : vector<2x8xf32> to vector<2x8x1xf32>
    %62 = vector.broadcast %61 : vector<2x8x1xf32> to vector<2x8x8xf32>
    %63 = arith.subf %59, %62 : vector<2x8x8xf32>
    %64 = math.exp %63 : vector<2x8x8xf32>
    %cst_31 = arith.constant dense<0.000000e+00> : vector<2x8xf32>
    %65 = vector.multi_reduction <add>, %64, %cst_31 [2] : vector<2x8x8xf32> to vector<2x8xf32>
    %66 = vector.shape_cast %65 : vector<2x8xf32> to vector<2x8x1xf32>
    %67 = vector.broadcast %66 : vector<2x8x1xf32> to vector<2x8x8xf32>
    %68 = arith.divf %64, %67 : vector<2x8x8xf32>
    %69 = vector.extract_strided_slice %55 {offsets = [0, 0, 0], sizes = [2, 8, 8], strides = [1, 1, 1]} : vector<2x8x32xf32> to vector<2x8x8xf32>
    "tpu.trace_start"() <{level = 10 : i32, message = "bqk,bkd->bqd"}> : () -> ()
    %cst_32 = arith.constant dense<0.000000e+00> : vector<2x8x8xf32>
    %70 = tpu.matmul %68, %69, %cst_32 {dimension_numbers = #tpu.dot_dimension_numbers<[2], [1], [1], [2], [0, 0, 0, 1, 1, 2], [0], [0]>} : vector<2x8x8xf32>, vector<2x8x8xf32>, vector<2x8x8xf32> -> vector<2x8x8xf32>
    "tpu.trace_stop"() : () -> ()
    %71 = vector.extract_strided_slice %53 {offsets = [0, 0, 8], sizes = [2, 8, 8], strides = [1, 1, 1]} : vector<2x8x32xf32> to vector<2x8x8xf32>
    %72 = vector.extract_strided_slice %54 {offsets = [0, 0, 8], sizes = [2, 8, 8], strides = [1, 1, 1]} : vector<2x8x32xf32> to vector<2x8x8xf32>
    "tpu.trace_start"() <{level = 10 : i32, message = "bqd,bkd->bqk"}> : () -> ()
    %cst_33 = arith.constant dense<0.000000e+00> : vector<2x8x8xf32>
    %73 = tpu.matmul %71, %72, %cst_33 {dimension_numbers = #tpu.dot_dimension_numbers<[2], [2], [1], [1], [0, 0, 0, 1, 1, 1], [0], [0]>} : vector<2x8x8xf32>, vector<2x8x8xf32>, vector<2x8x8xf32> -> vector<2x8x8xf32>
    "tpu.trace_stop"() : () -> ()
    %74 = arith.addf %73, %44 : vector<2x8x8xf32>
    %cst_34 = arith.constant dense<0xFF800000> : vector<2x8xf32>
    %75 = vector.multi_reduction <maximumf>, %74, %cst_34 [2] : vector<2x8x8xf32> to vector<2x8xf32>
    %76 = vector.shape_cast %75 : vector<2x8xf32> to vector<2x8x1xf32>
    %77 = vector.broadcast %76 : vector<2x8x1xf32> to vector<2x8x8xf32>
    %78 = arith.subf %74, %77 : vector<2x8x8xf32>
    %79 = math.exp %78 : vector<2x8x8xf32>
    %cst_35 = arith.constant dense<0.000000e+00> : vector<2x8xf32>
    %80 = vector.multi_reduction <add>, %79, %cst_35 [2] : vector<2x8x8xf32> to vector<2x8xf32>
    %81 = vector.shape_cast %80 : vector<2x8xf32> to vector<2x8x1xf32>
    %82 = vector.broadcast %81 : vector<2x8x1xf32> to vector<2x8x8xf32>
    %83 = arith.divf %79, %82 : vector<2x8x8xf32>
    %84 = vector.extract_strided_slice %55 {offsets = [0, 0, 8], sizes = [2, 8, 8], strides = [1, 1, 1]} : vector<2x8x32xf32> to vector<2x8x8xf32>
    "tpu.trace_start"() <{level = 10 : i32, message = "bqk,bkd->bqd"}> : () -> ()
    %cst_36 = arith.constant dense<0.000000e+00> : vector<2x8x8xf32>
    %85 = tpu.matmul %83, %84, %cst_36 {dimension_numbers = #tpu.dot_dimension_numbers<[2], [1], [1], [2], [0, 0, 0, 1, 1, 2], [0], [0]>} : vector<2x8x8xf32>, vector<2x8x8xf32>, vector<2x8x8xf32> -> vector<2x8x8xf32>
    "tpu.trace_stop"() : () -> ()
    %86 = vector.extract_strided_slice %53 {offsets = [0, 0, 16], sizes = [2, 8, 8], strides = [1, 1, 1]} : vector<2x8x32xf32> to vector<2x8x8xf32>
    %87 = vector.extract_strided_slice %54 {offsets = [0, 0, 16], sizes = [2, 8, 8], strides = [1, 1, 1]} : vector<2x8x32xf32> to vector<2x8x8xf32>
    "tpu.trace_start"() <{level = 10 : i32, message = "bqd,bkd->bqk"}> : () -> ()
    %cst_37 = arith.constant dense<0.000000e+00> : vector<2x8x8xf32>
    %88 = tpu.matmul %86, %87, %cst_37 {dimension_numbers = #tpu.dot_dimension_numbers<[2], [2], [1], [1], [0, 0, 0, 1, 1, 1], [0], [0]>} : vector<2x8x8xf32>, vector<2x8x8xf32>, vector<2x8x8xf32> -> vector<2x8x8xf32>
    "tpu.trace_stop"() : () -> ()
    %89 = arith.addf %88, %44 : vector<2x8x8xf32>
    %cst_38 = arith.constant dense<0xFF800000> : vector<2x8xf32>
    %90 = vector.multi_reduction <maximumf>, %89, %cst_38 [2] : vector<2x8x8xf32> to vector<2x8xf32>
    %91 = vector.shape_cast %90 : vector<2x8xf32> to vector<2x8x1xf32>
    %92 = vector.broadcast %91 : vector<2x8x1xf32> to vector<2x8x8xf32>
    %93 = arith.subf %89, %92 : vector<2x8x8xf32>
    %94 = math.exp %93 : vector<2x8x8xf32>
    %cst_39 = arith.constant dense<0.000000e+00> : vector<2x8xf32>
    %95 = vector.multi_reduction <add>, %94, %cst_39 [2] : vector<2x8x8xf32> to vector<2x8xf32>
    %96 = vector.shape_cast %95 : vector<2x8xf32> to vector<2x8x1xf32>
    %97 = vector.broadcast %96 : vector<2x8x1xf32> to vector<2x8x8xf32>
    %98 = arith.divf %94, %97 : vector<2x8x8xf32>
    %99 = vector.extract_strided_slice %55 {offsets = [0, 0, 16], sizes = [2, 8, 8], strides = [1, 1, 1]} : vector<2x8x32xf32> to vector<2x8x8xf32>
    "tpu.trace_start"() <{level = 10 : i32, message = "bqk,bkd->bqd"}> : () -> ()
    %cst_40 = arith.constant dense<0.000000e+00> : vector<2x8x8xf32>
    %100 = tpu.matmul %98, %99, %cst_40 {dimension_numbers = #tpu.dot_dimension_numbers<[2], [1], [1], [2], [0, 0, 0, 1, 1, 2], [0], [0]>} : vector<2x8x8xf32>, vector<2x8x8xf32>, vector<2x8x8xf32> -> vector<2x8x8xf32>
    "tpu.trace_stop"() : () -> ()
    %101 = vector.extract_strided_slice %53 {offsets = [0, 0, 24], sizes = [2, 8, 8], strides = [1, 1, 1]} : vector<2x8x32xf32> to vector<2x8x8xf32>
    %102 = vector.extract_strided_slice %54 {offsets = [0, 0, 24], sizes = [2, 8, 8], strides = [1, 1, 1]} : vector<2x8x32xf32> to vector<2x8x8xf32>
    "tpu.trace_start"() <{level = 10 : i32, message = "bqd,bkd->bqk"}> : () -> ()
    %cst_41 = arith.constant dense<0.000000e+00> : vector<2x8x8xf32>
    %103 = tpu.matmul %101, %102, %cst_41 {dimension_numbers = #tpu.dot_dimension_numbers<[2], [2], [1], [1], [0, 0, 0, 1, 1, 1], [0], [0]>} : vector<2x8x8xf32>, vector<2x8x8xf32>, vector<2x8x8xf32> -> vector<2x8x8xf32>
    "tpu.trace_stop"() : () -> ()
    %104 = arith.addf %103, %44 : vector<2x8x8xf32>
    %cst_42 = arith.constant dense<0xFF800000> : vector<2x8xf32>
    %105 = vector.multi_reduction <maximumf>, %104, %cst_42 [2] : vector<2x8x8xf32> to vector<2x8xf32>
    %106 = vector.shape_cast %105 : vector<2x8xf32> to vector<2x8x1xf32>
    %107 = vector.broadcast %106 : vector<2x8x1xf32> to vector<2x8x8xf32>
    %108 = arith.subf %104, %107 : vector<2x8x8xf32>
    %109 = math.exp %108 : vector<2x8x8xf32>
    %cst_43 = arith.constant dense<0.000000e+00> : vector<2x8xf32>
    %110 = vector.multi_reduction <add>, %109, %cst_43 [2] : vector<2x8x8xf32> to vector<2x8xf32>
    %111 = vector.shape_cast %110 : vector<2x8xf32> to vector<2x8x1xf32>
    %112 = vector.broadcast %111 : vector<2x8x1xf32> to vector<2x8x8xf32>
    %113 = arith.divf %109, %112 : vector<2x8x8xf32>
    %114 = vector.extract_strided_slice %55 {offsets = [0, 0, 24], sizes = [2, 8, 8], strides = [1, 1, 1]} : vector<2x8x32xf32> to vector<2x8x8xf32>
    "tpu.trace_start"() <{level = 10 : i32, message = "bqk,bkd->bqd"}> : () -> ()
    %cst_44 = arith.constant dense<0.000000e+00> : vector<2x8x8xf32>
    %115 = tpu.matmul %113, %114, %cst_44 {dimension_numbers = #tpu.dot_dimension_numbers<[2], [1], [1], [2], [0, 0, 0, 1, 1, 2], [0], [0]>} : vector<2x8x8xf32>, vector<2x8x8xf32>, vector<2x8x8xf32> -> vector<2x8x8xf32>
    "tpu.trace_stop"() : () -> ()
    %116 = tpu.concatenate %70, %85, %100, %115 in 2 : vector<2x8x8xf32>, vector<2x8x8xf32>, vector<2x8x8xf32>, vector<2x8x8xf32> -> vector<2x8x32xf32>
    %117 = vector.shape_cast %116 : vector<2x8x32xf32> to vector<16x32xf32>
    %c0_45 = arith.constant 0 : index
    %c0_46 = arith.constant 0 : index
    %c0_47 = arith.constant 0 : index
    %118 = vector.load %arg11[%c0_45, %c0_46, %c0_47] : memref<2x32x32xf32, #tpu.memory_space<vmem>>, vector<1x32x32xf32>
    %119 = vector.shape_cast %118 : vector<1x32x32xf32> to vector<32x32xf32>
    %cst_48 = arith.constant dense<0.000000e+00> : vector<16x32xf32>
    %120 = tpu.matmul %117, %119, %cst_48 {dimension_numbers = #tpu.dot_dimension_numbers<[1], [0], [0], [1], [0, 0, 1, 1], [], []>} : vector<16x32xf32>, vector<32x32xf32>, vector<16x32xf32> -> vector<16x32xf32>
    %c0_49 = arith.constant 0 : index
    %c0_50 = arith.constant 0 : index
    %c0_51 = arith.constant 0 : index
    %121 = vector.load %arg12[%c0_49, %c0_50, %c0_51] : memref<2x1x32xf32, #tpu.memory_space<vmem>>, vector<1x1x32xf32>
    %122 = vector.shape_cast %121 : vector<1x1x32xf32> to vector<1x32xf32>
    %123 = vector.broadcast %122 : vector<1x32xf32> to vector<16x32xf32>
    %124 = arith.addf %120, %123 : vector<16x32xf32>
    %125 = arith.addf %124, %41 : vector<16x32xf32>
    %c0_52 = arith.constant 0 : index
    %c0_53 = arith.constant 0 : index
    %c0_54 = arith.constant 0 : index
    %126 = vector.load %arg13[%c0_52, %c0_53, %c0_54] : memref<2x1x32xf32, #tpu.memory_space<vmem>>, vector<1x1x32xf32>
    %127 = vector.shape_cast %126 : vector<1x1x32xf32> to vector<1x32xf32>
    %c0_55 = arith.constant 0 : index
    %c0_56 = arith.constant 0 : index
    %c0_57 = arith.constant 0 : index
    %128 = vector.load %arg14[%c0_55, %c0_56, %c0_57] : memref<2x1x32xf32, #tpu.memory_space<vmem>>, vector<1x1x32xf32>
    %129 = vector.shape_cast %128 : vector<1x1x32xf32> to vector<1x32xf32>
    %cst_58 = arith.constant dense<0.000000e+00> : vector<16xf32>
    %130 = vector.multi_reduction <add>, %125, %cst_58 [1] : vector<16x32xf32> to vector<16xf32>
    %131 = vector.shape_cast %130 : vector<16xf32> to vector<16x1xf32>
    %cst_59 = arith.constant 3.200000e+01 : f32
    %132 = vector.broadcast %cst_59 : f32 to vector<16x1xf32>
    %133 = arith.divf %131, %132 : vector<16x1xf32>
    %134 = vector.broadcast %133 : vector<16x1xf32> to vector<16x32xf32>
    %135 = arith.subf %125, %134 : vector<16x32xf32>
    %136 = arith.mulf %135, %135 : vector<16x32xf32>
    %cst_60 = arith.constant dense<0.000000e+00> : vector<16xf32>
    %137 = vector.multi_reduction <add>, %136, %cst_60 [1] : vector<16x32xf32> to vector<16xf32>
    %138 = vector.shape_cast %137 : vector<16xf32> to vector<16x1xf32>
    %cst_61 = arith.constant 3.200000e+01 : f32
    %139 = vector.broadcast %cst_61 : f32 to vector<16x1xf32>
    %140 = arith.divf %138, %139 : vector<16x1xf32>
    %cst_62 = arith.constant 9.99999996E-13 : f32
    %141 = vector.broadcast %cst_62 : f32 to vector<16x1xf32>
    %142 = arith.addf %140, %141 : vector<16x1xf32>
    %143 = math.rsqrt %142 : vector<16x1xf32>
    %144 = vector.broadcast %143 : vector<16x1xf32> to vector<16x32xf32>
    %145 = arith.mulf %135, %144 : vector<16x32xf32>
    %146 = vector.broadcast %127 : vector<1x32xf32> to vector<16x32xf32>
    %147 = arith.mulf %145, %146 : vector<16x32xf32>
    %148 = vector.broadcast %129 : vector<1x32xf32> to vector<16x32xf32>
    %149 = arith.addf %147, %148 : vector<16x32xf32>
    %c0_63 = arith.constant 0 : index
    %c0_64 = arith.constant 0 : index
    %c0_65 = arith.constant 0 : index
    %150 = vector.load %arg15[%c0_63, %c0_64, %c0_65] : memref<2x32x64xf32, #tpu.memory_space<vmem>>, vector<1x32x64xf32>
    %151 = vector.shape_cast %150 : vector<1x32x64xf32> to vector<32x64xf32>
    %cst_66 = arith.constant dense<0.000000e+00> : vector<16x64xf32>
    %152 = tpu.matmul %149, %151, %cst_66 {dimension_numbers = #tpu.dot_dimension_numbers<[1], [0], [0], [1], [0, 0, 1, 1], [], []>} : vector<16x32xf32>, vector<32x64xf32>, vector<16x64xf32> -> vector<16x64xf32>
    %c0_67 = arith.constant 0 : index
    %c0_68 = arith.constant 0 : index
    %c0_69 = arith.constant 0 : index
    %153 = vector.load %arg16[%c0_67, %c0_68, %c0_69] : memref<2x1x64xf32, #tpu.memory_space<vmem>>, vector<1x1x64xf32>
    %154 = vector.shape_cast %153 : vector<1x1x64xf32> to vector<1x64xf32>
    %155 = vector.broadcast %154 : vector<1x64xf32> to vector<16x64xf32>
    %156 = arith.addf %152, %155 : vector<16x64xf32>
    %cst_70 = arith.constant 5.000000e-01 : f32
    %157 = vector.broadcast %cst_70 : f32 to vector<16x64xf32>
    %158 = arith.mulf %157, %156 : vector<16x64xf32>
    %cst_71 = arith.constant 4.471500e-02 : f32
    %159 = vector.broadcast %cst_71 : f32 to vector<16x64xf32>
    %160 = arith.mulf %159, %156 : vector<16x64xf32>
    %161 = arith.mulf %160, %156 : vector<16x64xf32>
    %162 = arith.mulf %161, %156 : vector<16x64xf32>
    %163 = arith.addf %156, %162 : vector<16x64xf32>
    %cst_72 = arith.constant 0.797884583 : f32
    %164 = vector.broadcast %cst_72 : f32 to vector<16x64xf32>
    %165 = arith.mulf %164, %163 : vector<16x64xf32>
    %166 = math.tanh %165 : vector<16x64xf32>
    %cst_73 = arith.constant 1.000000e+00 : f32
    %167 = vector.broadcast %cst_73 : f32 to vector<16x64xf32>
    %168 = arith.addf %167, %166 : vector<16x64xf32>
    %169 = arith.mulf %158, %168 : vector<16x64xf32>
    %c0_74 = arith.constant 0 : index
    %c0_75 = arith.constant 0 : index
    %c0_76 = arith.constant 0 : index
    %170 = vector.load %arg17[%c0_74, %c0_75, %c0_76] : memref<2x64x32xf32, #tpu.memory_space<vmem>>, vector<1x64x32xf32>
    %171 = vector.shape_cast %170 : vector<1x64x32xf32> to vector<64x32xf32>
    %cst_77 = arith.constant dense<0.000000e+00> : vector<16x32xf32>
    %172 = tpu.matmul %169, %171, %cst_77 {dimension_numbers = #tpu.dot_dimension_numbers<[1], [0], [0], [1], [0, 0, 1, 1], [], []>} : vector<16x64xf32>, vector<64x32xf32>, vector<16x32xf32> -> vector<16x32xf32>
    %c0_78 = arith.constant 0 : index
    %c0_79 = arith.constant 0 : index
    %c0_80 = arith.constant 0 : index
    %173 = vector.load %arg18[%c0_78, %c0_79, %c0_80] : memref<2x1x32xf32, #tpu.memory_space<vmem>>, vector<1x1x32xf32>
    %174 = vector.shape_cast %173 : vector<1x1x32xf32> to vector<1x32xf32>
    %175 = vector.broadcast %174 : vector<1x32xf32> to vector<16x32xf32>
    %176 = arith.addf %172, %175 : vector<16x32xf32>
    %177 = arith.addf %176, %149 : vector<16x32xf32>
    %c0_81 = arith.constant 0 : index
    %c0_82 = arith.constant 0 : index
    %c0_83 = arith.constant 0 : index
    %178 = vector.load %arg19[%c0_81, %c0_82, %c0_83] : memref<2x1x32xf32, #tpu.memory_space<vmem>>, vector<1x1x32xf32>
    %179 = vector.shape_cast %178 : vector<1x1x32xf32> to vector<1x32xf32>
    %c0_84 = arith.constant 0 : index
    %c0_85 = arith.constant 0 : index
    %c0_86 = arith.constant 0 : index
    %180 = vector.load %arg20[%c0_84, %c0_85, %c0_86] : memref<2x1x32xf32, #tpu.memory_space<vmem>>, vector<1x1x32xf32>
    %181 = vector.shape_cast %180 : vector<1x1x32xf32> to vector<1x32xf32>
    %cst_87 = arith.constant dense<0.000000e+00> : vector<16xf32>
    %182 = vector.multi_reduction <add>, %177, %cst_87 [1] : vector<16x32xf32> to vector<16xf32>
    %183 = vector.shape_cast %182 : vector<16xf32> to vector<16x1xf32>
    %cst_88 = arith.constant 3.200000e+01 : f32
    %184 = vector.broadcast %cst_88 : f32 to vector<16x1xf32>
    %185 = arith.divf %183, %184 : vector<16x1xf32>
    %186 = vector.broadcast %185 : vector<16x1xf32> to vector<16x32xf32>
    %187 = arith.subf %177, %186 : vector<16x32xf32>
    %188 = arith.mulf %187, %187 : vector<16x32xf32>
    %cst_89 = arith.constant dense<0.000000e+00> : vector<16xf32>
    %189 = vector.multi_reduction <add>, %188, %cst_89 [1] : vector<16x32xf32> to vector<16xf32>
    %190 = vector.shape_cast %189 : vector<16xf32> to vector<16x1xf32>
    %cst_90 = arith.constant 3.200000e+01 : f32
    %191 = vector.broadcast %cst_90 : f32 to vector<16x1xf32>
    %192 = arith.divf %190, %191 : vector<16x1xf32>
    %cst_91 = arith.constant 9.99999996E-13 : f32
    %193 = vector.broadcast %cst_91 : f32 to vector<16x1xf32>
    %194 = arith.addf %192, %193 : vector<16x1xf32>
    %195 = math.rsqrt %194 : vector<16x1xf32>
    %196 = vector.broadcast %195 : vector<16x1xf32> to vector<16x32xf32>
    %197 = arith.mulf %187, %196 : vector<16x32xf32>
    %198 = vector.broadcast %179 : vector<1x32xf32> to vector<16x32xf32>
    %199 = arith.mulf %197, %198 : vector<16x32xf32>
    %200 = vector.broadcast %181 : vector<1x32xf32> to vector<16x32xf32>
    %201 = arith.addf %199, %200 : vector<16x32xf32>
    %c1 = arith.constant 1 : index
    %c0_92 = arith.constant 0 : index
    %c0_93 = arith.constant 0 : index
    %202 = vector.load %arg9[%c1, %c0_92, %c0_93] : memref<2x32x96xf32, #tpu.memory_space<vmem>>, vector<1x32x96xf32>
    %203 = vector.shape_cast %202 : vector<1x32x96xf32> to vector<32x96xf32>
    %cst_94 = arith.constant dense<0.000000e+00> : vector<16x96xf32>
    %204 = tpu.matmul %201, %203, %cst_94 {dimension_numbers = #tpu.dot_dimension_numbers<[1], [0], [0], [1], [0, 0, 1, 1], [], []>} : vector<16x32xf32>, vector<32x96xf32>, vector<16x96xf32> -> vector<16x96xf32>
    %c1_95 = arith.constant 1 : index
    %c0_96 = arith.constant 0 : index
    %c0_97 = arith.constant 0 : index
    %205 = vector.load %arg10[%c1_95, %c0_96, %c0_97] : memref<2x1x96xf32, #tpu.memory_space<vmem>>, vector<1x1x96xf32>
    %206 = vector.shape_cast %205 : vector<1x1x96xf32> to vector<1x96xf32>
    %207 = vector.broadcast %206 : vector<1x96xf32> to vector<16x96xf32>
    %208 = arith.addf %204, %207 : vector<16x96xf32>
    %209 = vector.shape_cast %208 : vector<16x96xf32> to vector<2x8x96xf32>
    %210 = vector.extract_strided_slice %209 {offsets = [0, 0, 0], sizes = [2, 8, 32], strides = [1, 1, 1]} : vector<2x8x96xf32> to vector<2x8x32xf32>
    %211 = vector.extract_strided_slice %209 {offsets = [0, 0, 32], sizes = [2, 8, 32], strides = [1, 1, 1]} : vector<2x8x96xf32> to vector<2x8x32xf32>
    %212 = vector.extract_strided_slice %209 {offsets = [0, 0, 64], sizes = [2, 8, 32], strides = [1, 1, 1]} : vector<2x8x96xf32> to vector<2x8x32xf32>
    %213 = vector.extract_strided_slice %210 {offsets = [0, 0, 0], sizes = [2, 8, 8], strides = [1, 1, 1]} : vector<2x8x32xf32> to vector<2x8x8xf32>
    %214 = vector.extract_strided_slice %211 {offsets = [0, 0, 0], sizes = [2, 8, 8], strides = [1, 1, 1]} : vector<2x8x32xf32> to vector<2x8x8xf32>
    "tpu.trace_start"() <{level = 10 : i32, message = "bqd,bkd->bqk"}> : () -> ()
    %cst_98 = arith.constant dense<0.000000e+00> : vector<2x8x8xf32>
    %215 = tpu.matmul %213, %214, %cst_98 {dimension_numbers = #tpu.dot_dimension_numbers<[2], [2], [1], [1], [0, 0, 0, 1, 1, 1], [0], [0]>} : vector<2x8x8xf32>, vector<2x8x8xf32>, vector<2x8x8xf32> -> vector<2x8x8xf32>
    "tpu.trace_stop"() : () -> ()
    %216 = arith.addf %215, %44 : vector<2x8x8xf32>
    %cst_99 = arith.constant dense<0xFF800000> : vector<2x8xf32>
    %217 = vector.multi_reduction <maximumf>, %216, %cst_99 [2] : vector<2x8x8xf32> to vector<2x8xf32>
    %218 = vector.shape_cast %217 : vector<2x8xf32> to vector<2x8x1xf32>
    %219 = vector.broadcast %218 : vector<2x8x1xf32> to vector<2x8x8xf32>
    %220 = arith.subf %216, %219 : vector<2x8x8xf32>
    %221 = math.exp %220 : vector<2x8x8xf32>
    %cst_100 = arith.constant dense<0.000000e+00> : vector<2x8xf32>
    %222 = vector.multi_reduction <add>, %221, %cst_100 [2] : vector<2x8x8xf32> to vector<2x8xf32>
    %223 = vector.shape_cast %222 : vector<2x8xf32> to vector<2x8x1xf32>
    %224 = vector.broadcast %223 : vector<2x8x1xf32> to vector<2x8x8xf32>
    %225 = arith.divf %221, %224 : vector<2x8x8xf32>
    %226 = vector.extract_strided_slice %212 {offsets = [0, 0, 0], sizes = [2, 8, 8], strides = [1, 1, 1]} : vector<2x8x32xf32> to vector<2x8x8xf32>
    "tpu.trace_start"() <{level = 10 : i32, message = "bqk,bkd->bqd"}> : () -> ()
    %cst_101 = arith.constant dense<0.000000e+00> : vector<2x8x8xf32>
    %227 = tpu.matmul %225, %226, %cst_101 {dimension_numbers = #tpu.dot_dimension_numbers<[2], [1], [1], [2], [0, 0, 0, 1, 1, 2], [0], [0]>} : vector<2x8x8xf32>, vector<2x8x8xf32>, vector<2x8x8xf32> -> vector<2x8x8xf32>
    "tpu.trace_stop"() : () -> ()
    %228 = vector.extract_strided_slice %210 {offsets = [0, 0, 8], sizes = [2, 8, 8], strides = [1, 1, 1]} : vector<2x8x32xf32> to vector<2x8x8xf32>
    %229 = vector.extract_strided_slice %211 {offsets = [0, 0, 8], sizes = [2, 8, 8], strides = [1, 1, 1]} : vector<2x8x32xf32> to vector<2x8x8xf32>
    "tpu.trace_start"() <{level = 10 : i32, message = "bqd,bkd->bqk"}> : () -> ()
    %cst_102 = arith.constant dense<0.000000e+00> : vector<2x8x8xf32>
    %230 = tpu.matmul %228, %229, %cst_102 {dimension_numbers = #tpu.dot_dimension_numbers<[2], [2], [1], [1], [0, 0, 0, 1, 1, 1], [0], [0]>} : vector<2x8x8xf32>, vector<2x8x8xf32>, vector<2x8x8xf32> -> vector<2x8x8xf32>
    "tpu.trace_stop"() : () -> ()
    %231 = arith.addf %230, %44 : vector<2x8x8xf32>
    %cst_103 = arith.constant dense<0xFF800000> : vector<2x8xf32>
    %232 = vector.multi_reduction <maximumf>, %231, %cst_103 [2] : vector<2x8x8xf32> to vector<2x8xf32>
    %233 = vector.shape_cast %232 : vector<2x8xf32> to vector<2x8x1xf32>
    %234 = vector.broadcast %233 : vector<2x8x1xf32> to vector<2x8x8xf32>
    %235 = arith.subf %231, %234 : vector<2x8x8xf32>
    %236 = math.exp %235 : vector<2x8x8xf32>
    %cst_104 = arith.constant dense<0.000000e+00> : vector<2x8xf32>
    %237 = vector.multi_reduction <add>, %236, %cst_104 [2] : vector<2x8x8xf32> to vector<2x8xf32>
    %238 = vector.shape_cast %237 : vector<2x8xf32> to vector<2x8x1xf32>
    %239 = vector.broadcast %238 : vector<2x8x1xf32> to vector<2x8x8xf32>
    %240 = arith.divf %236, %239 : vector<2x8x8xf32>
    %241 = vector.extract_strided_slice %212 {offsets = [0, 0, 8], sizes = [2, 8, 8], strides = [1, 1, 1]} : vector<2x8x32xf32> to vector<2x8x8xf32>
    "tpu.trace_start"() <{level = 10 : i32, message = "bqk,bkd->bqd"}> : () -> ()
    %cst_105 = arith.constant dense<0.000000e+00> : vector<2x8x8xf32>
    %242 = tpu.matmul %240, %241, %cst_105 {dimension_numbers = #tpu.dot_dimension_numbers<[2], [1], [1], [2], [0, 0, 0, 1, 1, 2], [0], [0]>} : vector<2x8x8xf32>, vector<2x8x8xf32>, vector<2x8x8xf32> -> vector<2x8x8xf32>
    "tpu.trace_stop"() : () -> ()
    %243 = vector.extract_strided_slice %210 {offsets = [0, 0, 16], sizes = [2, 8, 8], strides = [1, 1, 1]} : vector<2x8x32xf32> to vector<2x8x8xf32>
    %244 = vector.extract_strided_slice %211 {offsets = [0, 0, 16], sizes = [2, 8, 8], strides = [1, 1, 1]} : vector<2x8x32xf32> to vector<2x8x8xf32>
    "tpu.trace_start"() <{level = 10 : i32, message = "bqd,bkd->bqk"}> : () -> ()
    %cst_106 = arith.constant dense<0.000000e+00> : vector<2x8x8xf32>
    %245 = tpu.matmul %243, %244, %cst_106 {dimension_numbers = #tpu.dot_dimension_numbers<[2], [2], [1], [1], [0, 0, 0, 1, 1, 1], [0], [0]>} : vector<2x8x8xf32>, vector<2x8x8xf32>, vector<2x8x8xf32> -> vector<2x8x8xf32>
    "tpu.trace_stop"() : () -> ()
    %246 = arith.addf %245, %44 : vector<2x8x8xf32>
    %cst_107 = arith.constant dense<0xFF800000> : vector<2x8xf32>
    %247 = vector.multi_reduction <maximumf>, %246, %cst_107 [2] : vector<2x8x8xf32> to vector<2x8xf32>
    %248 = vector.shape_cast %247 : vector<2x8xf32> to vector<2x8x1xf32>
    %249 = vector.broadcast %248 : vector<2x8x1xf32> to vector<2x8x8xf32>
    %250 = arith.subf %246, %249 : vector<2x8x8xf32>
    %251 = math.exp %250 : vector<2x8x8xf32>
    %cst_108 = arith.constant dense<0.000000e+00> : vector<2x8xf32>
    %252 = vector.multi_reduction <add>, %251, %cst_108 [2] : vector<2x8x8xf32> to vector<2x8xf32>
    %253 = vector.shape_cast %252 : vector<2x8xf32> to vector<2x8x1xf32>
    %254 = vector.broadcast %253 : vector<2x8x1xf32> to vector<2x8x8xf32>
    %255 = arith.divf %251, %254 : vector<2x8x8xf32>
    %256 = vector.extract_strided_slice %212 {offsets = [0, 0, 16], sizes = [2, 8, 8], strides = [1, 1, 1]} : vector<2x8x32xf32> to vector<2x8x8xf32>
    "tpu.trace_start"() <{level = 10 : i32, message = "bqk,bkd->bqd"}> : () -> ()
    %cst_109 = arith.constant dense<0.000000e+00> : vector<2x8x8xf32>
    %257 = tpu.matmul %255, %256, %cst_109 {dimension_numbers = #tpu.dot_dimension_numbers<[2], [1], [1], [2], [0, 0, 0, 1, 1, 2], [0], [0]>} : vector<2x8x8xf32>, vector<2x8x8xf32>, vector<2x8x8xf32> -> vector<2x8x8xf32>
    "tpu.trace_stop"() : () -> ()
    %258 = vector.extract_strided_slice %210 {offsets = [0, 0, 24], sizes = [2, 8, 8], strides = [1, 1, 1]} : vector<2x8x32xf32> to vector<2x8x8xf32>
    %259 = vector.extract_strided_slice %211 {offsets = [0, 0, 24], sizes = [2, 8, 8], strides = [1, 1, 1]} : vector<2x8x32xf32> to vector<2x8x8xf32>
    "tpu.trace_start"() <{level = 10 : i32, message = "bqd,bkd->bqk"}> : () -> ()
    %cst_110 = arith.constant dense<0.000000e+00> : vector<2x8x8xf32>
    %260 = tpu.matmul %258, %259, %cst_110 {dimension_numbers = #tpu.dot_dimension_numbers<[2], [2], [1], [1], [0, 0, 0, 1, 1, 1], [0], [0]>} : vector<2x8x8xf32>, vector<2x8x8xf32>, vector<2x8x8xf32> -> vector<2x8x8xf32>
    "tpu.trace_stop"() : () -> ()
    %261 = arith.addf %260, %44 : vector<2x8x8xf32>
    %cst_111 = arith.constant dense<0xFF800000> : vector<2x8xf32>
    %262 = vector.multi_reduction <maximumf>, %261, %cst_111 [2] : vector<2x8x8xf32> to vector<2x8xf32>
    %263 = vector.shape_cast %262 : vector<2x8xf32> to vector<2x8x1xf32>
    %264 = vector.broadcast %263 : vector<2x8x1xf32> to vector<2x8x8xf32>
    %265 = arith.subf %261, %264 : vector<2x8x8xf32>
    %266 = math.exp %265 : vector<2x8x8xf32>
    %cst_112 = arith.constant dense<0.000000e+00> : vector<2x8xf32>
    %267 = vector.multi_reduction <add>, %266, %cst_112 [2] : vector<2x8x8xf32> to vector<2x8xf32>
    %268 = vector.shape_cast %267 : vector<2x8xf32> to vector<2x8x1xf32>
    %269 = vector.broadcast %268 : vector<2x8x1xf32> to vector<2x8x8xf32>
    %270 = arith.divf %266, %269 : vector<2x8x8xf32>
    %271 = vector.extract_strided_slice %212 {offsets = [0, 0, 24], sizes = [2, 8, 8], strides = [1, 1, 1]} : vector<2x8x32xf32> to vector<2x8x8xf32>
    "tpu.trace_start"() <{level = 10 : i32, message = "bqk,bkd->bqd"}> : () -> ()
    %cst_113 = arith.constant dense<0.000000e+00> : vector<2x8x8xf32>
    %272 = tpu.matmul %270, %271, %cst_113 {dimension_numbers = #tpu.dot_dimension_numbers<[2], [1], [1], [2], [0, 0, 0, 1, 1, 2], [0], [0]>} : vector<2x8x8xf32>, vector<2x8x8xf32>, vector<2x8x8xf32> -> vector<2x8x8xf32>
    "tpu.trace_stop"() : () -> ()
    %273 = tpu.concatenate %227, %242, %257, %272 in 2 : vector<2x8x8xf32>, vector<2x8x8xf32>, vector<2x8x8xf32>, vector<2x8x8xf32> -> vector<2x8x32xf32>
    %274 = vector.shape_cast %273 : vector<2x8x32xf32> to vector<16x32xf32>
    %c1_114 = arith.constant 1 : index
    %c0_115 = arith.constant 0 : index
    %c0_116 = arith.constant 0 : index
    %275 = vector.load %arg11[%c1_114, %c0_115, %c0_116] : memref<2x32x32xf32, #tpu.memory_space<vmem>>, vector<1x32x32xf32>
    %276 = vector.shape_cast %275 : vector<1x32x32xf32> to vector<32x32xf32>
    %cst_117 = arith.constant dense<0.000000e+00> : vector<16x32xf32>
    %277 = tpu.matmul %274, %276, %cst_117 {dimension_numbers = #tpu.dot_dimension_numbers<[1], [0], [0], [1], [0, 0, 1, 1], [], []>} : vector<16x32xf32>, vector<32x32xf32>, vector<16x32xf32> -> vector<16x32xf32>
    %c1_118 = arith.constant 1 : index
    %c0_119 = arith.constant 0 : index
    %c0_120 = arith.constant 0 : index
    %278 = vector.load %arg12[%c1_118, %c0_119, %c0_120] : memref<2x1x32xf32, #tpu.memory_space<vmem>>, vector<1x1x32xf32>
    %279 = vector.shape_cast %278 : vector<1x1x32xf32> to vector<1x32xf32>
    %280 = vector.broadcast %279 : vector<1x32xf32> to vector<16x32xf32>
    %281 = arith.addf %277, %280 : vector<16x32xf32>
    %282 = arith.addf %281, %201 : vector<16x32xf32>
    %c1_121 = arith.constant 1 : index
    %c0_122 = arith.constant 0 : index
    %c0_123 = arith.constant 0 : index
    %283 = vector.load %arg13[%c1_121, %c0_122, %c0_123] : memref<2x1x32xf32, #tpu.memory_space<vmem>>, vector<1x1x32xf32>
    %284 = vector.shape_cast %283 : vector<1x1x32xf32> to vector<1x32xf32>
    %c1_124 = arith.constant 1 : index
    %c0_125 = arith.constant 0 : index
    %c0_126 = arith.constant 0 : index
    %285 = vector.load %arg14[%c1_124, %c0_125, %c0_126] : memref<2x1x32xf32, #tpu.memory_space<vmem>>, vector<1x1x32xf32>
    %286 = vector.shape_cast %285 : vector<1x1x32xf32> to vector<1x32xf32>
    %cst_127 = arith.constant dense<0.000000e+00> : vector<16xf32>
    %287 = vector.multi_reduction <add>, %282, %cst_127 [1] : vector<16x32xf32> to vector<16xf32>
    %288 = vector.shape_cast %287 : vector<16xf32> to vector<16x1xf32>
    %cst_128 = arith.constant 3.200000e+01 : f32
    %289 = vector.broadcast %cst_128 : f32 to vector<16x1xf32>
    %290 = arith.divf %288, %289 : vector<16x1xf32>
    %291 = vector.broadcast %290 : vector<16x1xf32> to vector<16x32xf32>
    %292 = arith.subf %282, %291 : vector<16x32xf32>
    %293 = arith.mulf %292, %292 : vector<16x32xf32>
    %cst_129 = arith.constant dense<0.000000e+00> : vector<16xf32>
    %294 = vector.multi_reduction <add>, %293, %cst_129 [1] : vector<16x32xf32> to vector<16xf32>
    %295 = vector.shape_cast %294 : vector<16xf32> to vector<16x1xf32>
    %cst_130 = arith.constant 3.200000e+01 : f32
    %296 = vector.broadcast %cst_130 : f32 to vector<16x1xf32>
    %297 = arith.divf %295, %296 : vector<16x1xf32>
    %cst_131 = arith.constant 9.99999996E-13 : f32
    %298 = vector.broadcast %cst_131 : f32 to vector<16x1xf32>
    %299 = arith.addf %297, %298 : vector<16x1xf32>
    %300 = math.rsqrt %299 : vector<16x1xf32>
    %301 = vector.broadcast %300 : vector<16x1xf32> to vector<16x32xf32>
    %302 = arith.mulf %292, %301 : vector<16x32xf32>
    %303 = vector.broadcast %284 : vector<1x32xf32> to vector<16x32xf32>
    %304 = arith.mulf %302, %303 : vector<16x32xf32>
    %305 = vector.broadcast %286 : vector<1x32xf32> to vector<16x32xf32>
    %306 = arith.addf %304, %305 : vector<16x32xf32>
    %c1_132 = arith.constant 1 : index
    %c0_133 = arith.constant 0 : index
    %c0_134 = arith.constant 0 : index
    %307 = vector.load %arg15[%c1_132, %c0_133, %c0_134] : memref<2x32x64xf32, #tpu.memory_space<vmem>>, vector<1x32x64xf32>
    %308 = vector.shape_cast %307 : vector<1x32x64xf32> to vector<32x64xf32>
    %cst_135 = arith.constant dense<0.000000e+00> : vector<16x64xf32>
    %309 = tpu.matmul %306, %308, %cst_135 {dimension_numbers = #tpu.dot_dimension_numbers<[1], [0], [0], [1], [0, 0, 1, 1], [], []>} : vector<16x32xf32>, vector<32x64xf32>, vector<16x64xf32> -> vector<16x64xf32>
    %c1_136 = arith.constant 1 : index
    %c0_137 = arith.constant 0 : index
    %c0_138 = arith.constant 0 : index
    %310 = vector.load %arg16[%c1_136, %c0_137, %c0_138] : memref<2x1x64xf32, #tpu.memory_space<vmem>>, vector<1x1x64xf32>
    %311 = vector.shape_cast %310 : vector<1x1x64xf32> to vector<1x64xf32>
    %312 = vector.broadcast %311 : vector<1x64xf32> to vector<16x64xf32>
    %313 = arith.addf %309, %312 : vector<16x64xf32>
    %cst_139 = arith.constant 5.000000e-01 : f32
    %314 = vector.broadcast %cst_139 : f32 to vector<16x64xf32>
    %315 = arith.mulf %314, %313 : vector<16x64xf32>
    %cst_140 = arith.constant 4.471500e-02 : f32
    %316 = vector.broadcast %cst_140 : f32 to vector<16x64xf32>
    %317 = arith.mulf %316, %313 : vector<16x64xf32>
    %318 = arith.mulf %317, %313 : vector<16x64xf32>
    %319 = arith.mulf %318, %313 : vector<16x64xf32>
    %320 = arith.addf %313, %319 : vector<16x64xf32>
    %cst_141 = arith.constant 0.797884583 : f32
    %321 = vector.broadcast %cst_141 : f32 to vector<16x64xf32>
    %322 = arith.mulf %321, %320 : vector<16x64xf32>
    %323 = math.tanh %322 : vector<16x64xf32>
    %cst_142 = arith.constant 1.000000e+00 : f32
    %324 = vector.broadcast %cst_142 : f32 to vector<16x64xf32>
    %325 = arith.addf %324, %323 : vector<16x64xf32>
    %326 = arith.mulf %315, %325 : vector<16x64xf32>
    %c1_143 = arith.constant 1 : index
    %c0_144 = arith.constant 0 : index
    %c0_145 = arith.constant 0 : index
    %327 = vector.load %arg17[%c1_143, %c0_144, %c0_145] : memref<2x64x32xf32, #tpu.memory_space<vmem>>, vector<1x64x32xf32>
    %328 = vector.shape_cast %327 : vector<1x64x32xf32> to vector<64x32xf32>
    %cst_146 = arith.constant dense<0.000000e+00> : vector<16x32xf32>
    %329 = tpu.matmul %326, %328, %cst_146 {dimension_numbers = #tpu.dot_dimension_numbers<[1], [0], [0], [1], [0, 0, 1, 1], [], []>} : vector<16x64xf32>, vector<64x32xf32>, vector<16x32xf32> -> vector<16x32xf32>
    %c1_147 = arith.constant 1 : index
    %c0_148 = arith.constant 0 : index
    %c0_149 = arith.constant 0 : index
    %330 = vector.load %arg18[%c1_147, %c0_148, %c0_149] : memref<2x1x32xf32, #tpu.memory_space<vmem>>, vector<1x1x32xf32>
    %331 = vector.shape_cast %330 : vector<1x1x32xf32> to vector<1x32xf32>
    %332 = vector.broadcast %331 : vector<1x32xf32> to vector<16x32xf32>
    %333 = arith.addf %329, %332 : vector<16x32xf32>
    %334 = arith.addf %333, %306 : vector<16x32xf32>
    %c1_150 = arith.constant 1 : index
    %c0_151 = arith.constant 0 : index
    %c0_152 = arith.constant 0 : index
    %335 = vector.load %arg19[%c1_150, %c0_151, %c0_152] : memref<2x1x32xf32, #tpu.memory_space<vmem>>, vector<1x1x32xf32>
    %336 = vector.shape_cast %335 : vector<1x1x32xf32> to vector<1x32xf32>
    %c1_153 = arith.constant 1 : index
    %c0_154 = arith.constant 0 : index
    %c0_155 = arith.constant 0 : index
    %337 = vector.load %arg20[%c1_153, %c0_154, %c0_155] : memref<2x1x32xf32, #tpu.memory_space<vmem>>, vector<1x1x32xf32>
    %338 = vector.shape_cast %337 : vector<1x1x32xf32> to vector<1x32xf32>
    %cst_156 = arith.constant dense<0.000000e+00> : vector<16xf32>
    %339 = vector.multi_reduction <add>, %334, %cst_156 [1] : vector<16x32xf32> to vector<16xf32>
    %340 = vector.shape_cast %339 : vector<16xf32> to vector<16x1xf32>
    %cst_157 = arith.constant 3.200000e+01 : f32
    %341 = vector.broadcast %cst_157 : f32 to vector<16x1xf32>
    %342 = arith.divf %340, %341 : vector<16x1xf32>
    %343 = vector.broadcast %342 : vector<16x1xf32> to vector<16x32xf32>
    %344 = arith.subf %334, %343 : vector<16x32xf32>
    %345 = arith.mulf %344, %344 : vector<16x32xf32>
    %cst_158 = arith.constant dense<0.000000e+00> : vector<16xf32>
    %346 = vector.multi_reduction <add>, %345, %cst_158 [1] : vector<16x32xf32> to vector<16xf32>
    %347 = vector.shape_cast %346 : vector<16xf32> to vector<16x1xf32>
    %cst_159 = arith.constant 3.200000e+01 : f32
    %348 = vector.broadcast %cst_159 : f32 to vector<16x1xf32>
    %349 = arith.divf %347, %348 : vector<16x1xf32>
    %cst_160 = arith.constant 9.99999996E-13 : f32
    %350 = vector.broadcast %cst_160 : f32 to vector<16x1xf32>
    %351 = arith.addf %349, %350 : vector<16x1xf32>
    %352 = math.rsqrt %351 : vector<16x1xf32>
    %353 = vector.broadcast %352 : vector<16x1xf32> to vector<16x32xf32>
    %354 = arith.mulf %344, %353 : vector<16x32xf32>
    %355 = vector.broadcast %336 : vector<1x32xf32> to vector<16x32xf32>
    %356 = arith.mulf %354, %355 : vector<16x32xf32>
    %357 = vector.broadcast %338 : vector<1x32xf32> to vector<16x32xf32>
    %358 = arith.addf %356, %357 : vector<16x32xf32>
    %359 = vector.shape_cast %358 : vector<16x32xf32> to vector<2x8x32xf32>
    %360 = vector.extract_strided_slice %359 {offsets = [0, 0, 0], sizes = [2, 1, 32], strides = [1, 1, 1]} : vector<2x8x32xf32> to vector<2x1x32xf32>
    %361 = vector.shape_cast %360 : vector<2x1x32xf32> to vector<2x32xf32>
    %c0_161 = arith.constant 0 : index
    %c0_162 = arith.constant 0 : index
    %362 = vector.load %arg21[%c0_161, %c0_162] : memref<32x32xf32, #tpu.memory_space<vmem>>, vector<32x32xf32>
    %cst_163 = arith.constant dense<0.000000e+00> : vector<2x32xf32>
    %363 = tpu.matmul %361, %362, %cst_163 {dimension_numbers = #tpu.dot_dimension_numbers<[1], [0], [0], [1], [0, 0, 1, 1], [], []>} : vector<2x32xf32>, vector<32x32xf32>, vector<2x32xf32> -> vector<2x32xf32>
    %c0_164 = arith.constant 0 : index
    %c0_165 = arith.constant 0 : index
    %364 = vector.load %arg22[%c0_164, %c0_165] : memref<1x32xf32, #tpu.memory_space<vmem>>, vector<1x32xf32>
    %365 = vector.broadcast %364 : vector<1x32xf32> to vector<2x32xf32>
    %366 = arith.addf %363, %365 : vector<2x32xf32>
    %367 = math.tanh %366 : vector<2x32xf32>
    %c0_166 = arith.constant 0 : index
    %c0_167 = arith.constant 0 : index
    %368 = vector.load %arg23[%c0_166, %c0_167] : memref<2x32xf32, #tpu.memory_space<vmem>>, vector<2x32xf32>
    tpu.vector_store %arg23[%c0_166, %c0_167], %367 {strides = array<i32>} : memref<2x32xf32, #tpu.memory_space<vmem>>, vector<2x32xf32>,
    return
  }
  func.func @transform_0(%arg0: i32) -> (i32, i32) {
    %c0_i32 = arith.constant 0 : i32
    %c0_i32_0 = arith.constant 0 : i32
    %c0_i32_1 = arith.constant 0 : i32
    return %c0_i32, %c0_i32_0 : i32, i32
  }
  func.func @transform_1(%arg0: i32) -> (i32, i32) {
    %c0_i32 = arith.constant 0 : i32
    %c0_i32_0 = arith.constant 0 : i32
    %c0_i32_1 = arith.constant 0 : i32
    return %c0_i32, %c0_i32_0 : i32, i32
  }
  func.func @transform_2(%arg0: i32) -> (i32, i32, i32) {
    %c0_i32 = arith.constant 0 : i32
    %c0_i32_0 = arith.constant 0 : i32
    %c0_i32_1 = arith.constant 0 : i32
    %c0_i32_2 = arith.constant 0 : i32
    return %c0_i32, %c0_i32_0, %c0_i32_1 : i32, i32, i32
  }
  func.func @transform_3(%arg0: i32) -> (i32, i32) {
    %c0_i32 = arith.constant 0 : i32
    %c0_i32_0 = arith.constant 0 : i32
    %c0_i32_1 = arith.constant 0 : i32
    return %c0_i32, %c0_i32_0 : i32, i32
  }
  func.func @transform_4(%arg0: i32) -> (i32, i32) {
    %c0_i32 = arith.constant 0 : i32
    %c0_i32_0 = arith.constant 0 : i32
    %c0_i32_1 = arith.constant 0 : i32
    return %c0_i32, %c0_i32_0 : i32, i32
  }
  func.func @transform_5(%arg0: i32) -> (i32, i32) {
    %c0_i32 = arith.constant 0 : i32
    %c0_i32_0 = arith.constant 0 : i32
    %c0_i32_1 = arith.constant 0 : i32
    return %c0_i32, %c0_i32_0 : i32, i32
  }
  func.func @transform_6(%arg0: i32) -> (i32, i32) {
    %c0_i32 = arith.constant 0 : i32
    %c0_i32_0 = arith.constant 0 : i32
    %c0_i32_1 = arith.constant 0 : i32
    return %c0_i32, %c0_i32_0 : i32, i32
  }
  func.func @transform_7(%arg0: i32) -> (i32, i32) {
    %c0_i32 = arith.constant 0 : i32
    %c0_i32_0 = arith.constant 0 : i32
    %c0_i32_1 = arith.constant 0 : i32
    return %c0_i32, %c0_i32_0 : i32, i32
  }
  func.func @transform_8(%arg0: i32) -> (i32, i32, i32) {
    %c0_i32 = arith.constant 0 : i32
    %c0_i32_0 = arith.constant 0 : i32
    %c0_i32_1 = arith.constant 0 : i32
    %c0_i32_2 = arith.constant 0 : i32
    return %c0_i32, %c0_i32_0, %c0_i32_1 : i32, i32, i32
  }
  func.func @transform_9(%arg0: i32) -> (i32, i32, i32) {
    %c0_i32 = arith.constant 0 : i32
    %c0_i32_0 = arith.constant 0 : i32
    %c0_i32_1 = arith.constant 0 : i32
    %c0_i32_2 = arith.constant 0 : i32
    return %c0_i32, %c0_i32_0, %c0_i32_1 : i32, i32, i32
  }
  func.func @transform_10(%arg0: i32) -> (i32, i32, i32) {
    %c0_i32 = arith.constant 0 : i32
    %c0_i32_0 = arith.constant 0 : i32
    %c0_i32_1 = arith.constant 0 : i32
    %c0_i32_2 = arith.constant 0 : i32
    return %c0_i32, %c0_i32_0, %c0_i32_1 : i32, i32, i32
  }
  func.func @transform_11(%arg0: i32) -> (i32, i32, i32) {
    %c0_i32 = arith.constant 0 : i32
    %c0_i32_0 = arith.constant 0 : i32
    %c0_i32_1 = arith.constant 0 : i32
    %c0_i32_2 = arith.constant 0 : i32
    return %c0_i32, %c0_i32_0, %c0_i32_1 : i32, i32, i32
  }
  func.func @transform_12(%arg0: i32) -> (i32, i32, i32) {
    %c0_i32 = arith.constant 0 : i32
    %c0_i32_0 = arith.constant 0 : i32
    %c0_i32_1 = arith.constant 0 : i32
    %c0_i32_2 = arith.constant 0 : i32
    return %c0_i32, %c0_i32_0, %c0_i32_1 : i32, i32, i32
  }
  func.func @transform_13(%arg0: i32) -> (i32, i32, i32) {
    %c0_i32 = arith.constant 0 : i32
    %c0_i32_0 = arith.constant 0 : i32
    %c0_i32_1 = arith.constant 0 : i32
    %c0_i32_2 = arith.constant 0 : i32
    return %c0_i32, %c0_i32_0, %c0_i32_1 : i32, i32, i32
  }
  func.func @transform_14(%arg0: i32) -> (i32, i32, i32) {
    %c0_i32 = arith.constant 0 : i32
    %c0_i32_0 = arith.constant 0 : i32
    %c0_i32_1 = arith.constant 0 : i32
    %c0_i32_2 = arith.constant 0 : i32
    return %c0_i32, %c0_i32_0, %c0_i32_1 : i32, i32, i32
  }
  func.func @transform_15(%arg0: i32) -> (i32, i32, i32) {
    %c0_i32 = arith.constant 0 : i32
    %c0_i32_0 = arith.constant 0 : i32
    %c0_i32_1 = arith.constant 0 : i32
    %c0_i32_2 = arith.constant 0 : i32
    return %c0_i32, %c0_i32_0, %c0_i32_1 : i32, i32, i32
  }
  func.func @transform_16(%arg0: i32) -> (i32, i32, i32) {
    %c0_i32 = arith.constant 0 : i32
    %c0_i32_0 = arith.constant 0 : i32
    %c0_i32_1 = arith.constant 0 : i32
    %c0_i32_2 = arith.constant 0 : i32
    return %c0_i32, %c0_i32_0, %c0_i32_1 : i32, i32, i32
  }
  func.func @transform_17(%arg0: i32) -> (i32, i32, i32) {
    %c0_i32 = arith.constant 0 : i32
    %c0_i32_0 = arith.constant 0 : i32
    %c0_i32_1 = arith.constant 0 : i32
    %c0_i32_2 = arith.constant 0 : i32
    return %c0_i32, %c0_i32_0, %c0_i32_1 : i32, i32, i32
  }
  func.func @transform_18(%arg0: i32) -> (i32, i32, i32) {
    %c0_i32 = arith.constant 0 : i32
    %c0_i32_0 = arith.constant 0 : i32
    %c0_i32_1 = arith.constant 0 : i32
    %c0_i32_2 = arith.constant 0 : i32
    return %c0_i32, %c0_i32_0, %c0_i32_1 : i32, i32, i32
  }
  func.func @transform_19(%arg0: i32) -> (i32, i32, i32) {
    %c0_i32 = arith.constant 0 : i32
    %c0_i32_0 = arith.constant 0 : i32
    %c0_i32_1 = arith.constant 0 : i32
    %c0_i32_2 = arith.constant 0 : i32
    return %c0_i32, %c0_i32_0, %c0_i32_1 : i32, i32, i32
  }
  func.func @transform_20(%arg0: i32) -> (i32, i32) {
    %c0_i32 = arith.constant 0 : i32
    %c0_i32_0 = arith.constant 0 : i32
    %c0_i32_1 = arith.constant 0 : i32
    return %c0_i32, %c0_i32_0 : i32, i32
  }
  func.func @transform_21(%arg0: i32) -> (i32, i32) {
    %c0_i32 = arith.constant 0 : i32
    %c0_i32_0 = arith.constant 0 : i32
    %c0_i32_1 = arith.constant 0 : i32
    return %c0_i32, %c0_i32_0 : i32, i32
  }
  func.func @transform_22(%arg0: i32) -> (i32, i32) {
    %c0_i32 = arith.constant 0 : i32
    %c0_i32_0 = arith.constant 0 : i32
    %c0_i32_1 = arith.constant 0 : i32
    return %c0_i32, %c0_i32_0 : i32, i32
  }
}

</mosaic_0001>

<llo_original>
// kernel: text_encoder_forward.1
$region0: #{text_encoder_forward.1}
  #allocation0 [shape = 'u32[]', space=smem, size = 0x4, offset = 0x4, fixed_abs, tag = 'smem constant byte address 0x4 - core index']
  #allocation1 [shape = 'u32[144,128]{1,0:T(1,128)}', space=vmem, size = 0x12000, scoped, tag = 'internal scratch']
  %s0 = inlined_call_operand.vmem [shape: s32[16,1], index: 0, kind: input, shape index: {}]
  %s1 = inlined_call_operand.vmem [shape: s32[16,1], index: 1, kind: input, shape index: {}]
  %s2 = inlined_call_operand.vmem [shape: f32[2,1,8], index: 2, kind: input, shape index: {}]
  %s3 = inlined_call_operand.vmem [shape: f32[100,32], index: 3, kind: input, shape index: {}]
  %s4 = inlined_call_operand.vmem [shape: f32[2,32], index: 4, kind: input, shape index: {}]
  %s5 = inlined_call_operand.vmem [shape: f32[8,32], index: 5, kind: input, shape index: {}]
  %s6 = inlined_call_operand.vmem [shape: f32[1,32], index: 6, kind: input, shape index: {}]
  %s7 = inlined_call_operand.vmem [shape: f32[1,32], index: 7, kind: input, shape index: {}]
  %s8 = inlined_call_operand.vmem [shape: f32[2,32,96], index: 8, kind: input, shape index: {}]
  %s9 = inlined_call_operand.vmem [shape: f32[2,1,96], index: 9, kind: input, shape index: {}]
  %s10 = inlined_call_operand.vmem [shape: f32[2,32,32], index: 10, kind: input, shape index: {}]
  %s11 = inlined_call_operand.vmem [shape: f32[2,1,32], index: 11, kind: input, shape index: {}]
  %s12 = inlined_call_operand.vmem [shape: f32[2,1,32], index: 12, kind: input, shape index: {}]
  %s13 = inlined_call_operand.vmem [shape: f32[2,1,32], index: 13, kind: input, shape index: {}]
  %s14 = inlined_call_operand.vmem [shape: f32[2,32,64], index: 14, kind: input, shape index: {}]
  %s15 = inlined_call_operand.vmem [shape: f32[2,1,64], index: 15, kind: input, shape index: {}]
  %s16 = inlined_call_operand.vmem [shape: f32[2,64,32], index: 16, kind: input, shape index: {}]
  %s17 = inlined_call_operand.vmem [shape: f32[2,1,32], index: 17, kind: input, shape index: {}]
  %s18 = inlined_call_operand.vmem [shape: f32[2,1,32], index: 18, kind: input, shape index: {}]
  %s19 = inlined_call_operand.vmem [shape: f32[2,1,32], index: 19, kind: input, shape index: {}]
  %s20 = inlined_call_operand.vmem [shape: f32[32,32], index: 20, kind: input, shape index: {}]
  %s21 = inlined_call_operand.vmem [shape: f32[1,32], index: 21, kind: input, shape index: {}]
  %s22 = inlined_call_operand.hbm [shape: f32[2,32], index: 22, kind: output, shape index: {}]
  %s23 = sld [smem:[#allocation0]]
  $region98: #{text_encoder_forward.1} parent=0
    _
  %s25 = ssub.s32 1, %s23
  %s26 = scalar_select 0, %s25, %s23
  $region1: #{text_encoder_forward.1} parent=0
    #allocation2 [shape = 'u8[1024]{0}', space=vmem, size = 0x400, scoped, tag = 'output window, operand 0, single buffered']
    #allocation3 [shape = 's32[1]{0}', space=sflag, size = 0x4, scoped, tag = 'scoped memory for text_encoder_forward.1']
    %27 = vsyncpa [#allocation3], 0
    // Predicated region
    $region2: #{text_encoder_forward.1} parent=1 // pred_check
      _
    $region3: #{text_encoder_forward.1} parent=1 // pred_check_branch
      %29 = sbr.rel (0) target = $region5
    $region4: #{text_encoder_forward.1} parent=1 // pred_region
      _
    $region5: #{text_encoder_forward.1} parent=1 // pred_fallthru
      _
    // Predicated region
    $region6: #{text_encoder_forward.1} parent=1 // pred_check
      _
    $region7: #{text_encoder_forward.1} parent=1 // pred_check_branch
      %31 = sbr.rel (0) target = $region9
    $region8: #{text_encoder_forward.1} parent=1 // pred_region
      _
    $region9: #{text_encoder_forward.1} parent=1 // pred_fallthru
      _
    // Predicated region
    $region10: #{text_encoder_forward.1} parent=1 // pred_check
      _
    $region11: #{text_encoder_forward.1} parent=1 // pred_check_branch
      %33 = sbr.rel (0) target = $region13
    $region12: #{text_encoder_forward.1} parent=1 // pred_region
      _
    $region13: #{text_encoder_forward.1} parent=1 // pred_fallthru
      _
    // Predicated region
    $region14: #{text_encoder_forward.1} parent=1 // pred_check
      _
    $region15: #{text_encoder_forward.1} parent=1 // pred_check_branch
      %35 = sbr.rel (0) target = $region17
    $region16: #{text_encoder_forward.1} parent=1 // pred_region
      _
    $region17: #{text_encoder_forward.1} parent=1 // pred_fallthru
      _
    // Predicated region
    $region18: #{text_encoder_forward.1} parent=1 // pred_check
      _
    $region19: #{text_encoder_forward.1} parent=1 // pred_check_branch
      %37 = sbr.rel (0) target = $region21
    $region20: #{text_encoder_forward.1} parent=1 // pred_region
      _
    $region21: #{text_encoder_forward.1} parent=1 // pred_fallthru
      _
    // Predicated region
    $region22: #{text_encoder_forward.1} parent=1 // pred_check
      _
    $region23: #{text_encoder_forward.1} parent=1 // pred_check_branch
      %39 = sbr.rel (0) target = $region25
    $region24: #{text_encoder_forward.1} parent=1 // pred_region
      _
    $region25: #{text_encoder_forward.1} parent=1 // pred_fallthru
      _
    // Predicated region
    $region26: #{text_encoder_forward.1} parent=1 // pred_check
      _
    $region27: #{text_encoder_forward.1} parent=1 // pred_check_branch
      %41 = sbr.rel (0) target = $region29
    $region28: #{text_encoder_forward.1} parent=1 // pred_region
      _
    $region29: #{text_encoder_forward.1} parent=1 // pred_fallthru
      _
    // Predicated region
    $region30: #{text_encoder_forward.1} parent=1 // pred_check
      _
    $region31: #{text_encoder_forward.1} parent=1 // pred_check_branch
      %43 = sbr.rel (0) target = $region33
    $region32: #{text_encoder_forward.1} parent=1 // pred_region
      _
    $region33: #{text_encoder_forward.1} parent=1 // pred_fallthru
      _
    // Predicated region
    $region34: #{text_encoder_forward.1} parent=1 // pred_check
      _
    $region35: #{text_encoder_forward.1} parent=1 // pred_check_branch
      %45 = sbr.rel (0) target = $region37
    $region36: #{text_encoder_forward.1} parent=1 // pred_region
      _
    $region37: #{text_encoder_forward.1} parent=1 // pred_fallthru
      _
    // Predicated region
    $region38: #{text_encoder_forward.1} parent=1 // pred_check
      _
    $region39: #{text_encoder_forward.1} parent=1 // pred_check_branch
      %47 = sbr.rel (0) target = $region41
    $region40: #{text_encoder_forward.1} parent=1 // pred_region
      _
    $region41: #{text_encoder_forward.1} parent=1 // pred_fallthru
      _
    // Predicated region
    $region42: #{text_encoder_forward.1} parent=1 // pred_check
      _
    $region43: #{text_encoder_forward.1} parent=1 // pred_check_branch
      %49 = sbr.rel (0) target = $region45
    $region44: #{text_encoder_forward.1} parent=1 // pred_region
      _
    $region45: #{text_encoder_forward.1} parent=1 // pred_fallthru
      _
    // Predicated region
    $region46: #{text_encoder_forward.1} parent=1 // pred_check
      _
    $region47: #{text_encoder_forward.1} parent=1 // pred_check_branch
      %51 = sbr.rel (0) target = $region49
    $region48: #{text_encoder_forward.1} parent=1 // pred_region
      _
    $region49: #{text_encoder_forward.1} parent=1 // pred_fallthru
      _
    // Predicated region
    $region50: #{text_encoder_forward.1} parent=1 // pred_check
      _
    $region51: #{text_encoder_forward.1} parent=1 // pred_check_branch
      %53 = sbr.rel (0) target = $region53
    $region52: #{text_encoder_forward.1} parent=1 // pred_region
      _
    $region53: #{text_encoder_forward.1} parent=1 // pred_fallthru
      _
    // Predicated region
    $region54: #{text_encoder_forward.1} parent=1 // pred_check
      _
    $region55: #{text_encoder_forward.1} parent=1 // pred_check_branch
      %55 = sbr.rel (0) target = $region57
    $region56: #{text_encoder_forward.1} parent=1 // pred_region
      _
    $region57: #{text_encoder_forward.1} parent=1 // pred_fallthru
      _
    // Predicated region
    $region58: #{text_encoder_forward.1} parent=1 // pred_check
      _
    $region59: #{text_encoder_forward.1} parent=1 // pred_check_branch
      %57 = sbr.rel (0) target = $region61
    $region60: #{text_encoder_forward.1} parent=1 // pred_region
      _
    $region61: #{text_encoder_forward.1} parent=1 // pred_fallthru
      _
    // Predicated region
    $region62: #{text_encoder_forward.1} parent=1 // pred_check
      _
    $region63: #{text_encoder_forward.1} parent=1 // pred_check_branch
      %59 = sbr.rel (0) target = $region65
    $region64: #{text_encoder_forward.1} parent=1 // pred_region
      _
    $region65: #{text_encoder_forward.1} parent=1 // pred_fallthru
      _
    // Predicated region
    $region66: #{text_encoder_forward.1} parent=1 // pred_check
      _
    $region67: #{text_encoder_forward.1} parent=1 // pred_check_branch
      %61 = sbr.rel (0) target = $region69
    $region68: #{text_encoder_forward.1} parent=1 // pred_region
      _
    $region69: #{text_encoder_forward.1} parent=1 // pred_fallthru
      _
    // Predicated region
    $region70: #{text_encoder_forward.1} parent=1 // pred_check
      _
    $region71: #{text_encoder_forward.1} parent=1 // pred_check_branch
      %63 = sbr.rel (0) target = $region73
    $region72: #{text_encoder_forward.1} parent=1 // pred_region
      _
    $region73: #{text_encoder_forward.1} parent=1 // pred_fallthru
      _
    // Predicated region
    $region74: #{text_encoder_forward.1} parent=1 // pred_check
      _
    $region75: #{text_encoder_forward.1} parent=1 // pred_check_branch
      %65 = sbr.rel (0) target = $region77
    $region76: #{text_encoder_forward.1} parent=1 // pred_region
      _
    $region77: #{text_encoder_forward.1} parent=1 // pred_fallthru
      _
    // Predicated region
    $region78: #{text_encoder_forward.1} parent=1 // pred_check
      _
    $region79: #{text_encoder_forward.1} parent=1 // pred_check_branch
      %67 = sbr.rel (0) target = $region81
    $region80: #{text_encoder_forward.1} parent=1 // pred_region
      _
    $region81: #{text_encoder_forward.1} parent=1 // pred_fallthru
      _
    // Predicated region
    $region82: #{text_encoder_forward.1} parent=1 // pred_check
      _
    $region83: #{text_encoder_forward.1} parent=1 // pred_check_branch
      %69 = sbr.rel (0) target = $region85
    $region84: #{text_encoder_forward.1} parent=1 // pred_region
      _
    $region85: #{text_encoder_forward.1} parent=1 // pred_fallthru
      _
    // Predicated region
    $region86: #{text_encoder_forward.1} parent=1 // pred_check
      _
    $region87: #{text_encoder_forward.1} parent=1 // pred_check_branch
      %71 = sbr.rel (0) target = $region89
    $region88: #{text_encoder_forward.1} parent=1 // pred_region
      _
    $region89: #{text_encoder_forward.1} parent=1 // pred_fallthru
      _
    %v72 = vld [vmem:[%s0] sm:$0xff]
    %v73 = vld [vmem:[%s0 + $0x8] sm:$0xff]
    %v74 = vld [vmem:[%s1] sm:$0xff]
    %v75 = vld [vmem:[%s1 + $0x8] sm:$0xff]
    %v76 = vlaneseq
    %v77 = vand.u32 %v76, 127
    %78 = vset.pattern.permute.xlu0 0
    %79 = vperm.xlu0 %78, %v72
    %v80 = vpop.permute.xlu0 %79
    %81 = vset.pattern.permute.xlu0 0
    %82 = vperm.xlu0 %81, %v73
    %v83 = vpop.permute.xlu0 %82
    %vm84 = vcmp.eq.s32.totalorder %v80, %v77
    %vm85 = vcmp.eq.s32.totalorder %v83, %v77
    %v86 = vsel %vm84, 1, 0
    %v87 = vsel %vm85, 1, 0
    %v88 = vcvt.s32.f32 %v86
    %v89 = vcvt.s32.f32 %v87
    %90 = vset.pattern.permute.xlu0 0
    %91 = vperm.xlu0 %90, %v74
    %v92 = vpop.permute.xlu0 %91
    %93 = vset.pattern.permute.xlu0 0
    %94 = vperm.xlu0 %93, %v75
    %v95 = vpop.permute.xlu0 %94
    %vm96 = vcmp.eq.s32.totalorder %v92, %v77
    %vm97 = vcmp.eq.s32.totalorder %v95, %v77
    %v98 = vsel %vm96, 1, 0
    %v99 = vsel %vm97, 1, 0
    %v100 = vcvt.s32.f32 %v98
    %v101 = vcvt.s32.f32 %v99
    %v102 = vld [vmem:[%s5] sm:$0xff]
    %v103 = vld [vmem:[%s3] sm:$0xff]
    %v104 = vld [vmem:[%s3 + $0x8] sm:$0xff]
    %v105 = vld [vmem:[%s3 + $0x10] sm:$0xff]
    %v106 = vld [vmem:[%s3 + $0x18] sm:$0xff]
    %v107 = vld [vmem:[%s3 + $0x20] sm:$0xff]
    %v108 = vld [vmem:[%s3 + $0x28] sm:$0xff]
    %v109 = vld [vmem:[%s3 + $0x30] sm:$0xff]
    %v110 = vld [vmem:[%s3 + $0x38] sm:$0xff]
    %v111 = vld [vmem:[%s3 + $0x40] sm:$0xff]
    %v112 = vld [vmem:[%s3 + $0x48] sm:$0xff]
    %v113 = vld [vmem:[%s3 + $0x50] sm:$0xff]
    %v114 = vld [vmem:[%s3 + $0x58] sm:$0xff]
    %v115 = vld [vmem:[%s3 + $0x60] sm:$0xf]
    %v116 = vld [vmem:[%s4] sm:$0x3]
    %vm117 = vcmask 15360
    %v119 = vsel %vm117, %v100, 0
    %v122 = vsel %vm117, %v101, 0
    %vm124 = vcmask 1041408
    %v126 = vsel %vm124, %v116, 0
    %128 = vmatprep.subr.mxu0 0.0
    %129 = vmatpush1.msra.mxu0 0.0
    %130 = vmatprep.subr.mxu0 0.0
    %131 = vmatpush1.msra.mxu0 0.0
    %132 = vmatprep.subr.mxu0 0.0
    %133 = vmatpush1.msra.mxu0 0.0
    %134 = vmatprep.subr.mxu0 0.0
    %135 = vmatpush1.msra.mxu0 0.0
    %136 = vmatprep.subr.mxu0 0.0
    %137 = vmatpush1.msra.mxu0 0.0
    %138 = vmatprep.subr.mxu0 0.0
    %139 = vmatpush1.msra.mxu0 0.0
    %140 = vmatprep.subr.mxu0 0.0
    %141 = vmatpush1.msra.mxu0 0.0
    %142 = vmatprep.subr.mxu0 0.0
    %143 = vmatpush1.msra.mxu0 0.0
    %144 = vmatprep.subr.mxu0 0.0
    %145 = vmatpush1.msra.mxu0 0.0
    %146 = vmatprep.subr.mxu0 0.0
    %147 = vmatpush1.msra.mxu0 0.0
    %148 = vmatprep.subr.mxu0 0.0
    %149 = vmatpush1.msra.mxu0 0.0
    %150 = vmatprep.subr.mxu0 0.0
    %151 = vmatpush1.msra.mxu0 0.0
    %152 = vmatprep.subr.mxu0 0.0
    %153 = vmatpush1.msra.mxu0 0.0
    %154 = vmatprep.subr.mxu0 0.0
    %155 = vmatpush1.msra.mxu0 0.0
    %156 = vmatprep.subr.mxu0 0.0
    %157 = vmatpush1.msra.mxu0 0.0
    %158 = vmatprep.subr.mxu0 0.0
    %159 = vmatpush1.msra.mxu0 %v126
    %160 = vmatprep.subr.mxu0 0.0
    %161 = vmatpush2.msra.mxu0 0.0
    %162 = vmatprep.subr.mxu0 0.0
    %163 = vmatpush2.msra.mxu0 0.0
    %164 = vmatprep.subr.mxu0 0.0
    %165 = vmatpush2.msra.mxu0 0.0
    %166 = vmatprep.subr.mxu0 0.0
    %167 = vmatpush2.msra.mxu0 0.0
    %168 = vmatprep.subr.mxu0 0.0
    %169 = vmatpush2.msra.mxu0 0.0
    %170 = vmatprep.subr.mxu0 0.0
    %171 = vmatpush2.msra.mxu0 0.0
    %172 = vmatprep.subr.mxu0 0.0
    %173 = vmatpush2.msra.mxu0 0.0
    %174 = vmatprep.subr.mxu0 0.0
    %175 = vmatpush2.msra.mxu0 0.0
    %176 = vmatprep.subr.mxu0 0.0
    %177 = vmatpush2.msra.mxu0 0.0
    %178 = vmatprep.subr.mxu0 0.0
    %179 = vmatpush2.msra.mxu0 0.0
    %180 = vmatprep.subr.mxu0 0.0
    %181 = vmatpush2.msra.mxu0 0.0
    %182 = vmatprep.subr.mxu0 0.0
    %183 = vmatpush2.msra.mxu0 0.0
    %184 = vmatprep.subr.mxu0 0.0
    %185 = vmatpush2.msra.mxu0 0.0
    %186 = vmatprep.subr.mxu0 0.0
    %187 = vmatpush2.msra.mxu0 0.0
    %188 = vmatprep.subr.mxu0 0.0
    %189 = vmatpush2.msra.mxu0 0.0
    %190 = vmatprep.subr.mxu0 0.0
    %191 = vmatpush2.msra.mxu0 0.0
    %192 = vmatprep.mubr.f32.mxu0 0.0
    %193 = vmatmul.mubr.f32.gmra.mxu0 %v119
    %v194 = vpop.f32.mrf.mxu0
    %v195 = vadd.f32 0.0, %v194
    %v196 = vpop.f32.mrf.mxu0
    %197 = vmatprep.mubr.f32.mxu0 0.0
    %198 = vmatmul.mubr.f32.gmra.mxu0 %v122
    %v199 = vpop.f32.mrf.mxu0
    %v200 = vadd.f32 0.0, %v199
    %v201 = vpop.f32.mrf.mxu0
    %202 = vdwg.mxu0
    %vm203 = vcmask 818176
    %v205 = vsel %vm203, %v88, 0
    %v208 = vsel %vm203, %v89, 0
    %vm210 = vcmask 1043456
    %v212 = vsel %vm210, %v115, 0
    %214 = vmatprep.subr.mxu0 0.0
    %215 = vmatpush1.msra.mxu0 0.0
    %216 = vmatprep.subr.mxu0 0.0
    %217 = vmatpush1.msra.mxu0 0.0
    %218 = vmatprep.subr.mxu0 0.0
    %219 = vmatpush1.msra.mxu0 0.0
    %220 = vmatprep.subr.mxu0 0.0
    %221 = vmatpush1.msra.mxu0 %v212
    %222 = vmatprep.subr.mxu0 0.0
    %223 = vmatpush1.msra.mxu0 %v114
    %224 = vmatprep.subr.mxu0 0.0
    %225 = vmatpush1.msra.mxu0 %v113
    %226 = vmatprep.subr.mxu0 0.0
    %227 = vmatpush1.msra.mxu0 %v112
    %228 = vmatprep.subr.mxu0 0.0
    %229 = vmatpush1.msra.mxu0 %v111
    %230 = vmatprep.subr.mxu0 0.0
    %231 = vmatpush1.msra.mxu0 %v110
    %232 = vmatprep.subr.mxu0 0.0
    %233 = vmatpush1.msra.mxu0 %v109
    %234 = vmatprep.subr.mxu0 0.0
    %235 = vmatpush1.msra.mxu0 %v108
    %236 = vmatprep.subr.mxu0 0.0
    %237 = vmatpush1.msra.mxu0 %v107
    %238 = vmatprep.subr.mxu0 0.0
    %239 = vmatpush1.msra.mxu0 %v106
    %240 = vmatprep.subr.mxu0 0.0
    %241 = vmatpush1.msra.mxu0 %v105
    %242 = vmatprep.subr.mxu0 0.0
    %243 = vmatpush1.msra.mxu0 %v104
    %244 = vmatprep.subr.mxu0 0.0
    %245 = vmatpush1.msra.mxu0 %v103
    %246 = vmatprep.subr.mxu0 0.0
    %247 = vmatpush2.msra.mxu0 0.0
    %248 = vmatprep.subr.mxu0 0.0
    %249 = vmatpush2.msra.mxu0 0.0
    %250 = vmatprep.subr.mxu0 0.0
    %251 = vmatpush2.msra.mxu0 0.0
    %252 = vmatprep.subr.mxu0 0.0
    %253 = vmatpush2.msra.mxu0 0.0
    %254 = vmatprep.subr.mxu0 0.0
    %255 = vmatpush2.msra.mxu0 0.0
    %256 = vmatprep.subr.mxu0 0.0
    %257 = vmatpush2.msra.mxu0 0.0
    %258 = vmatprep.subr.mxu0 0.0
    %259 = vmatpush2.msra.mxu0 0.0
    %260 = vmatprep.subr.mxu0 0.0
    %261 = vmatpush2.msra.mxu0 0.0
    %262 = vmatprep.subr.mxu0 0.0
    %263 = vmatpush2.msra.mxu0 0.0
    %264 = vmatprep.subr.mxu0 0.0
    %265 = vmatpush2.msra.mxu0 0.0
    %266 = vmatprep.subr.mxu0 0.0
    %267 = vmatpush2.msra.mxu0 0.0
    %268 = vmatprep.subr.mxu0 0.0
    %269 = vmatpush2.msra.mxu0 0.0
    %270 = vmatprep.subr.mxu0 0.0
    %271 = vmatpush2.msra.mxu0 0.0
    %272 = vmatprep.subr.mxu0 0.0
    %273 = vmatpush2.msra.mxu0 0.0
    %274 = vmatprep.subr.mxu0 0.0
    %275 = vmatpush2.msra.mxu0 0.0
    %276 = vmatprep.subr.mxu0 0.0
    %277 = vmatpush2.msra.mxu0 0.0
    %278 = vmatprep.mubr.f32.mxu0 0.0
    %279 = vmatmul.mubr.f32.gmra.mxu0 %v205
    %v280 = vpop.f32.mrf.mxu0
    %v281 = vadd.f32 %v195, %v280
    %v282 = vpop.f32.mrf.mxu0
    %283 = vmatprep.mubr.f32.mxu0 0.0
    %284 = vmatmul.mubr.f32.gmra.mxu0 %v208
    %v285 = vpop.f32.mrf.mxu0
    %v286 = vadd.f32 %v200, %v285
    %v287 = vpop.f32.mrf.mxu0
    %288 = vdwg.mxu0
    %v289 = vadd.f32 %v281, %v102
    %v290 = vadd.f32 %v286, %v102
    %v291 = vld [vmem:[%s6] sm:$0x1]
    %v292 = vld [vmem:[%s7] sm:$0x1]
    %vm293 = vcmask 261120
    %v294 = vsel %vm293, %v289, 0.0
    %295 = vadd.xlane.f32.xlu0 %v294
    %v296 = vpop.xlane.xlu0 %295
    %v297 = vsel %vm293, %v290, 0.0
    %298 = vadd.xlane.f32.xlu0 %v297
    %v299 = vpop.xlane.xlu0 %298
    %v300 = vrcp.pop 32.0
    %v301 = vmul.f32 %v296, %v300
    %v302 = vmul.f32 %v299, %v300
    %v303 = vsub.f32 %v289, %v301
    %v304 = vsub.f32 %v290, %v302
    %v305 = vmul.f32 %v303, %v303
    %v306 = vmul.f32 %v304, %v304
    %v307 = vsel %vm293, %v305, 0.0
    %308 = vadd.xlane.f32.xlu0 %v307
    %v309 = vpop.xlane.xlu0 %308
    %v310 = vsel %vm293, %v306, 0.0
    %311 = vadd.xlane.f32.xlu0 %v310
    %v312 = vpop.xlane.xlu0 %311
    %v313 = vmul.f32 %v309, %v300
    %v314 = vmul.f32 %v312, %v300
    %v315 = vadd.f32 %v313, 1e-12
    %v316 = vadd.f32 %v314, 1e-12
    %v317 = vrsqrt.pop %v315
    %v318 = vrsqrt.pop %v316
    %v319 = vmul.f32 %v303, %v317
    %v320 = vmul.f32 %v304, %v318
    %v322 = vlaneseq
    %v323 = vshrl.u32 %v322, 7
    %v324 = vsub.s32 0, %v323
    %v325 = vrot.slane %v291, %v324
    %v327 = vmul.f32 %v319, %v325
    %v328 = vmul.f32 %v320, %v325
    %v330 = vlaneseq
    %v331 = vshrl.u32 %v330, 7
    %v332 = vsub.s32 0, %v331
    %v333 = vrot.slane %v292, %v332
    %v335 = vadd.f32 %v327, %v333
    %v336 = vadd.f32 %v328, %v333
    %v337 = vld [vmem:[%s2] sm:$0x1]
    %v338 = vld [vmem:[%s2 + $0x1] sm:$0x1]
    %v341 = vlaneseq
    %v342 = vshrl.u32 %v341, 7
    %v343 = vsub.s32 0, %v342
    %v344 = vrot.slane %v337, %v343
    %v345 = vlaneseq
    %v346 = vshrl.u32 %v345, 7
    %v347 = vsub.s32 0, %v346
    %v348 = vrot.slane %v338, %v347
    %v351 = vld [vmem:[%s8] sm:$0xff]
    %v352 = vld [vmem:[%s8 + $0x8] sm:$0xff]
    %v353 = vld [vmem:[%s8 + $0x10] sm:$0xff]
    %v354 = vld [vmem:[%s8 + $0x18] sm:$0xff]
    %v355 = vld [vmem:[%s9] sm:$0x1]
    %v357 = vlaneseq
    %v358 = vshrl.u32 %v357, 7
    %v359 = vsub.s32 0, %v358
    %v360 = vrot.slane %v355, %v359
    %v363 = vsel %vm293, %v335, 0
    %v366 = vsel %vm293, %v336, 0
    %368 = vmatprep.subr.mxu0 0.0
    %369 = vmatpush1.msra.mxu0 0.0
    %370 = vmatprep.subr.mxu0 0.0
    %371 = vmatpush1.msra.mxu0 0.0
    %372 = vmatprep.subr.mxu0 0.0
    %373 = vmatpush1.msra.mxu0 0.0
    %374 = vmatprep.subr.mxu0 0.0
    %375 = vmatpush1.msra.mxu0 0.0
    %376 = vmatprep.subr.mxu0 0.0
    %377 = vmatpush1.msra.mxu0 0.0
    %378 = vmatprep.subr.mxu0 0.0
    %379 = vmatpush1.msra.mxu0 0.0
    %380 = vmatprep.subr.mxu0 0.0
    %381 = vmatpush1.msra.mxu0 0.0
    %382 = vmatprep.subr.mxu0 0.0
    %383 = vmatpush1.msra.mxu0 0.0
    %384 = vmatprep.subr.mxu0 0.0
    %385 = vmatpush1.msra.mxu0 0.0
    %386 = vmatprep.subr.mxu0 0.0
    %387 = vmatpush1.msra.mxu0 0.0
    %388 = vmatprep.subr.mxu0 0.0
    %389 = vmatpush1.msra.mxu0 0.0
    %390 = vmatprep.subr.mxu0 0.0
    %391 = vmatpush1.msra.mxu0 0.0
    %392 = vmatprep.subr.mxu0 0.0
    %393 = vmatpush1.msra.mxu0 %v354
    %394 = vmatprep.subr.mxu0 0.0
    %395 = vmatpush1.msra.mxu0 %v353
    %396 = vmatprep.subr.mxu0 0.0
    %397 = vmatpush1.msra.mxu0 %v352
    %398 = vmatprep.subr.mxu0 0.0
    %399 = vmatpush1.msra.mxu0 %v351
    %400 = vmatprep.subr.mxu0 0.0
    %401 = vmatpush2.msra.mxu0 0.0
    %402 = vmatprep.subr.mxu0 0.0
    %403 = vmatpush2.msra.mxu0 0.0
    %404 = vmatprep.subr.mxu0 0.0
    %405 = vmatpush2.msra.mxu0 0.0
    %406 = vmatprep.subr.mxu0 0.0
    %407 = vmatpush2.msra.mxu0 0.0
    %408 = vmatprep.subr.mxu0 0.0
    %409 = vmatpush2.msra.mxu0 0.0
    %410 = vmatprep.subr.mxu0 0.0
    %411 = vmatpush2.msra.mxu0 0.0
    %412 = vmatprep.subr.mxu0 0.0
    %413 = vmatpush2.msra.mxu0 0.0
    %414 = vmatprep.subr.mxu0 0.0
    %415 = vmatpush2.msra.mxu0 0.0
    %416 = vmatprep.subr.mxu0 0.0
    %417 = vmatpush2.msra.mxu0 0.0
    %418 = vmatprep.subr.mxu0 0.0
    %419 = vmatpush2.msra.mxu0 0.0
    %420 = vmatprep.subr.mxu0 0.0
    %421 = vmatpush2.msra.mxu0 0.0
    %422 = vmatprep.subr.mxu0 0.0
    %423 = vmatpush2.msra.mxu0 0.0
    %424 = vmatprep.subr.mxu0 0.0
    %425 = vmatpush2.msra.mxu0 0.0
    %426 = vmatprep.subr.mxu0 0.0
    %427 = vmatpush2.msra.mxu0 0.0
    %428 = vmatprep.subr.mxu0 0.0
    %429 = vmatpush2.msra.mxu0 0.0
    %430 = vmatprep.subr.mxu0 0.0
    %431 = vmatpush2.msra.mxu0 0.0
    %432 = vmatprep.mubr.f32.mxu0 0.0
    %433 = vmatmul.mubr.f32.gmra.mxu0 %v363
    %v434 = vpop.f32.mrf.mxu0
    %v435 = vadd.f32 %v360, %v434
    %v436 = vpop.f32.mrf.mxu0
    %437 = vmatprep.mubr.f32.mxu0 0.0
    %438 = vmatmul.mubr.f32.gmra.mxu0 %v366
    %v439 = vpop.f32.mrf.mxu0
    %v440 = vadd.f32 %v360, %v439
    %v441 = vpop.f32.mrf.mxu0
    %442 = vdwg.mxu0
    %444 = vrot.lane.b32.xlu0 %v435, 96
    %v445 = vpop.permute.xlu0 %444
    %vm446 = vcmask 64512
    %v447 = vsel %vm446, %v435, 0
    %v449 = vsel %vm446, %v445, 0
    %451 = vmatprep.subr.mxu0 0.0
    %452 = vmatpush1.xpose.msra.mxu0 0.0
    %453 = vmatprep.subr.mxu0 0.0
    %454 = vmatpush1.xpose.msra.mxu0 0.0
    %455 = vmatprep.subr.mxu0 0.0
    %456 = vmatpush1.xpose.msra.mxu0 0.0
    %457 = vmatprep.subr.mxu0 0.0
    %458 = vmatpush1.xpose.msra.mxu0 0.0
    %459 = vmatprep.subr.mxu0 0.0
    %460 = vmatpush1.xpose.msra.mxu0 0.0
    %461 = vmatprep.subr.mxu0 0.0
    %462 = vmatpush1.xpose.msra.mxu0 0.0
    %463 = vmatprep.subr.mxu0 0.0
    %464 = vmatpush1.xpose.msra.mxu0 0.0
    %465 = vmatprep.subr.mxu0 0.0
    %466 = vmatpush1.xpose.msra.mxu0 0.0
    %467 = vmatprep.subr.mxu0 0.0
    %468 = vmatpush1.xpose.msra.mxu0 0.0
    %469 = vmatprep.subr.mxu0 0.0
    %470 = vmatpush1.xpose.msra.mxu0 0.0
    %471 = vmatprep.subr.mxu0 0.0
    %472 = vmatpush1.xpose.msra.mxu0 0.0
    %473 = vmatprep.subr.mxu0 0.0
    %474 = vmatpush1.xpose.msra.mxu0 0.0
    %475 = vmatprep.subr.mxu0 0.0
    %476 = vmatpush1.xpose.msra.mxu0 0.0
    %477 = vmatprep.subr.mxu0 0.0
    %478 = vmatpush1.xpose.msra.mxu0 0.0
    %479 = vmatprep.subr.mxu0 0.0
    %480 = vmatpush1.xpose.msra.mxu0 0.0
    %481 = vmatprep.subr.mxu0 0.0
    %482 = vmatpush1.xpose.msra.mxu0 %v449
    %483 = vmatprep.subr.mxu0 0.0
    %484 = vmatpush2.xpose.msra.mxu0 0.0
    %485 = vmatprep.subr.mxu0 0.0
    %486 = vmatpush2.xpose.msra.mxu0 0.0
    %487 = vmatprep.subr.mxu0 0.0
    %488 = vmatpush2.xpose.msra.mxu0 0.0
    %489 = vmatprep.subr.mxu0 0.0
    %490 = vmatpush2.xpose.msra.mxu0 0.0
    %491 = vmatprep.subr.mxu0 0.0
    %492 = vmatpush2.xpose.msra.mxu0 0.0
    %493 = vmatprep.subr.mxu0 0.0
    %494 = vmatpush2.xpose.msra.mxu0 0.0
    %495 = vmatprep.subr.mxu0 0.0
    %496 = vmatpush2.xpose.msra.mxu0 0.0
    %497 = vmatprep.subr.mxu0 0.0
    %498 = vmatpush2.xpose.msra.mxu0 0.0
    %499 = vmatprep.subr.mxu0 0.0
    %500 = vmatpush2.xpose.msra.mxu0 0.0
    %501 = vmatprep.subr.mxu0 0.0
    %502 = vmatpush2.xpose.msra.mxu0 0.0
    %503 = vmatprep.subr.mxu0 0.0
    %504 = vmatpush2.xpose.msra.mxu0 0.0
    %505 = vmatprep.subr.mxu0 0.0
    %506 = vmatpush2.xpose.msra.mxu0 0.0
    %507 = vmatprep.subr.mxu0 0.0
    %508 = vmatpush2.xpose.msra.mxu0 0.0
    %509 = vmatprep.subr.mxu0 0.0
    %510 = vmatpush2.xpose.msra.mxu0 0.0
    %511 = vmatprep.subr.mxu0 0.0
    %512 = vmatpush2.xpose.msra.mxu0 0.0
    %513 = vmatprep.subr.mxu0 0.0
    %514 = vmatpush2.xpose.msra.mxu0 0.0
    %515 = vmatprep.mubr.f32.mxu0 0.0
    %516 = vmatmul.mubr.f32.gmra.mxu0 %v447
    %v517 = vpop.f32.mrf.mxu0
    %v518 = vadd.f32 %v344, %v517
    %v519 = vpop.f32.mrf.mxu0
    %520 = vdwg.mxu0
    %522 = vrot.lane.b32.xlu0 %v440, 96
    %v523 = vpop.permute.xlu0 %522
    %v524 = vsel %vm446, %v440, 0
    %v526 = vsel %vm446, %v523, 0
    %528 = vmatprep.subr.mxu0 0.0
    %529 = vmatpush1.xpose.msra.mxu0 0.0
    %530 = vmatprep.subr.mxu0 0.0
    %531 = vmatpush1.xpose.msra.mxu0 0.0
    %532 = vmatprep.subr.mxu0 0.0
    %533 = vmatpush1.xpose.msra.mxu0 0.0
    %534 = vmatprep.subr.mxu0 0.0
    %535 = vmatpush1.xpose.msra.mxu0 0.0
    %536 = vmatprep.subr.mxu0 0.0
    %537 = vmatpush1.xpose.msra.mxu0 0.0
    %538 = vmatprep.subr.mxu0 0.0
    %539 = vmatpush1.xpose.msra.mxu0 0.0
    %540 = vmatprep.subr.mxu0 0.0
    %541 = vmatpush1.xpose.msra.mxu0 0.0
    %542 = vmatprep.subr.mxu0 0.0
    %543 = vmatpush1.xpose.msra.mxu0 0.0
    %544 = vmatprep.subr.mxu0 0.0
    %545 = vmatpush1.xpose.msra.mxu0 0.0
    %546 = vmatprep.subr.mxu0 0.0
    %547 = vmatpush1.xpose.msra.mxu0 0.0
    %548 = vmatprep.subr.mxu0 0.0
    %549 = vmatpush1.xpose.msra.mxu0 0.0
    %550 = vmatprep.subr.mxu0 0.0
    %551 = vmatpush1.xpose.msra.mxu0 0.0
    %552 = vmatprep.subr.mxu0 0.0
    %553 = vmatpush1.xpose.msra.mxu0 0.0
    %554 = vmatprep.subr.mxu0 0.0
    %555 = vmatpush1.xpose.msra.mxu0 0.0
    %556 = vmatprep.subr.mxu0 0.0
    %557 = vmatpush1.xpose.msra.mxu0 0.0
    %558 = vmatprep.subr.mxu0 0.0
    %559 = vmatpush1.xpose.msra.mxu0 %v526
    %560 = vmatprep.subr.mxu0 0.0
    %561 = vmatpush2.xpose.msra.mxu0 0.0
    %562 = vmatprep.subr.mxu0 0.0
    %563 = vmatpush2.xpose.msra.mxu0 0.0
    %564 = vmatprep.subr.mxu0 0.0
    %565 = vmatpush2.xpose.msra.mxu0 0.0
    %566 = vmatprep.subr.mxu0 0.0
    %567 = vmatpush2.xpose.msra.mxu0 0.0
    %568 = vmatprep.subr.mxu0 0.0
    %569 = vmatpush2.xpose.msra.mxu0 0.0
    %570 = vmatprep.subr.mxu0 0.0
    %571 = vmatpush2.xpose.msra.mxu0 0.0
    %572 = vmatprep.subr.mxu0 0.0
    %573 = vmatpush2.xpose.msra.mxu0 0.0
    %574 = vmatprep.subr.mxu0 0.0
    %575 = vmatpush2.xpose.msra.mxu0 0.0
    %576 = vmatprep.subr.mxu0 0.0
    %577 = vmatpush2.xpose.msra.mxu0 0.0
    %578 = vmatprep.subr.mxu0 0.0
    %579 = vmatpush2.xpose.msra.mxu0 0.0
    %580 = vmatprep.subr.mxu0 0.0
    %581 = vmatpush2.xpose.msra.mxu0 0.0
    %582 = vmatprep.subr.mxu0 0.0
    %583 = vmatpush2.xpose.msra.mxu0 0.0
    %584 = vmatprep.subr.mxu0 0.0
    %585 = vmatpush2.xpose.msra.mxu0 0.0
    %586 = vmatprep.subr.mxu0 0.0
    %587 = vmatpush2.xpose.msra.mxu0 0.0
    %588 = vmatprep.subr.mxu0 0.0
    %589 = vmatpush2.xpose.msra.mxu0 0.0
    %590 = vmatprep.subr.mxu0 0.0
    %591 = vmatpush2.xpose.msra.mxu0 0.0
    %592 = vmatprep.mubr.f32.mxu0 0.0
    %593 = vmatmul.mubr.f32.gmra.mxu0 %v524
    %v594 = vpop.f32.mrf.mxu0
    %v595 = vadd.f32 %v348, %v594
    %v596 = vpop.f32.mrf.mxu0
    %597 = vdwg.mxu0
    %v598 = vsel %vm446, %v518, -inf
    %599 = vmax.xlane.f32.xlu0 %v598
    %v600 = vpop.xlane.xlu0 %599
    %v601 = vsel %vm446, %v595, -inf
    %602 = vmax.xlane.f32.xlu0 %v601
    %v603 = vpop.xlane.xlu0 %602
    %v604 = vsub.f32 %v518, %v600
    %v605 = vsub.f32 %v595, %v603
    %v606 = vmul.f32 %v604, 1.442695
    %v607 = vpow.pop %v606
    %v608 = vmul.f32 %v605, 1.442695
    %v609 = vpow.pop %v608
    %v610 = vsel %vm446, %v607, 0.0
    %611 = vadd.xlane.f32.xlu0 %v610
    %v612 = vpop.xlane.xlu0 %611
    %v613 = vsel %vm446, %v609, 0.0
    %614 = vadd.xlane.f32.xlu0 %v613
    %v615 = vpop.xlane.xlu0 %614
    %v616 = vrcp.pop %v612
    %v617 = vmul.f32 %v607, %v616
    %v618 = vrcp.pop %v615
    %v619 = vmul.f32 %v609, %v618
    %620 = vrot.lane.b32.xlu0 %v435, 64
    %v621 = vpop.permute.xlu0 %620
    %v624 = vsel %vm446, %v617, 0
    %626 = vmatprep.subr.mxu0 0.0
    %627 = vmatpush1.msra.mxu0 0.0
    %628 = vmatprep.subr.mxu0 0.0
    %629 = vmatpush1.msra.mxu0 0.0
    %630 = vmatprep.subr.mxu0 0.0
    %631 = vmatpush1.msra.mxu0 0.0
    %632 = vmatprep.subr.mxu0 0.0
    %633 = vmatpush1.msra.mxu0 0.0
    %634 = vmatprep.subr.mxu0 0.0
    %635 = vmatpush1.msra.mxu0 0.0
    %636 = vmatprep.subr.mxu0 0.0
    %637 = vmatpush1.msra.mxu0 0.0
    %638 = vmatprep.subr.mxu0 0.0
    %639 = vmatpush1.msra.mxu0 0.0
    %640 = vmatprep.subr.mxu0 0.0
    %641 = vmatpush1.msra.mxu0 0.0
    %642 = vmatprep.subr.mxu0 0.0
    %643 = vmatpush1.msra.mxu0 0.0
    %644 = vmatprep.subr.mxu0 0.0
    %645 = vmatpush1.msra.mxu0 0.0
    %646 = vmatprep.subr.mxu0 0.0
    %647 = vmatpush1.msra.mxu0 0.0
    %648 = vmatprep.subr.mxu0 0.0
    %649 = vmatpush1.msra.mxu0 0.0
    %650 = vmatprep.subr.mxu0 0.0
    %651 = vmatpush1.msra.mxu0 0.0
    %652 = vmatprep.subr.mxu0 0.0
    %653 = vmatpush1.msra.mxu0 0.0
    %654 = vmatprep.subr.mxu0 0.0
    %655 = vmatpush1.msra.mxu0 0.0
    %656 = vmatprep.subr.mxu0 0.0
    %657 = vmatpush1.msra.mxu0 %v621
    %658 = vmatprep.subr.mxu0 0.0
    %659 = vmatpush2.msra.mxu0 0.0
    %660 = vmatprep.subr.mxu0 0.0
    %661 = vmatpush2.msra.mxu0 0.0
    %662 = vmatprep.subr.mxu0 0.0
    %663 = vmatpush2.msra.mxu0 0.0
    %664 = vmatprep.subr.mxu0 0.0
    %665 = vmatpush2.msra.mxu0 0.0
    %666 = vmatprep.subr.mxu0 0.0
    %667 = vmatpush2.msra.mxu0 0.0
    %668 = vmatprep.subr.mxu0 0.0
    %669 = vmatpush2.msra.mxu0 0.0
    %670 = vmatprep.subr.mxu0 0.0
    %671 = vmatpush2.msra.mxu0 0.0
    %672 = vmatprep.subr.mxu0 0.0
    %673 = vmatpush2.msra.mxu0 0.0
    %674 = vmatprep.subr.mxu0 0.0
    %675 = vmatpush2.msra.mxu0 0.0
    %676 = vmatprep.subr.mxu0 0.0
    %677 = vmatpush2.msra.mxu0 0.0
    %678 = vmatprep.subr.mxu0 0.0
    %679 = vmatpush2.msra.mxu0 0.0
    %680 = vmatprep.subr.mxu0 0.0
    %681 = vmatpush2.msra.mxu0 0.0
    %682 = vmatprep.subr.mxu0 0.0
    %683 = vmatpush2.msra.mxu0 0.0
    %684 = vmatprep.subr.mxu0 0.0
    %685 = vmatpush2.msra.mxu0 0.0
    %686 = vmatprep.subr.mxu0 0.0
    %687 = vmatpush2.msra.mxu0 0.0
    %688 = vmatprep.subr.mxu0 0.0
    %689 = vmatpush2.msra.mxu0 0.0
    %690 = vmatprep.mubr.f32.mxu0 0.0
    %691 = vmatmul.mubr.f32.gmra.mxu0 %v624
    %v692 = vpop.f32.mrf.mxu0
    %v693 = vadd.f32 0.0, %v692
    %v694 = vpop.f32.mrf.mxu0
    %695 = vdwg.mxu0
    %696 = vrot.lane.b32.xlu0 %v440, 64
    %v697 = vpop.permute.xlu0 %696
    %v700 = vsel %vm446, %v619, 0
    %702 = vmatprep.subr.mxu0 0.0
    %703 = vmatpush1.msra.mxu0 0.0
    %704 = vmatprep.subr.mxu0 0.0
    %705 = vmatpush1.msra.mxu0 0.0
    %706 = vmatprep.subr.mxu0 0.0
    %707 = vmatpush1.msra.mxu0 0.0
    %708 = vmatprep.subr.mxu0 0.0
    %709 = vmatpush1.msra.mxu0 0.0
    %710 = vmatprep.subr.mxu0 0.0
    %711 = vmatpush1.msra.mxu0 0.0
    %712 = vmatprep.subr.mxu0 0.0
    %713 = vmatpush1.msra.mxu0 0.0
    %714 = vmatprep.subr.mxu0 0.0
    %715 = vmatpush1.msra.mxu0 0.0
    %716 = vmatprep.subr.mxu0 0.0
    %717 = vmatpush1.msra.mxu0 0.0
    %718 = vmatprep.subr.mxu0 0.0
    %719 = vmatpush1.msra.mxu0 0.0
    %720 = vmatprep.subr.mxu0 0.0
    %721 = vmatpush1.msra.mxu0 0.0
    %722 = vmatprep.subr.mxu0 0.0
    %723 = vmatpush1.msra.mxu0 0.0
    %724 = vmatprep.subr.mxu0 0.0
    %725 = vmatpush1.msra.mxu0 0.0
    %726 = vmatprep.subr.mxu0 0.0
    %727 = vmatpush1.msra.mxu0 0.0
    %728 = vmatprep.subr.mxu0 0.0
    %729 = vmatpush1.msra.mxu0 0.0
    %730 = vmatprep.subr.mxu0 0.0
    %731 = vmatpush1.msra.mxu0 0.0
    %732 = vmatprep.subr.mxu0 0.0
    %733 = vmatpush1.msra.mxu0 %v697
    %734 = vmatprep.subr.mxu0 0.0
    %735 = vmatpush2.msra.mxu0 0.0
    %736 = vmatprep.subr.mxu0 0.0
    %737 = vmatpush2.msra.mxu0 0.0
    %738 = vmatprep.subr.mxu0 0.0
    %739 = vmatpush2.msra.mxu0 0.0
    %740 = vmatprep.subr.mxu0 0.0
    %741 = vmatpush2.msra.mxu0 0.0
    %742 = vmatprep.subr.mxu0 0.0
    %743 = vmatpush2.msra.mxu0 0.0
    %744 = vmatprep.subr.mxu0 0.0
    %745 = vmatpush2.msra.mxu0 0.0
    %746 = vmatprep.subr.mxu0 0.0
    %747 = vmatpush2.msra.mxu0 0.0
    %748 = vmatprep.subr.mxu0 0.0
    %749 = vmatpush2.msra.mxu0 0.0
    %750 = vmatprep.subr.mxu0 0.0
    %751 = vmatpush2.msra.mxu0 0.0
    %752 = vmatprep.subr.mxu0 0.0
    %753 = vmatpush2.msra.mxu0 0.0
    %754 = vmatprep.subr.mxu0 0.0
    %755 = vmatpush2.msra.mxu0 0.0
    %756 = vmatprep.subr.mxu0 0.0
    %757 = vmatpush2.msra.mxu0 0.0
    %758 = vmatprep.subr.mxu0 0.0
    %759 = vmatpush2.msra.mxu0 0.0
    %760 = vmatprep.subr.mxu0 0.0
    %761 = vmatpush2.msra.mxu0 0.0
    %762 = vmatprep.subr.mxu0 0.0
    %763 = vmatpush2.msra.mxu0 0.0
    %764 = vmatprep.subr.mxu0 0.0
    %765 = vmatpush2.msra.mxu0 0.0
    %766 = vmatprep.mubr.f32.mxu0 0.0
    %767 = vmatmul.mubr.f32.gmra.mxu0 %v700
    %v768 = vpop.f32.mrf.mxu0
    %v769 = vadd.f32 0.0, %v768
    %v770 = vpop.f32.mrf.mxu0
    %771 = vdwg.mxu0
    %772 = vrot.lane.b32.xlu0 %v435, 120
    %v773 = vpop.permute.xlu0 %772
    %774 = vrot.lane.b32.xlu0 %v435, 88
    %v775 = vpop.permute.xlu0 %774
    %v776 = vsel %vm446, %v773, 0
    %v778 = vsel %vm446, %v775, 0
    %780 = vmatprep.subr.mxu0 0.0
    %781 = vmatpush1.xpose.msra.mxu0 0.0
    %782 = vmatprep.subr.mxu0 0.0
    %783 = vmatpush1.xpose.msra.mxu0 0.0
    %784 = vmatprep.subr.mxu0 0.0
    %785 = vmatpush1.xpose.msra.mxu0 0.0
    %786 = vmatprep.subr.mxu0 0.0
    %787 = vmatpush1.xpose.msra.mxu0 0.0
    %788 = vmatprep.subr.mxu0 0.0
    %789 = vmatpush1.xpose.msra.mxu0 0.0
    %790 = vmatprep.subr.mxu0 0.0
    %791 = vmatpush1.xpose.msra.mxu0 0.0
    %792 = vmatprep.subr.mxu0 0.0
    %793 = vmatpush1.xpose.msra.mxu0 0.0
    %794 = vmatprep.subr.mxu0 0.0
    %795 = vmatpush1.xpose.msra.mxu0 0.0
    %796 = vmatprep.subr.mxu0 0.0
    %797 = vmatpush1.xpose.msra.mxu0 0.0
    %798 = vmatprep.subr.mxu0 0.0
    %799 = vmatpush1.xpose.msra.mxu0 0.0
    %800 = vmatprep.subr.mxu0 0.0
    %801 = vmatpush1.xpose.msra.mxu0 0.0
    %802 = vmatprep.subr.mxu0 0.0
    %803 = vmatpush1.xpose.msra.mxu0 0.0
    %804 = vmatprep.subr.mxu0 0.0
    %805 = vmatpush1.xpose.msra.mxu0 0.0
    %806 = vmatprep.subr.mxu0 0.0
    %807 = vmatpush1.xpose.msra.mxu0 0.0
    %808 = vmatprep.subr.mxu0 0.0
    %809 = vmatpush1.xpose.msra.mxu0 0.0
    %810 = vmatprep.subr.mxu0 0.0
    %811 = vmatpush1.xpose.msra.mxu0 %v778
    %812 = vmatprep.subr.mxu0 0.0
    %813 = vmatpush2.xpose.msra.mxu0 0.0
    %814 = vmatprep.subr.mxu0 0.0
    %815 = vmatpush2.xpose.msra.mxu0 0.0
    %816 = vmatprep.subr.mxu0 0.0
    %817 = vmatpush2.xpose.msra.mxu0 0.0
    %818 = vmatprep.subr.mxu0 0.0
    %819 = vmatpush2.xpose.msra.mxu0 0.0
    %820 = vmatprep.subr.mxu0 0.0
    %821 = vmatpush2.xpose.msra.mxu0 0.0
    %822 = vmatprep.subr.mxu0 0.0
    %823 = vmatpush2.xpose.msra.mxu0 0.0
    %824 = vmatprep.subr.mxu0 0.0
    %825 = vmatpush2.xpose.msra.mxu0 0.0
    %826 = vmatprep.subr.mxu0 0.0
    %827 = vmatpush2.xpose.msra.mxu0 0.0
    %828 = vmatprep.subr.mxu0 0.0
    %829 = vmatpush2.xpose.msra.mxu0 0.0
    %830 = vmatprep.subr.mxu0 0.0
    %831 = vmatpush2.xpose.msra.mxu0 0.0
    %832 = vmatprep.subr.mxu0 0.0
    %833 = vmatpush2.xpose.msra.mxu0 0.0
    %834 = vmatprep.subr.mxu0 0.0
    %835 = vmatpush2.xpose.msra.mxu0 0.0
    %836 = vmatprep.subr.mxu0 0.0
    %837 = vmatpush2.xpose.msra.mxu0 0.0
    %838 = vmatprep.subr.mxu0 0.0
    %839 = vmatpush2.xpose.msra.mxu0 0.0
    %840 = vmatprep.subr.mxu0 0.0
    %841 = vmatpush2.xpose.msra.mxu0 0.0
    %842 = vmatprep.subr.mxu0 0.0
    %843 = vmatpush2.xpose.msra.mxu0 0.0
    %844 = vmatprep.mubr.f32.mxu0 0.0
    %845 = vmatmul.mubr.f32.gmra.mxu0 %v776
    %v846 = vpop.f32.mrf.mxu0
    %v847 = vadd.f32 %v344, %v846
    %v848 = vpop.f32.mrf.mxu0
    %849 = vdwg.mxu0
    %850 = vrot.lane.b32.xlu0 %v440, 120
    %v851 = vpop.permute.xlu0 %850
    %852 = vrot.lane.b32.xlu0 %v440, 88
    %v853 = vpop.permute.xlu0 %852
    %v854 = vsel %vm446, %v851, 0
    %v856 = vsel %vm446, %v853, 0
    %858 = vmatprep.subr.mxu0 0.0
    %859 = vmatpush1.xpose.msra.mxu0 0.0
    %860 = vmatprep.subr.mxu0 0.0
    %861 = vmatpush1.xpose.msra.mxu0 0.0
    %862 = vmatprep.subr.mxu0 0.0
    %863 = vmatpush1.xpose.msra.mxu0 0.0
    %864 = vmatprep.subr.mxu0 0.0
    %865 = vmatpush1.xpose.msra.mxu0 0.0
    %866 = vmatprep.subr.mxu0 0.0
    %867 = vmatpush1.xpose.msra.mxu0 0.0
    %868 = vmatprep.subr.mxu0 0.0
    %869 = vmatpush1.xpose.msra.mxu0 0.0
    %870 = vmatprep.subr.mxu0 0.0
    %871 = vmatpush1.xpose.msra.mxu0 0.0
    %872 = vmatprep.subr.mxu0 0.0
    %873 = vmatpush1.xpose.msra.mxu0 0.0
    %874 = vmatprep.subr.mxu0 0.0
    %875 = vmatpush1.xpose.msra.mxu0 0.0
    %876 = vmatprep.subr.mxu0 0.0
    %877 = vmatpush1.xpose.msra.mxu0 0.0
    %878 = vmatprep.subr.mxu0 0.0
    %879 = vmatpush1.xpose.msra.mxu0 0.0
    %880 = vmatprep.subr.mxu0 0.0
    %881 = vmatpush1.xpose.msra.mxu0 0.0
    %882 = vmatprep.subr.mxu0 0.0
    %883 = vmatpush1.xpose.msra.mxu0 0.0
    %884 = vmatprep.subr.mxu0 0.0
    %885 = vmatpush1.xpose.msra.mxu0 0.0
    %886 = vmatprep.subr.mxu0 0.0
    %887 = vmatpush1.xpose.msra.mxu0 0.0
    %888 = vmatprep.subr.mxu0 0.0
    %889 = vmatpush1.xpose.msra.mxu0 %v856
    %890 = vmatprep.subr.mxu0 0.0
    %891 = vmatpush2.xpose.msra.mxu0 0.0
    %892 = vmatprep.subr.mxu0 0.0
    %893 = vmatpush2.xpose.msra.mxu0 0.0
    %894 = vmatprep.subr.mxu0 0.0
    %895 = vmatpush2.xpose.msra.mxu0 0.0
    %896 = vmatprep.subr.mxu0 0.0
    %897 = vmatpush2.xpose.msra.mxu0 0.0
    %898 = vmatprep.subr.mxu0 0.0
    %899 = vmatpush2.xpose.msra.mxu0 0.0
    %900 = vmatprep.subr.mxu0 0.0
    %901 = vmatpush2.xpose.msra.mxu0 0.0
    %902 = vmatprep.subr.mxu0 0.0
    %903 = vmatpush2.xpose.msra.mxu0 0.0
    %904 = vmatprep.subr.mxu0 0.0
    %905 = vmatpush2.xpose.msra.mxu0 0.0
    %906 = vmatprep.subr.mxu0 0.0
    %907 = vmatpush2.xpose.msra.mxu0 0.0
    %908 = vmatprep.subr.mxu0 0.0
    %909 = vmatpush2.xpose.msra.mxu0 0.0
    %910 = vmatprep.subr.mxu0 0.0
    %911 = vmatpush2.xpose.msra.mxu0 0.0
    %912 = vmatprep.subr.mxu0 0.0
    %913 = vmatpush2.xpose.msra.mxu0 0.0
    %914 = vmatprep.subr.mxu0 0.0
    %915 = vmatpush2.xpose.msra.mxu0 0.0
    %916 = vmatprep.subr.mxu0 0.0
    %917 = vmatpush2.xpose.msra.mxu0 0.0
    %918 = vmatprep.subr.mxu0 0.0
    %919 = vmatpush2.xpose.msra.mxu0 0.0
    %920 = vmatprep.subr.mxu0 0.0
    %921 = vmatpush2.xpose.msra.mxu0 0.0
    %922 = vmatprep.mubr.f32.mxu0 0.0
    %923 = vmatmul.mubr.f32.gmra.mxu0 %v854
    %v924 = vpop.f32.mrf.mxu0
    %v925 = vadd.f32 %v348, %v924
    %v926 = vpop.f32.mrf.mxu0
    %927 = vdwg.mxu0
    %v928 = vsel %vm446, %v847, -inf
    %929 = vmax.xlane.f32.xlu0 %v928
    %v930 = vpop.xlane.xlu0 %929
    %v931 = vsel %vm446, %v925, -inf
    %932 = vmax.xlane.f32.xlu0 %v931
    %v933 = vpop.xlane.xlu0 %932
    %v934 = vsub.f32 %v847, %v930
    %v935 = vsub.f32 %v925, %v933
    %v936 = vmul.f32 %v934, 1.442695
    %v937 = vpow.pop %v936
    %v938 = vmul.f32 %v935, 1.442695
    %v939 = vpow.pop %v938
    %v940 = vsel %vm446, %v937, 0.0
    %941 = vadd.xlane.f32.xlu0 %v940
    %v942 = vpop.xlane.xlu0 %941
    %v943 = vsel %vm446, %v939, 0.0
    %944 = vadd.xlane.f32.xlu0 %v943
    %v945 = vpop.xlane.xlu0 %944
    %v946 = vrcp.pop %v942
    %v947 = vmul.f32 %v937, %v946
    %v948 = vrcp.pop %v945
    %v949 = vmul.f32 %v939, %v948
    %950 = vrot.lane.b32.xlu0 %v435, 56
    %v951 = vpop.permute.xlu0 %950
    %v954 = vsel %vm446, %v947, 0
    %956 = vmatprep.subr.mxu0 0.0
    %957 = vmatpush1.msra.mxu0 0.0
    %958 = vmatprep.subr.mxu0 0.0
    %959 = vmatpush1.msra.mxu0 0.0
    %960 = vmatprep.subr.mxu0 0.0
    %961 = vmatpush1.msra.mxu0 0.0
    %962 = vmatprep.subr.mxu0 0.0
    %963 = vmatpush1.msra.mxu0 0.0
    %964 = vmatprep.subr.mxu0 0.0
    %965 = vmatpush1.msra.mxu0 0.0
    %966 = vmatprep.subr.mxu0 0.0
    %967 = vmatpush1.msra.mxu0 0.0
    %968 = vmatprep.subr.mxu0 0.0
    %969 = vmatpush1.msra.mxu0 0.0
    %970 = vmatprep.subr.mxu0 0.0
    %971 = vmatpush1.msra.mxu0 0.0
    %972 = vmatprep.subr.mxu0 0.0
    %973 = vmatpush1.msra.mxu0 0.0
    %974 = vmatprep.subr.mxu0 0.0
    %975 = vmatpush1.msra.mxu0 0.0
    %976 = vmatprep.subr.mxu0 0.0
    %977 = vmatpush1.msra.mxu0 0.0
    %978 = vmatprep.subr.mxu0 0.0
    %979 = vmatpush1.msra.mxu0 0.0
    %980 = vmatprep.subr.mxu0 0.0
    %981 = vmatpush1.msra.mxu0 0.0
    %982 = vmatprep.subr.mxu0 0.0
    %983 = vmatpush1.msra.mxu0 0.0
    %984 = vmatprep.subr.mxu0 0.0
    %985 = vmatpush1.msra.mxu0 0.0
    %986 = vmatprep.subr.mxu0 0.0
    %987 = vmatpush1.msra.mxu0 %v951
    %988 = vmatprep.subr.mxu0 0.0
    %989 = vmatpush2.msra.mxu0 0.0
    %990 = vmatprep.subr.mxu0 0.0
    %991 = vmatpush2.msra.mxu0 0.0
    %992 = vmatprep.subr.mxu0 0.0
    %993 = vmatpush2.msra.mxu0 0.0
    %994 = vmatprep.subr.mxu0 0.0
    %995 = vmatpush2.msra.mxu0 0.0
    %996 = vmatprep.subr.mxu0 0.0
    %997 = vmatpush2.msra.mxu0 0.0
    %998 = vmatprep.subr.mxu0 0.0
    %999 = vmatpush2.msra.mxu0 0.0
    %1000 = vmatprep.subr.mxu0 0.0
    %1001 = vmatpush2.msra.mxu0 0.0
    %1002 = vmatprep.subr.mxu0 0.0
    %1003 = vmatpush2.msra.mxu0 0.0
    %1004 = vmatprep.subr.mxu0 0.0
    %1005 = vmatpush2.msra.mxu0 0.0
    %1006 = vmatprep.subr.mxu0 0.0
    %1007 = vmatpush2.msra.mxu0 0.0
    %1008 = vmatprep.subr.mxu0 0.0
    %1009 = vmatpush2.msra.mxu0 0.0
    %1010 = vmatprep.subr.mxu0 0.0
    %1011 = vmatpush2.msra.mxu0 0.0
    %1012 = vmatprep.subr.mxu0 0.0
    %1013 = vmatpush2.msra.mxu0 0.0
    %1014 = vmatprep.subr.mxu0 0.0
    %1015 = vmatpush2.msra.mxu0 0.0
    %1016 = vmatprep.subr.mxu0 0.0
    %1017 = vmatpush2.msra.mxu0 0.0
    %1018 = vmatprep.subr.mxu0 0.0
    %1019 = vmatpush2.msra.mxu0 0.0
    %1020 = vmatprep.mubr.f32.mxu0 0.0
    %1021 = vmatmul.mubr.f32.gmra.mxu0 %v954
    %v1022 = vpop.f32.mrf.mxu0
    %v1023 = vadd.f32 0.0, %v1022
    %v1024 = vpop.f32.mrf.mxu0
    %1025 = vdwg.mxu0
    %1026 = vrot.lane.b32.xlu0 %v440, 56
    %v1027 = vpop.permute.xlu0 %1026
    %v1030 = vsel %vm446, %v949, 0
    %1032 = vmatprep.subr.mxu0 0.0
    %1033 = vmatpush1.msra.mxu0 0.0
    %1034 = vmatprep.subr.mxu0 0.0
    %1035 = vmatpush1.msra.mxu0 0.0
    %1036 = vmatprep.subr.mxu0 0.0
    %1037 = vmatpush1.msra.mxu0 0.0
    %1038 = vmatprep.subr.mxu0 0.0
    %1039 = vmatpush1.msra.mxu0 0.0
    %1040 = vmatprep.subr.mxu0 0.0
    %1041 = vmatpush1.msra.mxu0 0.0
    %1042 = vmatprep.subr.mxu0 0.0
    %1043 = vmatpush1.msra.mxu0 0.0
    %1044 = vmatprep.subr.mxu0 0.0
    %1045 = vmatpush1.msra.mxu0 0.0
    %1046 = vmatprep.subr.mxu0 0.0
    %1047 = vmatpush1.msra.mxu0 0.0
    %1048 = vmatprep.subr.mxu0 0.0
    %1049 = vmatpush1.msra.mxu0 0.0
    %1050 = vmatprep.subr.mxu0 0.0
    %1051 = vmatpush1.msra.mxu0 0.0
    %1052 = vmatprep.subr.mxu0 0.0
    %1053 = vmatpush1.msra.mxu0 0.0
    %1054 = vmatprep.subr.mxu0 0.0
    %1055 = vmatpush1.msra.mxu0 0.0
    %1056 = vmatprep.subr.mxu0 0.0
    %1057 = vmatpush1.msra.mxu0 0.0
    %1058 = vmatprep.subr.mxu0 0.0
    %1059 = vmatpush1.msra.mxu0 0.0
    %1060 = vmatprep.subr.mxu0 0.0
    %1061 = vmatpush1.msra.mxu0 0.0
    %1062 = vmatprep.subr.mxu0 0.0
    %1063 = vmatpush1.msra.mxu0 %v1027
    %1064 = vmatprep.subr.mxu0 0.0
    %1065 = vmatpush2.msra.mxu0 0.0
    %1066 = vmatprep.subr.mxu0 0.0
    %1067 = vmatpush2.msra.mxu0 0.0
    %1068 = vmatprep.subr.mxu0 0.0
    %1069 = vmatpush2.msra.mxu0 0.0
    %1070 = vmatprep.subr.mxu0 0.0
    %1071 = vmatpush2.msra.mxu0 0.0
    %1072 = vmatprep.subr.mxu0 0.0
    %1073 = vmatpush2.msra.mxu0 0.0
    %1074 = vmatprep.subr.mxu0 0.0
    %1075 = vmatpush2.msra.mxu0 0.0
    %1076 = vmatprep.subr.mxu0 0.0
    %1077 = vmatpush2.msra.mxu0 0.0
    %1078 = vmatprep.subr.mxu0 0.0
    %1079 = vmatpush2.msra.mxu0 0.0
    %1080 = vmatprep.subr.mxu0 0.0
    %1081 = vmatpush2.msra.mxu0 0.0
    %1082 = vmatprep.subr.mxu0 0.0
    %1083 = vmatpush2.msra.mxu0 0.0
    %1084 = vmatprep.subr.mxu0 0.0
    %1085 = vmatpush2.msra.mxu0 0.0
    %1086 = vmatprep.subr.mxu0 0.0
    %1087 = vmatpush2.msra.mxu0 0.0
    %1088 = vmatprep.subr.mxu0 0.0
    %1089 = vmatpush2.msra.mxu0 0.0
    %1090 = vmatprep.subr.mxu0 0.0
    %1091 = vmatpush2.msra.mxu0 0.0
    %1092 = vmatprep.subr.mxu0 0.0
    %1093 = vmatpush2.msra.mxu0 0.0
    %1094 = vmatprep.subr.mxu0 0.0
    %1095 = vmatpush2.msra.mxu0 0.0
    %1096 = vmatprep.mubr.f32.mxu0 0.0
    %1097 = vmatmul.mubr.f32.gmra.mxu0 %v1030
    %v1098 = vpop.f32.mrf.mxu0
    %v1099 = vadd.f32 0.0, %v1098
    %v1100 = vpop.f32.mrf.mxu0
    %1101 = vdwg.mxu0
    %1102 = vrot.lane.b32.xlu0 %v435, 112
    %v1103 = vpop.permute.xlu0 %1102
    %1104 = vrot.lane.b32.xlu0 %v435, 80
    %v1105 = vpop.permute.xlu0 %1104
    %v1106 = vsel %vm446, %v1103, 0
    %v1108 = vsel %vm446, %v1105, 0
    %1110 = vmatprep.subr.mxu0 0.0
    %1111 = vmatpush1.xpose.msra.mxu0 0.0
    %1112 = vmatprep.subr.mxu0 0.0
    %1113 = vmatpush1.xpose.msra.mxu0 0.0
    %1114 = vmatprep.subr.mxu0 0.0
    %1115 = vmatpush1.xpose.msra.mxu0 0.0
    %1116 = vmatprep.subr.mxu0 0.0
    %1117 = vmatpush1.xpose.msra.mxu0 0.0
    %1118 = vmatprep.subr.mxu0 0.0
    %1119 = vmatpush1.xpose.msra.mxu0 0.0
    %1120 = vmatprep.subr.mxu0 0.0
    %1121 = vmatpush1.xpose.msra.mxu0 0.0
    %1122 = vmatprep.subr.mxu0 0.0
    %1123 = vmatpush1.xpose.msra.mxu0 0.0
    %1124 = vmatprep.subr.mxu0 0.0
    %1125 = vmatpush1.xpose.msra.mxu0 0.0
    %1126 = vmatprep.subr.mxu0 0.0
    %1127 = vmatpush1.xpose.msra.mxu0 0.0
    %1128 = vmatprep.subr.mxu0 0.0
    %1129 = vmatpush1.xpose.msra.mxu0 0.0
    %1130 = vmatprep.subr.mxu0 0.0
    %1131 = vmatpush1.xpose.msra.mxu0 0.0
    %1132 = vmatprep.subr.mxu0 0.0
    %1133 = vmatpush1.xpose.msra.mxu0 0.0
    %1134 = vmatprep.subr.mxu0 0.0
    %1135 = vmatpush1.xpose.msra.mxu0 0.0
    %1136 = vmatprep.subr.mxu0 0.0
    %1137 = vmatpush1.xpose.msra.mxu0 0.0
    %1138 = vmatprep.subr.mxu0 0.0
    %1139 = vmatpush1.xpose.msra.mxu0 0.0
    %1140 = vmatprep.subr.mxu0 0.0
    %1141 = vmatpush1.xpose.msra.mxu0 %v1108
    %1142 = vmatprep.subr.mxu0 0.0
    %1143 = vmatpush2.xpose.msra.mxu0 0.0
    %1144 = vmatprep.subr.mxu0 0.0
    %1145 = vmatpush2.xpose.msra.mxu0 0.0
    %1146 = vmatprep.subr.mxu0 0.0
    %1147 = vmatpush2.xpose.msra.mxu0 0.0
    %1148 = vmatprep.subr.mxu0 0.0
    %1149 = vmatpush2.xpose.msra.mxu0 0.0
    %1150 = vmatprep.subr.mxu0 0.0
    %1151 = vmatpush2.xpose.msra.mxu0 0.0
    %1152 = vmatprep.subr.mxu0 0.0
    %1153 = vmatpush2.xpose.msra.mxu0 0.0
    %1154 = vmatprep.subr.mxu0 0.0
    %1155 = vmatpush2.xpose.msra.mxu0 0.0
    %1156 = vmatprep.subr.mxu0 0.0
    %1157 = vmatpush2.xpose.msra.mxu0 0.0
    %1158 = vmatprep.subr.mxu0 0.0
    %1159 = vmatpush2.xpose.msra.mxu0 0.0
    %1160 = vmatprep.subr.mxu0 0.0
    %1161 = vmatpush2.xpose.msra.mxu0 0.0
    %1162 = vmatprep.subr.mxu0 0.0
    %1163 = vmatpush2.xpose.msra.mxu0 0.0
    %1164 = vmatprep.subr.mxu0 0.0
    %1165 = vmatpush2.xpose.msra.mxu0 0.0
    %1166 = vmatprep.subr.mxu0 0.0
    %1167 = vmatpush2.xpose.msra.mxu0 0.0
    %1168 = vmatprep.subr.mxu0 0.0
    %1169 = vmatpush2.xpose.msra.mxu0 0.0
    %1170 = vmatprep.subr.mxu0 0.0
    %1171 = vmatpush2.xpose.msra.mxu0 0.0
    %1172 = vmatprep.subr.mxu0 0.0
    %1173 = vmatpush2.xpose.msra.mxu0 0.0
    %1174 = vmatprep.mubr.f32.mxu0 0.0
    %1175 = vmatmul.mubr.f32.gmra.mxu0 %v1106
    %v1176 = vpop.f32.mrf.mxu0
    %v1177 = vadd.f32 %v344, %v1176
    %v1178 = vpop.f32.mrf.mxu0
    %1179 = vdwg.mxu0
    %1180 = vrot.lane.b32.xlu0 %v440, 112
    %v1181 = vpop.permute.xlu0 %1180
    %1182 = vrot.lane.b32.xlu0 %v440, 80
    %v1183 = vpop.permute.xlu0 %1182
    %v1184 = vsel %vm446, %v1181, 0
    %v1186 = vsel %vm446, %v1183, 0
    %1188 = vmatprep.subr.mxu0 0.0
    %1189 = vmatpush1.xpose.msra.mxu0 0.0
    %1190 = vmatprep.subr.mxu0 0.0
    %1191 = vmatpush1.xpose.msra.mxu0 0.0
    %1192 = vmatprep.subr.mxu0 0.0
    %1193 = vmatpush1.xpose.msra.mxu0 0.0
    %1194 = vmatprep.subr.mxu0 0.0
    %1195 = vmatpush1.xpose.msra.mxu0 0.0
    %1196 = vmatprep.subr.mxu0 0.0
    %1197 = vmatpush1.xpose.msra.mxu0 0.0
    %1198 = vmatprep.subr.mxu0 0.0
    %1199 = vmatpush1.xpose.msra.mxu0 0.0
    %1200 = vmatprep.subr.mxu0 0.0
    %1201 = vmatpush1.xpose.msra.mxu0 0.0
    %1202 = vmatprep.subr.mxu0 0.0
    %1203 = vmatpush1.xpose.msra.mxu0 0.0
    %1204 = vmatprep.subr.mxu0 0.0
    %1205 = vmatpush1.xpose.msra.mxu0 0.0
    %1206 = vmatprep.subr.mxu0 0.0
    %1207 = vmatpush1.xpose.msra.mxu0 0.0
    %1208 = vmatprep.subr.mxu0 0.0
    %1209 = vmatpush1.xpose.msra.mxu0 0.0
    %1210 = vmatprep.subr.mxu0 0.0
    %1211 = vmatpush1.xpose.msra.mxu0 0.0
    %1212 = vmatprep.subr.mxu0 0.0
    %1213 = vmatpush1.xpose.msra.mxu0 0.0
    %1214 = vmatprep.subr.mxu0 0.0
    %1215 = vmatpush1.xpose.msra.mxu0 0.0
    %1216 = vmatprep.subr.mxu0 0.0
    %1217 = vmatpush1.xpose.msra.mxu0 0.0
    %1218 = vmatprep.subr.mxu0 0.0
    %1219 = vmatpush1.xpose.msra.mxu0 %v1186
    %1220 = vmatprep.subr.mxu0 0.0
    %1221 = vmatpush2.xpose.msra.mxu0 0.0
    %1222 = vmatprep.subr.mxu0 0.0
    %1223 = vmatpush2.xpose.msra.mxu0 0.0
    %1224 = vmatprep.subr.mxu0 0.0
    %1225 = vmatpush2.xpose.msra.mxu0 0.0
    %1226 = vmatprep.subr.mxu0 0.0
    %1227 = vmatpush2.xpose.msra.mxu0 0.0
    %1228 = vmatprep.subr.mxu0 0.0
    %1229 = vmatpush2.xpose.msra.mxu0 0.0
    %1230 = vmatprep.subr.mxu0 0.0
    %1231 = vmatpush2.xpose.msra.mxu0 0.0
    %1232 = vmatprep.subr.mxu0 0.0
    %1233 = vmatpush2.xpose.msra.mxu0 0.0
    %1234 = vmatprep.subr.mxu0 0.0
    %1235 = vmatpush2.xpose.msra.mxu0 0.0
    %1236 = vmatprep.subr.mxu0 0.0
    %1237 = vmatpush2.xpose.msra.mxu0 0.0
    %1238 = vmatprep.subr.mxu0 0.0
    %1239 = vmatpush2.xpose.msra.mxu0 0.0
    %1240 = vmatprep.subr.mxu0 0.0
    %1241 = vmatpush2.xpose.msra.mxu0 0.0
    %1242 = vmatprep.subr.mxu0 0.0
    %1243 = vmatpush2.xpose.msra.mxu0 0.0
    %1244 = vmatprep.subr.mxu0 0.0
    %1245 = vmatpush2.xpose.msra.mxu0 0.0
    %1246 = vmatprep.subr.mxu0 0.0
    %1247 = vmatpush2.xpose.msra.mxu0 0.0
    %1248 = vmatprep.subr.mxu0 0.0
    %1249 = vmatpush2.xpose.msra.mxu0 0.0
    %1250 = vmatprep.subr.mxu0 0.0
    %1251 = vmatpush2.xpose.msra.mxu0 0.0
    %1252 = vmatprep.mubr.f32.mxu0 0.0
    %1253 = vmatmul.mubr.f32.gmra.mxu0 %v1184
    %v1254 = vpop.f32.mrf.mxu0
    %v1255 = vadd.f32 %v348, %v1254
    %v1256 = vpop.f32.mrf.mxu0
    %1257 = vdwg.mxu0
    %v1258 = vsel %vm446, %v1177, -inf
    %1259 = vmax.xlane.f32.xlu0 %v1258
    %v1260 = vpop.xlane.xlu0 %1259
    %v1261 = vsel %vm446, %v1255, -inf
    %1262 = vmax.xlane.f32.xlu0 %v1261
    %v1263 = vpop.xlane.xlu0 %1262
    %v1264 = vsub.f32 %v1177, %v1260
    %v1265 = vsub.f32 %v1255, %v1263
    %v1266 = vmul.f32 %v1264, 1.442695
    %v1267 = vpow.pop %v1266
    %v1268 = vmul.f32 %v1265, 1.442695
    %v1269 = vpow.pop %v1268
    %v1270 = vsel %vm446, %v1267, 0.0
    %1271 = vadd.xlane.f32.xlu0 %v1270
    %v1272 = vpop.xlane.xlu0 %1271
    %v1273 = vsel %vm446, %v1269, 0.0
    %1274 = vadd.xlane.f32.xlu0 %v1273
    %v1275 = vpop.xlane.xlu0 %1274
    %v1276 = vrcp.pop %v1272
    %v1277 = vmul.f32 %v1267, %v1276
    %v1278 = vrcp.pop %v1275
    %v1279 = vmul.f32 %v1269, %v1278
    %1280 = vrot.lane.b32.xlu0 %v435, 48
    %v1281 = vpop.permute.xlu0 %1280
    %v1284 = vsel %vm446, %v1277, 0
    %1286 = vmatprep.subr.mxu0 0.0
    %1287 = vmatpush1.msra.mxu0 0.0
    %1288 = vmatprep.subr.mxu0 0.0
    %1289 = vmatpush1.msra.mxu0 0.0
    %1290 = vmatprep.subr.mxu0 0.0
    %1291 = vmatpush1.msra.mxu0 0.0
    %1292 = vmatprep.subr.mxu0 0.0
    %1293 = vmatpush1.msra.mxu0 0.0
    %1294 = vmatprep.subr.mxu0 0.0
    %1295 = vmatpush1.msra.mxu0 0.0
    %1296 = vmatprep.subr.mxu0 0.0
    %1297 = vmatpush1.msra.mxu0 0.0
    %1298 = vmatprep.subr.mxu0 0.0
    %1299 = vmatpush1.msra.mxu0 0.0
    %1300 = vmatprep.subr.mxu0 0.0
    %1301 = vmatpush1.msra.mxu0 0.0
    %1302 = vmatprep.subr.mxu0 0.0
    %1303 = vmatpush1.msra.mxu0 0.0
    %1304 = vmatprep.subr.mxu0 0.0
    %1305 = vmatpush1.msra.mxu0 0.0
    %1306 = vmatprep.subr.mxu0 0.0
    %1307 = vmatpush1.msra.mxu0 0.0
    %1308 = vmatprep.subr.mxu0 0.0
    %1309 = vmatpush1.msra.mxu0 0.0
    %1310 = vmatprep.subr.mxu0 0.0
    %1311 = vmatpush1.msra.mxu0 0.0
    %1312 = vmatprep.subr.mxu0 0.0
    %1313 = vmatpush1.msra.mxu0 0.0
    %1314 = vmatprep.subr.mxu0 0.0
    %1315 = vmatpush1.msra.mxu0 0.0
    %1316 = vmatprep.subr.mxu0 0.0
    %1317 = vmatpush1.msra.mxu0 %v1281
    %1318 = vmatprep.subr.mxu0 0.0
    %1319 = vmatpush2.msra.mxu0 0.0
    %1320 = vmatprep.subr.mxu0 0.0
    %1321 = vmatpush2.msra.mxu0 0.0
    %1322 = vmatprep.subr.mxu0 0.0
    %1323 = vmatpush2.msra.mxu0 0.0
    %1324 = vmatprep.subr.mxu0 0.0
    %1325 = vmatpush2.msra.mxu0 0.0
    %1326 = vmatprep.subr.mxu0 0.0
    %1327 = vmatpush2.msra.mxu0 0.0
    %1328 = vmatprep.subr.mxu0 0.0
    %1329 = vmatpush2.msra.mxu0 0.0
    %1330 = vmatprep.subr.mxu0 0.0
    %1331 = vmatpush2.msra.mxu0 0.0
    %1332 = vmatprep.subr.mxu0 0.0
    %1333 = vmatpush2.msra.mxu0 0.0
    %1334 = vmatprep.subr.mxu0 0.0
    %1335 = vmatpush2.msra.mxu0 0.0
    %1336 = vmatprep.subr.mxu0 0.0
    %1337 = vmatpush2.msra.mxu0 0.0
    %1338 = vmatprep.subr.mxu0 0.0
    %1339 = vmatpush2.msra.mxu0 0.0
    %1340 = vmatprep.subr.mxu0 0.0
    %1341 = vmatpush2.msra.mxu0 0.0
    %1342 = vmatprep.subr.mxu0 0.0
    %1343 = vmatpush2.msra.mxu0 0.0
    %1344 = vmatprep.subr.mxu0 0.0
    %1345 = vmatpush2.msra.mxu0 0.0
    %1346 = vmatprep.subr.mxu0 0.0
    %1347 = vmatpush2.msra.mxu0 0.0
    %1348 = vmatprep.subr.mxu0 0.0
    %1349 = vmatpush2.msra.mxu0 0.0
    %1350 = vmatprep.mubr.f32.mxu0 0.0
    %1351 = vmatmul.mubr.f32.gmra.mxu0 %v1284
    %v1352 = vpop.f32.mrf.mxu0
    %v1353 = vadd.f32 0.0, %v1352
    %v1354 = vpop.f32.mrf.mxu0
    %1355 = vdwg.mxu0
    %1356 = vrot.lane.b32.xlu0 %v440, 48
    %v1357 = vpop.permute.xlu0 %1356
    %v1360 = vsel %vm446, %v1279, 0
    %1362 = vmatprep.subr.mxu0 0.0
    %1363 = vmatpush1.msra.mxu0 0.0
    %1364 = vmatprep.subr.mxu0 0.0
    %1365 = vmatpush1.msra.mxu0 0.0
    %1366 = vmatprep.subr.mxu0 0.0
    %1367 = vmatpush1.msra.mxu0 0.0
    %1368 = vmatprep.subr.mxu0 0.0
    %1369 = vmatpush1.msra.mxu0 0.0
    %1370 = vmatprep.subr.mxu0 0.0
    %1371 = vmatpush1.msra.mxu0 0.0
    %1372 = vmatprep.subr.mxu0 0.0
    %1373 = vmatpush1.msra.mxu0 0.0
    %1374 = vmatprep.subr.mxu0 0.0
    %1375 = vmatpush1.msra.mxu0 0.0
    %1376 = vmatprep.subr.mxu0 0.0
    %1377 = vmatpush1.msra.mxu0 0.0
    %1378 = vmatprep.subr.mxu0 0.0
    %1379 = vmatpush1.msra.mxu0 0.0
    %1380 = vmatprep.subr.mxu0 0.0
    %1381 = vmatpush1.msra.mxu0 0.0
    %1382 = vmatprep.subr.mxu0 0.0
    %1383 = vmatpush1.msra.mxu0 0.0
    %1384 = vmatprep.subr.mxu0 0.0
    %1385 = vmatpush1.msra.mxu0 0.0
    %1386 = vmatprep.subr.mxu0 0.0
    %1387 = vmatpush1.msra.mxu0 0.0
    %1388 = vmatprep.subr.mxu0 0.0
    %1389 = vmatpush1.msra.mxu0 0.0
    %1390 = vmatprep.subr.mxu0 0.0
    %1391 = vmatpush1.msra.mxu0 0.0
    %1392 = vmatprep.subr.mxu0 0.0
    %1393 = vmatpush1.msra.mxu0 %v1357
    %1394 = vmatprep.subr.mxu0 0.0
    %1395 = vmatpush2.msra.mxu0 0.0
    %1396 = vmatprep.subr.mxu0 0.0
    %1397 = vmatpush2.msra.mxu0 0.0
    %1398 = vmatprep.subr.mxu0 0.0
    %1399 = vmatpush2.msra.mxu0 0.0
    %1400 = vmatprep.subr.mxu0 0.0
    %1401 = vmatpush2.msra.mxu0 0.0
    %1402 = vmatprep.subr.mxu0 0.0
    %1403 = vmatpush2.msra.mxu0 0.0
    %1404 = vmatprep.subr.mxu0 0.0
    %1405 = vmatpush2.msra.mxu0 0.0
    %1406 = vmatprep.subr.mxu0 0.0
    %1407 = vmatpush2.msra.mxu0 0.0
    %1408 = vmatprep.subr.mxu0 0.0
    %1409 = vmatpush2.msra.mxu0 0.0
    %1410 = vmatprep.subr.mxu0 0.0
    %1411 = vmatpush2.msra.mxu0 0.0
    %1412 = vmatprep.subr.mxu0 0.0
    %1413 = vmatpush2.msra.mxu0 0.0
    %1414 = vmatprep.subr.mxu0 0.0
    %1415 = vmatpush2.msra.mxu0 0.0
    %1416 = vmatprep.subr.mxu0 0.0
    %1417 = vmatpush2.msra.mxu0 0.0
    %1418 = vmatprep.subr.mxu0 0.0
    %1419 = vmatpush2.msra.mxu0 0.0
    %1420 = vmatprep.subr.mxu0 0.0
    %1421 = vmatpush2.msra.mxu0 0.0
    %1422 = vmatprep.subr.mxu0 0.0
    %1423 = vmatpush2.msra.mxu0 0.0
    %1424 = vmatprep.subr.mxu0 0.0
    %1425 = vmatpush2.msra.mxu0 0.0
    %1426 = vmatprep.mubr.f32.mxu0 0.0
    %1427 = vmatmul.mubr.f32.gmra.mxu0 %v1360
    %v1428 = vpop.f32.mrf.mxu0
    %v1429 = vadd.f32 0.0, %v1428
    %v1430 = vpop.f32.mrf.mxu0
    %1431 = vdwg.mxu0
    %1432 = vrot.lane.b32.xlu0 %v435, 104
    %v1433 = vpop.permute.xlu0 %1432
    %1434 = vrot.lane.b32.xlu0 %v435, 72
    %v1435 = vpop.permute.xlu0 %1434
    %v1436 = vsel %vm446, %v1433, 0
    %v1438 = vsel %vm446, %v1435, 0
    %1440 = vmatprep.subr.mxu0 0.0
    %1441 = vmatpush1.xpose.msra.mxu0 0.0
    %1442 = vmatprep.subr.mxu0 0.0
    %1443 = vmatpush1.xpose.msra.mxu0 0.0
    %1444 = vmatprep.subr.mxu0 0.0
    %1445 = vmatpush1.xpose.msra.mxu0 0.0
    %1446 = vmatprep.subr.mxu0 0.0
    %1447 = vmatpush1.xpose.msra.mxu0 0.0
    %1448 = vmatprep.subr.mxu0 0.0
    %1449 = vmatpush1.xpose.msra.mxu0 0.0
    %1450 = vmatprep.subr.mxu0 0.0
    %1451 = vmatpush1.xpose.msra.mxu0 0.0
    %1452 = vmatprep.subr.mxu0 0.0
    %1453 = vmatpush1.xpose.msra.mxu0 0.0
    %1454 = vmatprep.subr.mxu0 0.0
    %1455 = vmatpush1.xpose.msra.mxu0 0.0
    %1456 = vmatprep.subr.mxu0 0.0
    %1457 = vmatpush1.xpose.msra.mxu0 0.0
    %1458 = vmatprep.subr.mxu0 0.0
    %1459 = vmatpush1.xpose.msra.mxu0 0.0
    %1460 = vmatprep.subr.mxu0 0.0
    %1461 = vmatpush1.xpose.msra.mxu0 0.0
    %1462 = vmatprep.subr.mxu0 0.0
    %1463 = vmatpush1.xpose.msra.mxu0 0.0
    %1464 = vmatprep.subr.mxu0 0.0
    %1465 = vmatpush1.xpose.msra.mxu0 0.0
    %1466 = vmatprep.subr.mxu0 0.0
    %1467 = vmatpush1.xpose.msra.mxu0 0.0
    %1468 = vmatprep.subr.mxu0 0.0
    %1469 = vmatpush1.xpose.msra.mxu0 0.0
    %1470 = vmatprep.subr.mxu0 0.0
    %1471 = vmatpush1.xpose.msra.mxu0 %v1438
    %1472 = vmatprep.subr.mxu0 0.0
    %1473 = vmatpush2.xpose.msra.mxu0 0.0
    %1474 = vmatprep.subr.mxu0 0.0
    %1475 = vmatpush2.xpose.msra.mxu0 0.0
    %1476 = vmatprep.subr.mxu0 0.0
    %1477 = vmatpush2.xpose.msra.mxu0 0.0
    %1478 = vmatprep.subr.mxu0 0.0
    %1479 = vmatpush2.xpose.msra.mxu0 0.0
    %1480 = vmatprep.subr.mxu0 0.0
    %1481 = vmatpush2.xpose.msra.mxu0 0.0
    %1482 = vmatprep.subr.mxu0 0.0
    %1483 = vmatpush2.xpose.msra.mxu0 0.0
    %1484 = vmatprep.subr.mxu0 0.0
    %1485 = vmatpush2.xpose.msra.mxu0 0.0
    %1486 = vmatprep.subr.mxu0 0.0
    %1487 = vmatpush2.xpose.msra.mxu0 0.0
    %1488 = vmatprep.subr.mxu0 0.0
    %1489 = vmatpush2.xpose.msra.mxu0 0.0
    %1490 = vmatprep.subr.mxu0 0.0
    %1491 = vmatpush2.xpose.msra.mxu0 0.0
    %1492 = vmatprep.subr.mxu0 0.0
    %1493 = vmatpush2.xpose.msra.mxu0 0.0
    %1494 = vmatprep.subr.mxu0 0.0
    %1495 = vmatpush2.xpose.msra.mxu0 0.0
    %1496 = vmatprep.subr.mxu0 0.0
    %1497 = vmatpush2.xpose.msra.mxu0 0.0
    %1498 = vmatprep.subr.mxu0 0.0
    %1499 = vmatpush2.xpose.msra.mxu0 0.0
    %1500 = vmatprep.subr.mxu0 0.0
    %1501 = vmatpush2.xpose.msra.mxu0 0.0
    %1502 = vmatprep.subr.mxu0 0.0
    %1503 = vmatpush2.xpose.msra.mxu0 0.0
    %1504 = vmatprep.mubr.f32.mxu0 0.0
    %1505 = vmatmul.mubr.f32.gmra.mxu0 %v1436
    %v1506 = vpop.f32.mrf.mxu0
    %v1507 = vadd.f32 %v344, %v1506
    %v1508 = vpop.f32.mrf.mxu0
    %1509 = vdwg.mxu0
    %1510 = vrot.lane.b32.xlu0 %v440, 104
    %v1511 = vpop.permute.xlu0 %1510
    %1512 = vrot.lane.b32.xlu0 %v440, 72
    %v1513 = vpop.permute.xlu0 %1512
    %v1514 = vsel %vm446, %v1511, 0
    %v1516 = vsel %vm446, %v1513, 0
    %1518 = vmatprep.subr.mxu0 0.0
    %1519 = vmatpush1.xpose.msra.mxu0 0.0
    %1520 = vmatprep.subr.mxu0 0.0
    %1521 = vmatpush1.xpose.msra.mxu0 0.0
    %1522 = vmatprep.subr.mxu0 0.0
    %1523 = vmatpush1.xpose.msra.mxu0 0.0
    %1524 = vmatprep.subr.mxu0 0.0
    %1525 = vmatpush1.xpose.msra.mxu0 0.0
    %1526 = vmatprep.subr.mxu0 0.0
    %1527 = vmatpush1.xpose.msra.mxu0 0.0
    %1528 = vmatprep.subr.mxu0 0.0
    %1529 = vmatpush1.xpose.msra.mxu0 0.0
    %1530 = vmatprep.subr.mxu0 0.0
    %1531 = vmatpush1.xpose.msra.mxu0 0.0
    %1532 = vmatprep.subr.mxu0 0.0
    %1533 = vmatpush1.xpose.msra.mxu0 0.0
    %1534 = vmatprep.subr.mxu0 0.0
    %1535 = vmatpush1.xpose.msra.mxu0 0.0
    %1536 = vmatprep.subr.mxu0 0.0
    %1537 = vmatpush1.xpose.msra.mxu0 0.0
    %1538 = vmatprep.subr.mxu0 0.0
    %1539 = vmatpush1.xpose.msra.mxu0 0.0
    %1540 = vmatprep.subr.mxu0 0.0
    %1541 = vmatpush1.xpose.msra.mxu0 0.0
    %1542 = vmatprep.subr.mxu0 0.0
    %1543 = vmatpush1.xpose.msra.mxu0 0.0
    %1544 = vmatprep.subr.mxu0 0.0
    %1545 = vmatpush1.xpose.msra.mxu0 0.0
    %1546 = vmatprep.subr.mxu0 0.0
    %1547 = vmatpush1.xpose.msra.mxu0 0.0
    %1548 = vmatprep.subr.mxu0 0.0
    %1549 = vmatpush1.xpose.msra.mxu0 %v1516
    %1550 = vmatprep.subr.mxu0 0.0
    %1551 = vmatpush2.xpose.msra.mxu0 0.0
    %1552 = vmatprep.subr.mxu0 0.0
    %1553 = vmatpush2.xpose.msra.mxu0 0.0
    %1554 = vmatprep.subr.mxu0 0.0
    %1555 = vmatpush2.xpose.msra.mxu0 0.0
    %1556 = vmatprep.subr.mxu0 0.0
    %1557 = vmatpush2.xpose.msra.mxu0 0.0
    %1558 = vmatprep.subr.mxu0 0.0
    %1559 = vmatpush2.xpose.msra.mxu0 0.0
    %1560 = vmatprep.subr.mxu0 0.0
    %1561 = vmatpush2.xpose.msra.mxu0 0.0
    %1562 = vmatprep.subr.mxu0 0.0
    %1563 = vmatpush2.xpose.msra.mxu0 0.0
    %1564 = vmatprep.subr.mxu0 0.0
    %1565 = vmatpush2.xpose.msra.mxu0 0.0
    %1566 = vmatprep.subr.mxu0 0.0
    %1567 = vmatpush2.xpose.msra.mxu0 0.0
    %1568 = vmatprep.subr.mxu0 0.0
    %1569 = vmatpush2.xpose.msra.mxu0 0.0
    %1570 = vmatprep.subr.mxu0 0.0
    %1571 = vmatpush2.xpose.msra.mxu0 0.0
    %1572 = vmatprep.subr.mxu0 0.0
    %1573 = vmatpush2.xpose.msra.mxu0 0.0
    %1574 = vmatprep.subr.mxu0 0.0
    %1575 = vmatpush2.xpose.msra.mxu0 0.0
    %1576 = vmatprep.subr.mxu0 0.0
    %1577 = vmatpush2.xpose.msra.mxu0 0.0
    %1578 = vmatprep.subr.mxu0 0.0
    %1579 = vmatpush2.xpose.msra.mxu0 0.0
    %1580 = vmatprep.subr.mxu0 0.0
    %1581 = vmatpush2.xpose.msra.mxu0 0.0
    %1582 = vmatprep.mubr.f32.mxu0 0.0
    %1583 = vmatmul.mubr.f32.gmra.mxu0 %v1514
    %v1584 = vpop.f32.mrf.mxu0
    %v1585 = vadd.f32 %v348, %v1584
    %v1586 = vpop.f32.mrf.mxu0
    %1587 = vdwg.mxu0
    %v1588 = vsel %vm446, %v1507, -inf
    %1589 = vmax.xlane.f32.xlu0 %v1588
    %v1590 = vpop.xlane.xlu0 %1589
    %v1591 = vsel %vm446, %v1585, -inf
    %1592 = vmax.xlane.f32.xlu0 %v1591
    %v1593 = vpop.xlane.xlu0 %1592
    %v1594 = vsub.f32 %v1507, %v1590
    %v1595 = vsub.f32 %v1585, %v1593
    %v1596 = vmul.f32 %v1594, 1.442695
    %v1597 = vpow.pop %v1596
    %v1598 = vmul.f32 %v1595, 1.442695
    %v1599 = vpow.pop %v1598
    %v1600 = vsel %vm446, %v1597, 0.0
    %1601 = vadd.xlane.f32.xlu0 %v1600
    %v1602 = vpop.xlane.xlu0 %1601
    %v1603 = vsel %vm446, %v1599, 0.0
    %1604 = vadd.xlane.f32.xlu0 %v1603
    %v1605 = vpop.xlane.xlu0 %1604
    %v1606 = vrcp.pop %v1602
    %v1607 = vmul.f32 %v1597, %v1606
    %v1608 = vrcp.pop %v1605
    %v1609 = vmul.f32 %v1599, %v1608
    %1610 = vrot.lane.b32.xlu0 %v435, 40
    %v1611 = vpop.permute.xlu0 %1610
    %v1614 = vsel %vm446, %v1607, 0
    %1616 = vmatprep.subr.mxu0 0.0
    %1617 = vmatpush1.msra.mxu0 0.0
    %1618 = vmatprep.subr.mxu0 0.0
    %1619 = vmatpush1.msra.mxu0 0.0
    %1620 = vmatprep.subr.mxu0 0.0
    %1621 = vmatpush1.msra.mxu0 0.0
    %1622 = vmatprep.subr.mxu0 0.0
    %1623 = vmatpush1.msra.mxu0 0.0
    %1624 = vmatprep.subr.mxu0 0.0
    %1625 = vmatpush1.msra.mxu0 0.0
    %1626 = vmatprep.subr.mxu0 0.0
    %1627 = vmatpush1.msra.mxu0 0.0
    %1628 = vmatprep.subr.mxu0 0.0
    %1629 = vmatpush1.msra.mxu0 0.0
    %1630 = vmatprep.subr.mxu0 0.0
    %1631 = vmatpush1.msra.mxu0 0.0
    %1632 = vmatprep.subr.mxu0 0.0
    %1633 = vmatpush1.msra.mxu0 0.0
    %1634 = vmatprep.subr.mxu0 0.0
    %1635 = vmatpush1.msra.mxu0 0.0
    %1636 = vmatprep.subr.mxu0 0.0
    %1637 = vmatpush1.msra.mxu0 0.0
    %1638 = vmatprep.subr.mxu0 0.0
    %1639 = vmatpush1.msra.mxu0 0.0
    %1640 = vmatprep.subr.mxu0 0.0
    %1641 = vmatpush1.msra.mxu0 0.0
    %1642 = vmatprep.subr.mxu0 0.0
    %1643 = vmatpush1.msra.mxu0 0.0
    %1644 = vmatprep.subr.mxu0 0.0
    %1645 = vmatpush1.msra.mxu0 0.0
    %1646 = vmatprep.subr.mxu0 0.0
    %1647 = vmatpush1.msra.mxu0 %v1611
    %1648 = vmatprep.subr.mxu0 0.0
    %1649 = vmatpush2.msra.mxu0 0.0
    %1650 = vmatprep.subr.mxu0 0.0
    %1651 = vmatpush2.msra.mxu0 0.0
    %1652 = vmatprep.subr.mxu0 0.0
    %1653 = vmatpush2.msra.mxu0 0.0
    %1654 = vmatprep.subr.mxu0 0.0
    %1655 = vmatpush2.msra.mxu0 0.0
    %1656 = vmatprep.subr.mxu0 0.0
    %1657 = vmatpush2.msra.mxu0 0.0
    %1658 = vmatprep.subr.mxu0 0.0
    %1659 = vmatpush2.msra.mxu0 0.0
    %1660 = vmatprep.subr.mxu0 0.0
    %1661 = vmatpush2.msra.mxu0 0.0
    %1662 = vmatprep.subr.mxu0 0.0
    %1663 = vmatpush2.msra.mxu0 0.0
    %1664 = vmatprep.subr.mxu0 0.0
    %1665 = vmatpush2.msra.mxu0 0.0
    %1666 = vmatprep.subr.mxu0 0.0
    %1667 = vmatpush2.msra.mxu0 0.0
    %1668 = vmatprep.subr.mxu0 0.0
    %1669 = vmatpush2.msra.mxu0 0.0
    %1670 = vmatprep.subr.mxu0 0.0
    %1671 = vmatpush2.msra.mxu0 0.0
    %1672 = vmatprep.subr.mxu0 0.0
    %1673 = vmatpush2.msra.mxu0 0.0
    %1674 = vmatprep.subr.mxu0 0.0
    %1675 = vmatpush2.msra.mxu0 0.0
    %1676 = vmatprep.subr.mxu0 0.0
    %1677 = vmatpush2.msra.mxu0 0.0
    %1678 = vmatprep.subr.mxu0 0.0
    %1679 = vmatpush2.msra.mxu0 0.0
    %1680 = vmatprep.mubr.f32.mxu0 0.0
    %1681 = vmatmul.mubr.f32.gmra.mxu0 %v1614
    %v1682 = vpop.f32.mrf.mxu0
    %v1683 = vadd.f32 0.0, %v1682
    %v1684 = vpop.f32.mrf.mxu0
    %1685 = vdwg.mxu0
    %1686 = vrot.lane.b32.xlu0 %v440, 40
    %v1687 = vpop.permute.xlu0 %1686
    %v1690 = vsel %vm446, %v1609, 0
    %1692 = vmatprep.subr.mxu0 0.0
    %1693 = vmatpush1.msra.mxu0 0.0
    %1694 = vmatprep.subr.mxu0 0.0
    %1695 = vmatpush1.msra.mxu0 0.0
    %1696 = vmatprep.subr.mxu0 0.0
    %1697 = vmatpush1.msra.mxu0 0.0
    %1698 = vmatprep.subr.mxu0 0.0
    %1699 = vmatpush1.msra.mxu0 0.0
    %1700 = vmatprep.subr.mxu0 0.0
    %1701 = vmatpush1.msra.mxu0 0.0
    %1702 = vmatprep.subr.mxu0 0.0
    %1703 = vmatpush1.msra.mxu0 0.0
    %1704 = vmatprep.subr.mxu0 0.0
    %1705 = vmatpush1.msra.mxu0 0.0
    %1706 = vmatprep.subr.mxu0 0.0
    %1707 = vmatpush1.msra.mxu0 0.0
    %1708 = vmatprep.subr.mxu0 0.0
    %1709 = vmatpush1.msra.mxu0 0.0
    %1710 = vmatprep.subr.mxu0 0.0
    %1711 = vmatpush1.msra.mxu0 0.0
    %1712 = vmatprep.subr.mxu0 0.0
    %1713 = vmatpush1.msra.mxu0 0.0
    %1714 = vmatprep.subr.mxu0 0.0
    %1715 = vmatpush1.msra.mxu0 0.0
    %1716 = vmatprep.subr.mxu0 0.0
    %1717 = vmatpush1.msra.mxu0 0.0
    %1718 = vmatprep.subr.mxu0 0.0
    %1719 = vmatpush1.msra.mxu0 0.0
    %1720 = vmatprep.subr.mxu0 0.0
    %1721 = vmatpush1.msra.mxu0 0.0
    %1722 = vmatprep.subr.mxu0 0.0
    %1723 = vmatpush1.msra.mxu0 %v1687
    %1724 = vmatprep.subr.mxu0 0.0
    %1725 = vmatpush2.msra.mxu0 0.0
    %1726 = vmatprep.subr.mxu0 0.0
    %1727 = vmatpush2.msra.mxu0 0.0
    %1728 = vmatprep.subr.mxu0 0.0
    %1729 = vmatpush2.msra.mxu0 0.0
    %1730 = vmatprep.subr.mxu0 0.0
    %1731 = vmatpush2.msra.mxu0 0.0
    %1732 = vmatprep.subr.mxu0 0.0
    %1733 = vmatpush2.msra.mxu0 0.0
    %1734 = vmatprep.subr.mxu0 0.0
    %1735 = vmatpush2.msra.mxu0 0.0
    %1736 = vmatprep.subr.mxu0 0.0
    %1737 = vmatpush2.msra.mxu0 0.0
    %1738 = vmatprep.subr.mxu0 0.0
    %1739 = vmatpush2.msra.mxu0 0.0
    %1740 = vmatprep.subr.mxu0 0.0
    %1741 = vmatpush2.msra.mxu0 0.0
    %1742 = vmatprep.subr.mxu0 0.0
    %1743 = vmatpush2.msra.mxu0 0.0
    %1744 = vmatprep.subr.mxu0 0.0
    %1745 = vmatpush2.msra.mxu0 0.0
    %1746 = vmatprep.subr.mxu0 0.0
    %1747 = vmatpush2.msra.mxu0 0.0
    %1748 = vmatprep.subr.mxu0 0.0
    %1749 = vmatpush2.msra.mxu0 0.0
    %1750 = vmatprep.subr.mxu0 0.0
    %1751 = vmatpush2.msra.mxu0 0.0
    %1752 = vmatprep.subr.mxu0 0.0
    %1753 = vmatpush2.msra.mxu0 0.0
    %1754 = vmatprep.subr.mxu0 0.0
    %1755 = vmatpush2.msra.mxu0 0.0
    %1756 = vmatprep.mubr.f32.mxu0 0.0
    %1757 = vmatmul.mubr.f32.gmra.mxu0 %v1690
    %v1758 = vpop.f32.mrf.mxu0
    %v1759 = vadd.f32 0.0, %v1758
    %v1760 = vpop.f32.mrf.mxu0
    %1761 = vdwg.mxu0
    %1764 = vrot.lane.b32.xlu0 %v1023, 8
    %v1765 = vpop.permute.xlu0 %1764
    %1766 = vrot.lane.b32.xlu0 %v1099, 8
    %v1767 = vpop.permute.xlu0 %1766
    %1772 = vrot.lane.b32.xlu0 %v1353, 16
    %v1773 = vpop.permute.xlu0 %1772
    %1774 = vrot.lane.b32.xlu0 %v1429, 16
    %v1775 = vpop.permute.xlu0 %1774
    %1780 = vrot.lane.b32.xlu0 %v1683, 24
    %v1781 = vpop.permute.xlu0 %1780
    %1782 = vrot.lane.b32.xlu0 %v1759, 24
    %v1783 = vpop.permute.xlu0 %1782
    %v1786 = vsel %vm446, %v693, %v1765
    %v1787 = vsel %vm446, %v769, %v1767
    %vm1788 = vcmask 130048
    %v1789 = vsel %vm1788, %v1786, %v1773
    %v1790 = vsel %vm1788, %v1787, %v1775
    %vm1791 = vcmask 195584
    %v1792 = vsel %vm1791, %v1789, %v1781
    %v1793 = vsel %vm1791, %v1790, %v1783
    %v1794 = vld [vmem:[%s10] sm:$0xff]
    %v1795 = vld [vmem:[%s10 + $0x8] sm:$0xff]
    %v1796 = vld [vmem:[%s10 + $0x10] sm:$0xff]
    %v1797 = vld [vmem:[%s10 + $0x18] sm:$0xff]
    %v1798 = vld [vmem:[%s11] sm:$0x1]
    %v1800 = vlaneseq
    %v1801 = vshrl.u32 %v1800, 7
    %v1802 = vsub.s32 0, %v1801
    %v1803 = vrot.slane %v1798, %v1802
    %v1806 = vsel %vm293, %v1792, 0
    %v1809 = vsel %vm293, %v1793, 0
    %1811 = vmatprep.subr.mxu0 0.0
    %1812 = vmatpush1.msra.mxu0 0.0
    %1813 = vmatprep.subr.mxu0 0.0
    %1814 = vmatpush1.msra.mxu0 0.0
    %1815 = vmatprep.subr.mxu0 0.0
    %1816 = vmatpush1.msra.mxu0 0.0
    %1817 = vmatprep.subr.mxu0 0.0
    %1818 = vmatpush1.msra.mxu0 0.0
    %1819 = vmatprep.subr.mxu0 0.0
    %1820 = vmatpush1.msra.mxu0 0.0
    %1821 = vmatprep.subr.mxu0 0.0
    %1822 = vmatpush1.msra.mxu0 0.0
    %1823 = vmatprep.subr.mxu0 0.0
    %1824 = vmatpush1.msra.mxu0 0.0
    %1825 = vmatprep.subr.mxu0 0.0
    %1826 = vmatpush1.msra.mxu0 0.0
    %1827 = vmatprep.subr.mxu0 0.0
    %1828 = vmatpush1.msra.mxu0 0.0
    %1829 = vmatprep.subr.mxu0 0.0
    %1830 = vmatpush1.msra.mxu0 0.0
    %1831 = vmatprep.subr.mxu0 0.0
    %1832 = vmatpush1.msra.mxu0 0.0
    %1833 = vmatprep.subr.mxu0 0.0
    %1834 = vmatpush1.msra.mxu0 0.0
    %1835 = vmatprep.subr.mxu0 0.0
    %1836 = vmatpush1.msra.mxu0 %v1797
    %1837 = vmatprep.subr.mxu0 0.0
    %1838 = vmatpush1.msra.mxu0 %v1796
    %1839 = vmatprep.subr.mxu0 0.0
    %1840 = vmatpush1.msra.mxu0 %v1795
    %1841 = vmatprep.subr.mxu0 0.0
    %1842 = vmatpush1.msra.mxu0 %v1794
    %1843 = vmatprep.subr.mxu0 0.0
    %1844 = vmatpush2.msra.mxu0 0.0
    %1845 = vmatprep.subr.mxu0 0.0
    %1846 = vmatpush2.msra.mxu0 0.0
    %1847 = vmatprep.subr.mxu0 0.0
    %1848 = vmatpush2.msra.mxu0 0.0
    %1849 = vmatprep.subr.mxu0 0.0
    %1850 = vmatpush2.msra.mxu0 0.0
    %1851 = vmatprep.subr.mxu0 0.0
    %1852 = vmatpush2.msra.mxu0 0.0
    %1853 = vmatprep.subr.mxu0 0.0
    %1854 = vmatpush2.msra.mxu0 0.0
    %1855 = vmatprep.subr.mxu0 0.0
    %1856 = vmatpush2.msra.mxu0 0.0
    %1857 = vmatprep.subr.mxu0 0.0
    %1858 = vmatpush2.msra.mxu0 0.0
    %1859 = vmatprep.subr.mxu0 0.0
    %1860 = vmatpush2.msra.mxu0 0.0
    %1861 = vmatprep.subr.mxu0 0.0
    %1862 = vmatpush2.msra.mxu0 0.0
    %1863 = vmatprep.subr.mxu0 0.0
    %1864 = vmatpush2.msra.mxu0 0.0
    %1865 = vmatprep.subr.mxu0 0.0
    %1866 = vmatpush2.msra.mxu0 0.0
    %1867 = vmatprep.subr.mxu0 0.0
    %1868 = vmatpush2.msra.mxu0 0.0
    %1869 = vmatprep.subr.mxu0 0.0
    %1870 = vmatpush2.msra.mxu0 0.0
    %1871 = vmatprep.subr.mxu0 0.0
    %1872 = vmatpush2.msra.mxu0 0.0
    %1873 = vmatprep.subr.mxu0 0.0
    %1874 = vmatpush2.msra.mxu0 0.0
    %1875 = vmatprep.mubr.f32.mxu0 0.0
    %1876 = vmatmul.mubr.f32.gmra.mxu0 %v1806
    %v1877 = vpop.f32.mrf.mxu0
    %v1878 = vadd.f32 %v1803, %v1877
    %v1879 = vpop.f32.mrf.mxu0
    %1880 = vmatprep.mubr.f32.mxu0 0.0
    %1881 = vmatmul.mubr.f32.gmra.mxu0 %v1809
    %v1882 = vpop.f32.mrf.mxu0
    %v1883 = vadd.f32 %v1803, %v1882
    %v1884 = vpop.f32.mrf.mxu0
    %1885 = vdwg.mxu0
    %v1886 = vadd.f32 %v1878, %v335
    %v1887 = vadd.f32 %v1883, %v336
    %v1888 = vld [vmem:[%s12] sm:$0x1]
    %v1889 = vld [vmem:[%s13] sm:$0x1]
    %v1890 = vsel %vm293, %v1886, 0.0
    %1891 = vadd.xlane.f32.xlu0 %v1890
    %v1892 = vpop.xlane.xlu0 %1891
    %v1893 = vsel %vm293, %v1887, 0.0
    %1894 = vadd.xlane.f32.xlu0 %v1893
    %v1895 = vpop.xlane.xlu0 %1894
    %v1896 = vmul.f32 %v1892, %v300
    %v1897 = vmul.f32 %v1895, %v300
    %v1898 = vsub.f32 %v1886, %v1896
    %v1899 = vsub.f32 %v1887, %v1897
    %v1900 = vmul.f32 %v1898, %v1898
    %v1901 = vmul.f32 %v1899, %v1899
    %v1902 = vsel %vm293, %v1900, 0.0
    %1903 = vadd.xlane.f32.xlu0 %v1902
    %v1904 = vpop.xlane.xlu0 %1903
    %v1905 = vsel %vm293, %v1901, 0.0
    %1906 = vadd.xlane.f32.xlu0 %v1905
    %v1907 = vpop.xlane.xlu0 %1906
    %v1908 = vmul.f32 %v1904, %v300
    %v1909 = vmul.f32 %v1907, %v300
    %v1910 = vadd.f32 %v1908, 1e-12
    %v1911 = vadd.f32 %v1909, 1e-12
    %v1912 = vrsqrt.pop %v1910
    %v1913 = vrsqrt.pop %v1911
    %v1914 = vmul.f32 %v1898, %v1912
    %v1915 = vmul.f32 %v1899, %v1913
    %v1917 = vlaneseq
    %v1918 = vshrl.u32 %v1917, 7
    %v1919 = vsub.s32 0, %v1918
    %v1920 = vrot.slane %v1888, %v1919
    %v1922 = vmul.f32 %v1914, %v1920
    %v1923 = vmul.f32 %v1915, %v1920
    %v1925 = vlaneseq
    %v1926 = vshrl.u32 %v1925, 7
    %v1927 = vsub.s32 0, %v1926
    %v1928 = vrot.slane %v1889, %v1927
    %v1930 = vadd.f32 %v1922, %v1928
    %v1931 = vadd.f32 %v1923, %v1928
    %v1932 = vld [vmem:[%s14] sm:$0xff]
    %v1933 = vld [vmem:[%s14 + $0x8] sm:$0xff]
    %v1934 = vld [vmem:[%s14 + $0x10] sm:$0xff]
    %v1935 = vld [vmem:[%s14 + $0x18] sm:$0xff]
    %v1936 = vld [vmem:[%s15] sm:$0x1]
    %v1938 = vlaneseq
    %v1939 = vshrl.u32 %v1938, 7
    %v1940 = vsub.s32 0, %v1939
    %v1941 = vrot.slane %v1936, %v1940
    %v1944 = vsel %vm293, %v1930, 0
    %v1947 = vsel %vm293, %v1931, 0
    %1949 = vmatprep.subr.mxu0 0.0
    %1950 = vmatpush1.msra.mxu0 0.0
    %1951 = vmatprep.subr.mxu0 0.0
    %1952 = vmatpush1.msra.mxu0 0.0
    %1953 = vmatprep.subr.mxu0 0.0
    %1954 = vmatpush1.msra.mxu0 0.0
    %1955 = vmatprep.subr.mxu0 0.0
    %1956 = vmatpush1.msra.mxu0 0.0
    %1957 = vmatprep.subr.mxu0 0.0
    %1958 = vmatpush1.msra.mxu0 0.0
    %1959 = vmatprep.subr.mxu0 0.0
    %1960 = vmatpush1.msra.mxu0 0.0
    %1961 = vmatprep.subr.mxu0 0.0
    %1962 = vmatpush1.msra.mxu0 0.0
    %1963 = vmatprep.subr.mxu0 0.0
    %1964 = vmatpush1.msra.mxu0 0.0
    %1965 = vmatprep.subr.mxu0 0.0
    %1966 = vmatpush1.msra.mxu0 0.0
    %1967 = vmatprep.subr.mxu0 0.0
    %1968 = vmatpush1.msra.mxu0 0.0
    %1969 = vmatprep.subr.mxu0 0.0
    %1970 = vmatpush1.msra.mxu0 0.0
    %1971 = vmatprep.subr.mxu0 0.0
    %1972 = vmatpush1.msra.mxu0 0.0
    %1973 = vmatprep.subr.mxu0 0.0
    %1974 = vmatpush1.msra.mxu0 %v1935
    %1975 = vmatprep.subr.mxu0 0.0
    %1976 = vmatpush1.msra.mxu0 %v1934
    %1977 = vmatprep.subr.mxu0 0.0
    %1978 = vmatpush1.msra.mxu0 %v1933
    %1979 = vmatprep.subr.mxu0 0.0
    %1980 = vmatpush1.msra.mxu0 %v1932
    %1981 = vmatprep.subr.mxu0 0.0
    %1982 = vmatpush2.msra.mxu0 0.0
    %1983 = vmatprep.subr.mxu0 0.0
    %1984 = vmatpush2.msra.mxu0 0.0
    %1985 = vmatprep.subr.mxu0 0.0
    %1986 = vmatpush2.msra.mxu0 0.0
    %1987 = vmatprep.subr.mxu0 0.0
    %1988 = vmatpush2.msra.mxu0 0.0
    %1989 = vmatprep.subr.mxu0 0.0
    %1990 = vmatpush2.msra.mxu0 0.0
    %1991 = vmatprep.subr.mxu0 0.0
    %1992 = vmatpush2.msra.mxu0 0.0
    %1993 = vmatprep.subr.mxu0 0.0
    %1994 = vmatpush2.msra.mxu0 0.0
    %1995 = vmatprep.subr.mxu0 0.0
    %1996 = vmatpush2.msra.mxu0 0.0
    %1997 = vmatprep.subr.mxu0 0.0
    %1998 = vmatpush2.msra.mxu0 0.0
    %1999 = vmatprep.subr.mxu0 0.0
    %2000 = vmatpush2.msra.mxu0 0.0
    %2001 = vmatprep.subr.mxu0 0.0
    %2002 = vmatpush2.msra.mxu0 0.0
    %2003 = vmatprep.subr.mxu0 0.0
    %2004 = vmatpush2.msra.mxu0 0.0
    %2005 = vmatprep.subr.mxu0 0.0
    %2006 = vmatpush2.msra.mxu0 0.0
    %2007 = vmatprep.subr.mxu0 0.0
    %2008 = vmatpush2.msra.mxu0 0.0
    %2009 = vmatprep.subr.mxu0 0.0
    %2010 = vmatpush2.msra.mxu0 0.0
    %2011 = vmatprep.subr.mxu0 0.0
    %2012 = vmatpush2.msra.mxu0 0.0
    %2013 = vmatprep.mubr.f32.mxu0 0.0
    %2014 = vmatmul.mubr.f32.gmra.mxu0 %v1944
    %v2015 = vpop.f32.mrf.mxu0
    %v2016 = vadd.f32 %v1941, %v2015
    %v2017 = vpop.f32.mrf.mxu0
    %2018 = vmatprep.mubr.f32.mxu0 0.0
    %2019 = vmatmul.mubr.f32.gmra.mxu0 %v1947
    %v2020 = vpop.f32.mrf.mxu0
    %v2021 = vadd.f32 %v1941, %v2020
    %v2022 = vpop.f32.mrf.mxu0
    %2023 = vdwg.mxu0
    %v2024 = vmul.f32 %v2016, 0.5
    %v2025 = vmul.f32 %v2021, 0.5
    %v2026 = vmul.f32 %v2016, 0.044715
    %v2027 = vmul.f32 %v2021, 0.044715
    %v2028 = vmul.f32 %v2026, %v2016
    %v2029 = vmul.f32 %v2027, %v2021
    %v2030 = vmul.f32 %v2028, %v2016
    %v2031 = vmul.f32 %v2029, %v2021
    %v2032 = vadd.f32 %v2016, %v2030
    %v2033 = vadd.f32 %v2021, %v2031
    %v2034 = vmul.f32 %v2032, 0.7978846
    %v2035 = vmul.f32 %v2033, 0.7978846
    %v2036 = vtanh.pop %v2034
    %v2037 = vtanh.pop %v2035
    %v2038 = vadd.f32 %v2036, 1.0
    %v2039 = vadd.f32 %v2037, 1.0
    %v2040 = vmul.f32 %v2024, %v2038
    %v2041 = vmul.f32 %v2025, %v2039
    %v2042 = vld [vmem:[%s16] sm:$0xff]
    %v2043 = vld [vmem:[%s16 + $0x8] sm:$0xff]
    %v2044 = vld [vmem:[%s16 + $0x10] sm:$0xff]
    %v2045 = vld [vmem:[%s16 + $0x18] sm:$0xff]
    %v2046 = vld [vmem:[%s16 + $0x20] sm:$0xff]
    %v2047 = vld [vmem:[%s16 + $0x28] sm:$0xff]
    %v2048 = vld [vmem:[%s16 + $0x30] sm:$0xff]
    %v2049 = vld [vmem:[%s16 + $0x38] sm:$0xff]
    %v2050 = vld [vmem:[%s17] sm:$0x1]
    %v2052 = vlaneseq
    %v2053 = vshrl.u32 %v2052, 7
    %v2054 = vsub.s32 0, %v2053
    %v2055 = vrot.slane %v2050, %v2054
    %vm2057 = vcmask 523264
    %v2059 = vsel %vm2057, %v2040, 0
    %v2062 = vsel %vm2057, %v2041, 0
    %2064 = vmatprep.subr.mxu0 0.0
    %2065 = vmatpush1.msra.mxu0 0.0
    %2066 = vmatprep.subr.mxu0 0.0
    %2067 = vmatpush1.msra.mxu0 0.0
    %2068 = vmatprep.subr.mxu0 0.0
    %2069 = vmatpush1.msra.mxu0 0.0
    %2070 = vmatprep.subr.mxu0 0.0
    %2071 = vmatpush1.msra.mxu0 0.0
    %2072 = vmatprep.subr.mxu0 0.0
    %2073 = vmatpush1.msra.mxu0 0.0
    %2074 = vmatprep.subr.mxu0 0.0
    %2075 = vmatpush1.msra.mxu0 0.0
    %2076 = vmatprep.subr.mxu0 0.0
    %2077 = vmatpush1.msra.mxu0 0.0
    %2078 = vmatprep.subr.mxu0 0.0
    %2079 = vmatpush1.msra.mxu0 0.0
    %2080 = vmatprep.subr.mxu0 0.0
    %2081 = vmatpush1.msra.mxu0 %v2049
    %2082 = vmatprep.subr.mxu0 0.0
    %2083 = vmatpush1.msra.mxu0 %v2048
    %2084 = vmatprep.subr.mxu0 0.0
    %2085 = vmatpush1.msra.mxu0 %v2047
    %2086 = vmatprep.subr.mxu0 0.0
    %2087 = vmatpush1.msra.mxu0 %v2046
    %2088 = vmatprep.subr.mxu0 0.0
    %2089 = vmatpush1.msra.mxu0 %v2045
    %2090 = vmatprep.subr.mxu0 0.0
    %2091 = vmatpush1.msra.mxu0 %v2044
    %2092 = vmatprep.subr.mxu0 0.0
    %2093 = vmatpush1.msra.mxu0 %v2043
    %2094 = vmatprep.subr.mxu0 0.0
    %2095 = vmatpush1.msra.mxu0 %v2042
    %2096 = vmatprep.subr.mxu0 0.0
    %2097 = vmatpush2.msra.mxu0 0.0
    %2098 = vmatprep.subr.mxu0 0.0
    %2099 = vmatpush2.msra.mxu0 0.0
    %2100 = vmatprep.subr.mxu0 0.0
    %2101 = vmatpush2.msra.mxu0 0.0
    %2102 = vmatprep.subr.mxu0 0.0
    %2103 = vmatpush2.msra.mxu0 0.0
    %2104 = vmatprep.subr.mxu0 0.0
    %2105 = vmatpush2.msra.mxu0 0.0
    %2106 = vmatprep.subr.mxu0 0.0
    %2107 = vmatpush2.msra.mxu0 0.0
    %2108 = vmatprep.subr.mxu0 0.0
    %2109 = vmatpush2.msra.mxu0 0.0
    %2110 = vmatprep.subr.mxu0 0.0
    %2111 = vmatpush2.msra.mxu0 0.0
    %2112 = vmatprep.subr.mxu0 0.0
    %2113 = vmatpush2.msra.mxu0 0.0
    %2114 = vmatprep.subr.mxu0 0.0
    %2115 = vmatpush2.msra.mxu0 0.0
    %2116 = vmatprep.subr.mxu0 0.0
    %2117 = vmatpush2.msra.mxu0 0.0
    %2118 = vmatprep.subr.mxu0 0.0
    %2119 = vmatpush2.msra.mxu0 0.0
    %2120 = vmatprep.subr.mxu0 0.0
    %2121 = vmatpush2.msra.mxu0 0.0
    %2122 = vmatprep.subr.mxu0 0.0
    %2123 = vmatpush2.msra.mxu0 0.0
    %2124 = vmatprep.subr.mxu0 0.0
    %2125 = vmatpush2.msra.mxu0 0.0
    %2126 = vmatprep.subr.mxu0 0.0
    %2127 = vmatpush2.msra.mxu0 0.0
    %2128 = vmatprep.mubr.f32.mxu0 0.0
    %2129 = vmatmul.mubr.f32.gmra.mxu0 %v2059
    %v2130 = vpop.f32.mrf.mxu0
    %v2131 = vadd.f32 %v2055, %v2130
    %v2132 = vpop.f32.mrf.mxu0
    %2133 = vmatprep.mubr.f32.mxu0 0.0
    %2134 = vmatmul.mubr.f32.gmra.mxu0 %v2062
    %v2135 = vpop.f32.mrf.mxu0
    %v2136 = vadd.f32 %v2055, %v2135
    %v2137 = vpop.f32.mrf.mxu0
    %2138 = vdwg.mxu0
    %v2139 = vadd.f32 %v2131, %v1930
    %v2140 = vadd.f32 %v2136, %v1931
    %v2141 = vld [vmem:[%s18] sm:$0x1]
    %v2142 = vld [vmem:[%s19] sm:$0x1]
    %v2143 = vsel %vm293, %v2139, 0.0
    %2144 = vadd.xlane.f32.xlu0 %v2143
    %v2145 = vpop.xlane.xlu0 %2144
    %v2146 = vsel %vm293, %v2140, 0.0
    %2147 = vadd.xlane.f32.xlu0 %v2146
    %v2148 = vpop.xlane.xlu0 %2147
    %v2149 = vmul.f32 %v2145, %v300
    %v2150 = vmul.f32 %v2148, %v300
    %v2151 = vsub.f32 %v2139, %v2149
    %v2152 = vsub.f32 %v2140, %v2150
    %v2153 = vmul.f32 %v2151, %v2151
    %v2154 = vmul.f32 %v2152, %v2152
    %v2155 = vsel %vm293, %v2153, 0.0
    %2156 = vadd.xlane.f32.xlu0 %v2155
    %v2157 = vpop.xlane.xlu0 %2156
    %v2158 = vsel %vm293, %v2154, 0.0
    %2159 = vadd.xlane.f32.xlu0 %v2158
    %v2160 = vpop.xlane.xlu0 %2159
    %v2161 = vmul.f32 %v2157, %v300
    %v2162 = vmul.f32 %v2160, %v300
    %v2163 = vadd.f32 %v2161, 1e-12
    %v2164 = vadd.f32 %v2162, 1e-12
    %v2165 = vrsqrt.pop %v2163
    %v2166 = vrsqrt.pop %v2164
    %v2167 = vmul.f32 %v2151, %v2165
    %v2168 = vmul.f32 %v2152, %v2166
    %v2170 = vlaneseq
    %v2171 = vshrl.u32 %v2170, 7
    %v2172 = vsub.s32 0, %v2171
    %v2173 = vrot.slane %v2141, %v2172
    %v2175 = vmul.f32 %v2167, %v2173
    %v2176 = vmul.f32 %v2168, %v2173
    %v2178 = vlaneseq
    %v2179 = vshrl.u32 %v2178, 7
    %v2180 = vsub.s32 0, %v2179
    %v2181 = vrot.slane %v2142, %v2180
    %v2183 = vadd.f32 %v2175, %v2181
    %v2184 = vadd.f32 %v2176, %v2181
    %s2185 = scalar_lea.vmem %s8, 32
    %v2186 = vld [vmem:[%s2185] sm:$0xff]
    %v2187 = vld [vmem:[%s2185 + $0x8] sm:$0xff]
    %v2188 = vld [vmem:[%s2185 + $0x10] sm:$0xff]
    %v2189 = vld [vmem:[%s2185 + $0x18] sm:$0xff]
    %s2190 = scalar_lea.vmem %s9, 1
    %v2191 = vld [vmem:[%s2190] sm:$0x1]
    %v2193 = vlaneseq
    %v2194 = vshrl.u32 %v2193, 7
    %v2195 = vsub.s32 0, %v2194
    %v2196 = vrot.slane %v2191, %v2195
    %v2199 = vsel %vm293, %v2183, 0
    %v2202 = vsel %vm293, %v2184, 0
    %2204 = vmatprep.subr.mxu0 0.0
    %2205 = vmatpush1.msra.mxu0 0.0
    %2206 = vmatprep.subr.mxu0 0.0
    %2207 = vmatpush1.msra.mxu0 0.0
    %2208 = vmatprep.subr.mxu0 0.0
    %2209 = vmatpush1.msra.mxu0 0.0
    %2210 = vmatprep.subr.mxu0 0.0
    %2211 = vmatpush1.msra.mxu0 0.0
    %2212 = vmatprep.subr.mxu0 0.0
    %2213 = vmatpush1.msra.mxu0 0.0
    %2214 = vmatprep.subr.mxu0 0.0
    %2215 = vmatpush1.msra.mxu0 0.0
    %2216 = vmatprep.subr.mxu0 0.0
    %2217 = vmatpush1.msra.mxu0 0.0
    %2218 = vmatprep.subr.mxu0 0.0
    %2219 = vmatpush1.msra.mxu0 0.0
    %2220 = vmatprep.subr.mxu0 0.0
    %2221 = vmatpush1.msra.mxu0 0.0
    %2222 = vmatprep.subr.mxu0 0.0
    %2223 = vmatpush1.msra.mxu0 0.0
    %2224 = vmatprep.subr.mxu0 0.0
    %2225 = vmatpush1.msra.mxu0 0.0
    %2226 = vmatprep.subr.mxu0 0.0
    %2227 = vmatpush1.msra.mxu0 0.0
    %2228 = vmatprep.subr.mxu0 0.0
    %2229 = vmatpush1.msra.mxu0 %v2189
    %2230 = vmatprep.subr.mxu0 0.0
    %2231 = vmatpush1.msra.mxu0 %v2188
    %2232 = vmatprep.subr.mxu0 0.0
    %2233 = vmatpush1.msra.mxu0 %v2187
    %2234 = vmatprep.subr.mxu0 0.0
    %2235 = vmatpush1.msra.mxu0 %v2186
    %2236 = vmatprep.subr.mxu0 0.0
    %2237 = vmatpush2.msra.mxu0 0.0
    %2238 = vmatprep.subr.mxu0 0.0
    %2239 = vmatpush2.msra.mxu0 0.0
    %2240 = vmatprep.subr.mxu0 0.0
    %2241 = vmatpush2.msra.mxu0 0.0
    %2242 = vmatprep.subr.mxu0 0.0
    %2243 = vmatpush2.msra.mxu0 0.0
    %2244 = vmatprep.subr.mxu0 0.0
    %2245 = vmatpush2.msra.mxu0 0.0
    %2246 = vmatprep.subr.mxu0 0.0
    %2247 = vmatpush2.msra.mxu0 0.0
    %2248 = vmatprep.subr.mxu0 0.0
    %2249 = vmatpush2.msra.mxu0 0.0
    %2250 = vmatprep.subr.mxu0 0.0
    %2251 = vmatpush2.msra.mxu0 0.0
    %2252 = vmatprep.subr.mxu0 0.0
    %2253 = vmatpush2.msra.mxu0 0.0
    %2254 = vmatprep.subr.mxu0 0.0
    %2255 = vmatpush2.msra.mxu0 0.0
    %2256 = vmatprep.subr.mxu0 0.0
    %2257 = vmatpush2.msra.mxu0 0.0
    %2258 = vmatprep.subr.mxu0 0.0
    %2259 = vmatpush2.msra.mxu0 0.0
    %2260 = vmatprep.subr.mxu0 0.0
    %2261 = vmatpush2.msra.mxu0 0.0
    %2262 = vmatprep.subr.mxu0 0.0
    %2263 = vmatpush2.msra.mxu0 0.0
    %2264 = vmatprep.subr.mxu0 0.0
    %2265 = vmatpush2.msra.mxu0 0.0
    %2266 = vmatprep.subr.mxu0 0.0
    %2267 = vmatpush2.msra.mxu0 0.0
    %2268 = vmatprep.mubr.f32.mxu0 0.0
    %2269 = vmatmul.mubr.f32.gmra.mxu0 %v2199
    %v2270 = vpop.f32.mrf.mxu0
    %v2271 = vadd.f32 %v2196, %v2270
    %v2272 = vpop.f32.mrf.mxu0
    %2273 = vmatprep.mubr.f32.mxu0 0.0
    %2274 = vmatmul.mubr.f32.gmra.mxu0 %v2202
    %v2275 = vpop.f32.mrf.mxu0
    %v2276 = vadd.f32 %v2196, %v2275
    %v2277 = vpop.f32.mrf.mxu0
    %2278 = vdwg.mxu0
    %2280 = vrot.lane.b32.xlu0 %v2271, 96
    %v2281 = vpop.permute.xlu0 %2280
    %v2282 = vsel %vm446, %v2271, 0
    %v2284 = vsel %vm446, %v2281, 0
    %2286 = vmatprep.subr.mxu0 0.0
    %2287 = vmatpush1.xpose.msra.mxu0 0.0
    %2288 = vmatprep.subr.mxu0 0.0
    %2289 = vmatpush1.xpose.msra.mxu0 0.0
    %2290 = vmatprep.subr.mxu0 0.0
    %2291 = vmatpush1.xpose.msra.mxu0 0.0
    %2292 = vmatprep.subr.mxu0 0.0
    %2293 = vmatpush1.xpose.msra.mxu0 0.0
    %2294 = vmatprep.subr.mxu0 0.0
    %2295 = vmatpush1.xpose.msra.mxu0 0.0
    %2296 = vmatprep.subr.mxu0 0.0
    %2297 = vmatpush1.xpose.msra.mxu0 0.0
    %2298 = vmatprep.subr.mxu0 0.0
    %2299 = vmatpush1.xpose.msra.mxu0 0.0
    %2300 = vmatprep.subr.mxu0 0.0
    %2301 = vmatpush1.xpose.msra.mxu0 0.0
    %2302 = vmatprep.subr.mxu0 0.0
    %2303 = vmatpush1.xpose.msra.mxu0 0.0
    %2304 = vmatprep.subr.mxu0 0.0
    %2305 = vmatpush1.xpose.msra.mxu0 0.0
    %2306 = vmatprep.subr.mxu0 0.0
    %2307 = vmatpush1.xpose.msra.mxu0 0.0
    %2308 = vmatprep.subr.mxu0 0.0
    %2309 = vmatpush1.xpose.msra.mxu0 0.0
    %2310 = vmatprep.subr.mxu0 0.0
    %2311 = vmatpush1.xpose.msra.mxu0 0.0
    %2312 = vmatprep.subr.mxu0 0.0
    %2313 = vmatpush1.xpose.msra.mxu0 0.0
    %2314 = vmatprep.subr.mxu0 0.0
    %2315 = vmatpush1.xpose.msra.mxu0 0.0
    %2316 = vmatprep.subr.mxu0 0.0
    %2317 = vmatpush1.xpose.msra.mxu0 %v2284
    %2318 = vmatprep.subr.mxu0 0.0
    %2319 = vmatpush2.xpose.msra.mxu0 0.0
    %2320 = vmatprep.subr.mxu0 0.0
    %2321 = vmatpush2.xpose.msra.mxu0 0.0
    %2322 = vmatprep.subr.mxu0 0.0
    %2323 = vmatpush2.xpose.msra.mxu0 0.0
    %2324 = vmatprep.subr.mxu0 0.0
    %2325 = vmatpush2.xpose.msra.mxu0 0.0
    %2326 = vmatprep.subr.mxu0 0.0
    %2327 = vmatpush2.xpose.msra.mxu0 0.0
    %2328 = vmatprep.subr.mxu0 0.0
    %2329 = vmatpush2.xpose.msra.mxu0 0.0
    %2330 = vmatprep.subr.mxu0 0.0
    %2331 = vmatpush2.xpose.msra.mxu0 0.0
    %2332 = vmatprep.subr.mxu0 0.0
    %2333 = vmatpush2.xpose.msra.mxu0 0.0
    %2334 = vmatprep.subr.mxu0 0.0
    %2335 = vmatpush2.xpose.msra.mxu0 0.0
    %2336 = vmatprep.subr.mxu0 0.0
    %2337 = vmatpush2.xpose.msra.mxu0 0.0
    %2338 = vmatprep.subr.mxu0 0.0
    %2339 = vmatpush2.xpose.msra.mxu0 0.0
    %2340 = vmatprep.subr.mxu0 0.0
    %2341 = vmatpush2.xpose.msra.mxu0 0.0
    %2342 = vmatprep.subr.mxu0 0.0
    %2343 = vmatpush2.xpose.msra.mxu0 0.0
    %2344 = vmatprep.subr.mxu0 0.0
    %2345 = vmatpush2.xpose.msra.mxu0 0.0
    %2346 = vmatprep.subr.mxu0 0.0
    %2347 = vmatpush2.xpose.msra.mxu0 0.0
    %2348 = vmatprep.subr.mxu0 0.0
    %2349 = vmatpush2.xpose.msra.mxu0 0.0
    %2350 = vmatprep.mubr.f32.mxu0 0.0
    %2351 = vmatmul.mubr.f32.gmra.mxu0 %v2282
    %v2352 = vpop.f32.mrf.mxu0
    %v2353 = vadd.f32 %v344, %v2352
    %v2354 = vpop.f32.mrf.mxu0
    %2355 = vdwg.mxu0
    %2357 = vrot.lane.b32.xlu0 %v2276, 96
    %v2358 = vpop.permute.xlu0 %2357
    %v2359 = vsel %vm446, %v2276, 0
    %v2361 = vsel %vm446, %v2358, 0
    %2363 = vmatprep.subr.mxu0 0.0
    %2364 = vmatpush1.xpose.msra.mxu0 0.0
    %2365 = vmatprep.subr.mxu0 0.0
    %2366 = vmatpush1.xpose.msra.mxu0 0.0
    %2367 = vmatprep.subr.mxu0 0.0
    %2368 = vmatpush1.xpose.msra.mxu0 0.0
    %2369 = vmatprep.subr.mxu0 0.0
    %2370 = vmatpush1.xpose.msra.mxu0 0.0
    %2371 = vmatprep.subr.mxu0 0.0
    %2372 = vmatpush1.xpose.msra.mxu0 0.0
    %2373 = vmatprep.subr.mxu0 0.0
    %2374 = vmatpush1.xpose.msra.mxu0 0.0
    %2375 = vmatprep.subr.mxu0 0.0
    %2376 = vmatpush1.xpose.msra.mxu0 0.0
    %2377 = vmatprep.subr.mxu0 0.0
    %2378 = vmatpush1.xpose.msra.mxu0 0.0
    %2379 = vmatprep.subr.mxu0 0.0
    %2380 = vmatpush1.xpose.msra.mxu0 0.0
    %2381 = vmatprep.subr.mxu0 0.0
    %2382 = vmatpush1.xpose.msra.mxu0 0.0
    %2383 = vmatprep.subr.mxu0 0.0
    %2384 = vmatpush1.xpose.msra.mxu0 0.0
    %2385 = vmatprep.subr.mxu0 0.0
    %2386 = vmatpush1.xpose.msra.mxu0 0.0
    %2387 = vmatprep.subr.mxu0 0.0
    %2388 = vmatpush1.xpose.msra.mxu0 0.0
    %2389 = vmatprep.subr.mxu0 0.0
    %2390 = vmatpush1.xpose.msra.mxu0 0.0
    %2391 = vmatprep.subr.mxu0 0.0
    %2392 = vmatpush1.xpose.msra.mxu0 0.0
    %2393 = vmatprep.subr.mxu0 0.0
    %2394 = vmatpush1.xpose.msra.mxu0 %v2361
    %2395 = vmatprep.subr.mxu0 0.0
    %2396 = vmatpush2.xpose.msra.mxu0 0.0
    %2397 = vmatprep.subr.mxu0 0.0
    %2398 = vmatpush2.xpose.msra.mxu0 0.0
    %2399 = vmatprep.subr.mxu0 0.0
    %2400 = vmatpush2.xpose.msra.mxu0 0.0
    %2401 = vmatprep.subr.mxu0 0.0
    %2402 = vmatpush2.xpose.msra.mxu0 0.0
    %2403 = vmatprep.subr.mxu0 0.0
    %2404 = vmatpush2.xpose.msra.mxu0 0.0
    %2405 = vmatprep.subr.mxu0 0.0
    %2406 = vmatpush2.xpose.msra.mxu0 0.0
    %2407 = vmatprep.subr.mxu0 0.0
    %2408 = vmatpush2.xpose.msra.mxu0 0.0
    %2409 = vmatprep.subr.mxu0 0.0
    %2410 = vmatpush2.xpose.msra.mxu0 0.0
    %2411 = vmatprep.subr.mxu0 0.0
    %2412 = vmatpush2.xpose.msra.mxu0 0.0
    %2413 = vmatprep.subr.mxu0 0.0
    %2414 = vmatpush2.xpose.msra.mxu0 0.0
    %2415 = vmatprep.subr.mxu0 0.0
    %2416 = vmatpush2.xpose.msra.mxu0 0.0
    %2417 = vmatprep.subr.mxu0 0.0
    %2418 = vmatpush2.xpose.msra.mxu0 0.0
    %2419 = vmatprep.subr.mxu0 0.0
    %2420 = vmatpush2.xpose.msra.mxu0 0.0
    %2421 = vmatprep.subr.mxu0 0.0
    %2422 = vmatpush2.xpose.msra.mxu0 0.0
    %2423 = vmatprep.subr.mxu0 0.0
    %2424 = vmatpush2.xpose.msra.mxu0 0.0
    %2425 = vmatprep.subr.mxu0 0.0
    %2426 = vmatpush2.xpose.msra.mxu0 0.0
    %2427 = vmatprep.mubr.f32.mxu0 0.0
    %2428 = vmatmul.mubr.f32.gmra.mxu0 %v2359
    %v2429 = vpop.f32.mrf.mxu0
    %v2430 = vadd.f32 %v348, %v2429
    %v2431 = vpop.f32.mrf.mxu0
    %2432 = vdwg.mxu0
    %v2433 = vsel %vm446, %v2353, -inf
    %2434 = vmax.xlane.f32.xlu0 %v2433
    %v2435 = vpop.xlane.xlu0 %2434
    %v2436 = vsel %vm446, %v2430, -inf
    %2437 = vmax.xlane.f32.xlu0 %v2436
    %v2438 = vpop.xlane.xlu0 %2437
    %v2439 = vsub.f32 %v2353, %v2435
    %v2440 = vsub.f32 %v2430, %v2438
    %v2441 = vmul.f32 %v2439, 1.442695
    %v2442 = vpow.pop %v2441
    %v2443 = vmul.f32 %v2440, 1.442695
    %v2444 = vpow.pop %v2443
    %v2445 = vsel %vm446, %v2442, 0.0
    %2446 = vadd.xlane.f32.xlu0 %v2445
    %v2447 = vpop.xlane.xlu0 %2446
    %v2448 = vsel %vm446, %v2444, 0.0
    %2449 = vadd.xlane.f32.xlu0 %v2448
    %v2450 = vpop.xlane.xlu0 %2449
    %v2451 = vrcp.pop %v2447
    %v2452 = vmul.f32 %v2442, %v2451
    %v2453 = vrcp.pop %v2450
    %v2454 = vmul.f32 %v2444, %v2453
    %2455 = vrot.lane.b32.xlu0 %v2271, 64
    %v2456 = vpop.permute.xlu0 %2455
    %v2459 = vsel %vm446, %v2452, 0
    %2461 = vmatprep.subr.mxu0 0.0
    %2462 = vmatpush1.msra.mxu0 0.0
    %2463 = vmatprep.subr.mxu0 0.0
    %2464 = vmatpush1.msra.mxu0 0.0
    %2465 = vmatprep.subr.mxu0 0.0
    %2466 = vmatpush1.msra.mxu0 0.0
    %2467 = vmatprep.subr.mxu0 0.0
    %2468 = vmatpush1.msra.mxu0 0.0
    %2469 = vmatprep.subr.mxu0 0.0
    %2470 = vmatpush1.msra.mxu0 0.0
    %2471 = vmatprep.subr.mxu0 0.0
    %2472 = vmatpush1.msra.mxu0 0.0
    %2473 = vmatprep.subr.mxu0 0.0
    %2474 = vmatpush1.msra.mxu0 0.0
    %2475 = vmatprep.subr.mxu0 0.0
    %2476 = vmatpush1.msra.mxu0 0.0
    %2477 = vmatprep.subr.mxu0 0.0
    %2478 = vmatpush1.msra.mxu0 0.0
    %2479 = vmatprep.subr.mxu0 0.0
    %2480 = vmatpush1.msra.mxu0 0.0
    %2481 = vmatprep.subr.mxu0 0.0
    %2482 = vmatpush1.msra.mxu0 0.0
    %2483 = vmatprep.subr.mxu0 0.0
    %2484 = vmatpush1.msra.mxu0 0.0
    %2485 = vmatprep.subr.mxu0 0.0
    %2486 = vmatpush1.msra.mxu0 0.0
    %2487 = vmatprep.subr.mxu0 0.0
    %2488 = vmatpush1.msra.mxu0 0.0
    %2489 = vmatprep.subr.mxu0 0.0
    %2490 = vmatpush1.msra.mxu0 0.0
    %2491 = vmatprep.subr.mxu0 0.0
    %2492 = vmatpush1.msra.mxu0 %v2456
    %2493 = vmatprep.subr.mxu0 0.0
    %2494 = vmatpush2.msra.mxu0 0.0
    %2495 = vmatprep.subr.mxu0 0.0
    %2496 = vmatpush2.msra.mxu0 0.0
    %2497 = vmatprep.subr.mxu0 0.0
    %2498 = vmatpush2.msra.mxu0 0.0
    %2499 = vmatprep.subr.mxu0 0.0
    %2500 = vmatpush2.msra.mxu0 0.0
    %2501 = vmatprep.subr.mxu0 0.0
    %2502 = vmatpush2.msra.mxu0 0.0
    %2503 = vmatprep.subr.mxu0 0.0
    %2504 = vmatpush2.msra.mxu0 0.0
    %2505 = vmatprep.subr.mxu0 0.0
    %2506 = vmatpush2.msra.mxu0 0.0
    %2507 = vmatprep.subr.mxu0 0.0
    %2508 = vmatpush2.msra.mxu0 0.0
    %2509 = vmatprep.subr.mxu0 0.0
    %2510 = vmatpush2.msra.mxu0 0.0
    %2511 = vmatprep.subr.mxu0 0.0
    %2512 = vmatpush2.msra.mxu0 0.0
    %2513 = vmatprep.subr.mxu0 0.0
    %2514 = vmatpush2.msra.mxu0 0.0
    %2515 = vmatprep.subr.mxu0 0.0
    %2516 = vmatpush2.msra.mxu0 0.0
    %2517 = vmatprep.subr.mxu0 0.0
    %2518 = vmatpush2.msra.mxu0 0.0
    %2519 = vmatprep.subr.mxu0 0.0
    %2520 = vmatpush2.msra.mxu0 0.0
    %2521 = vmatprep.subr.mxu0 0.0
    %2522 = vmatpush2.msra.mxu0 0.0
    %2523 = vmatprep.subr.mxu0 0.0
    %2524 = vmatpush2.msra.mxu0 0.0
    %2525 = vmatprep.mubr.f32.mxu0 0.0
    %2526 = vmatmul.mubr.f32.gmra.mxu0 %v2459
    %v2527 = vpop.f32.mrf.mxu0
    %v2528 = vadd.f32 0.0, %v2527
    %v2529 = vpop.f32.mrf.mxu0
    %2530 = vdwg.mxu0
    %2531 = vrot.lane.b32.xlu0 %v2276, 64
    %v2532 = vpop.permute.xlu0 %2531
    %v2535 = vsel %vm446, %v2454, 0
    %2537 = vmatprep.subr.mxu0 0.0
    %2538 = vmatpush1.msra.mxu0 0.0
    %2539 = vmatprep.subr.mxu0 0.0
    %2540 = vmatpush1.msra.mxu0 0.0
    %2541 = vmatprep.subr.mxu0 0.0
    %2542 = vmatpush1.msra.mxu0 0.0
    %2543 = vmatprep.subr.mxu0 0.0
    %2544 = vmatpush1.msra.mxu0 0.0
    %2545 = vmatprep.subr.mxu0 0.0
    %2546 = vmatpush1.msra.mxu0 0.0
    %2547 = vmatprep.subr.mxu0 0.0
    %2548 = vmatpush1.msra.mxu0 0.0
    %2549 = vmatprep.subr.mxu0 0.0
    %2550 = vmatpush1.msra.mxu0 0.0
    %2551 = vmatprep.subr.mxu0 0.0
    %2552 = vmatpush1.msra.mxu0 0.0
    %2553 = vmatprep.subr.mxu0 0.0
    %2554 = vmatpush1.msra.mxu0 0.0
    %2555 = vmatprep.subr.mxu0 0.0
    %2556 = vmatpush1.msra.mxu0 0.0
    %2557 = vmatprep.subr.mxu0 0.0
    %2558 = vmatpush1.msra.mxu0 0.0
    %2559 = vmatprep.subr.mxu0 0.0
    %2560 = vmatpush1.msra.mxu0 0.0
    %2561 = vmatprep.subr.mxu0 0.0
    %2562 = vmatpush1.msra.mxu0 0.0
    %2563 = vmatprep.subr.mxu0 0.0
    %2564 = vmatpush1.msra.mxu0 0.0
    %2565 = vmatprep.subr.mxu0 0.0
    %2566 = vmatpush1.msra.mxu0 0.0
    %2567 = vmatprep.subr.mxu0 0.0
    %2568 = vmatpush1.msra.mxu0 %v2532
    %2569 = vmatprep.subr.mxu0 0.0
    %2570 = vmatpush2.msra.mxu0 0.0
    %2571 = vmatprep.subr.mxu0 0.0
    %2572 = vmatpush2.msra.mxu0 0.0
    %2573 = vmatprep.subr.mxu0 0.0
    %2574 = vmatpush2.msra.mxu0 0.0
    %2575 = vmatprep.subr.mxu0 0.0
    %2576 = vmatpush2.msra.mxu0 0.0
    %2577 = vmatprep.subr.mxu0 0.0
    %2578 = vmatpush2.msra.mxu0 0.0
    %2579 = vmatprep.subr.mxu0 0.0
    %2580 = vmatpush2.msra.mxu0 0.0
    %2581 = vmatprep.subr.mxu0 0.0
    %2582 = vmatpush2.msra.mxu0 0.0
    %2583 = vmatprep.subr.mxu0 0.0
    %2584 = vmatpush2.msra.mxu0 0.0
    %2585 = vmatprep.subr.mxu0 0.0
    %2586 = vmatpush2.msra.mxu0 0.0
    %2587 = vmatprep.subr.mxu0 0.0
    %2588 = vmatpush2.msra.mxu0 0.0
    %2589 = vmatprep.subr.mxu0 0.0
    %2590 = vmatpush2.msra.mxu0 0.0
    %2591 = vmatprep.subr.mxu0 0.0
    %2592 = vmatpush2.msra.mxu0 0.0
    %2593 = vmatprep.subr.mxu0 0.0
    %2594 = vmatpush2.msra.mxu0 0.0
    %2595 = vmatprep.subr.mxu0 0.0
    %2596 = vmatpush2.msra.mxu0 0.0
    %2597 = vmatprep.subr.mxu0 0.0
    %2598 = vmatpush2.msra.mxu0 0.0
    %2599 = vmatprep.subr.mxu0 0.0
    %2600 = vmatpush2.msra.mxu0 0.0
    %2601 = vmatprep.mubr.f32.mxu0 0.0
    %2602 = vmatmul.mubr.f32.gmra.mxu0 %v2535
    %v2603 = vpop.f32.mrf.mxu0
    %v2604 = vadd.f32 0.0, %v2603
    %v2605 = vpop.f32.mrf.mxu0
    %2606 = vdwg.mxu0
    %2607 = vrot.lane.b32.xlu0 %v2271, 120
    %v2608 = vpop.permute.xlu0 %2607
    %2609 = vrot.lane.b32.xlu0 %v2271, 88
    %v2610 = vpop.permute.xlu0 %2609
    %v2611 = vsel %vm446, %v2608, 0
    %v2613 = vsel %vm446, %v2610, 0
    %2615 = vmatprep.subr.mxu0 0.0
    %2616 = vmatpush1.xpose.msra.mxu0 0.0
    %2617 = vmatprep.subr.mxu0 0.0
    %2618 = vmatpush1.xpose.msra.mxu0 0.0
    %2619 = vmatprep.subr.mxu0 0.0
    %2620 = vmatpush1.xpose.msra.mxu0 0.0
    %2621 = vmatprep.subr.mxu0 0.0
    %2622 = vmatpush1.xpose.msra.mxu0 0.0
    %2623 = vmatprep.subr.mxu0 0.0
    %2624 = vmatpush1.xpose.msra.mxu0 0.0
    %2625 = vmatprep.subr.mxu0 0.0
    %2626 = vmatpush1.xpose.msra.mxu0 0.0
    %2627 = vmatprep.subr.mxu0 0.0
    %2628 = vmatpush1.xpose.msra.mxu0 0.0
    %2629 = vmatprep.subr.mxu0 0.0
    %2630 = vmatpush1.xpose.msra.mxu0 0.0
    %2631 = vmatprep.subr.mxu0 0.0
    %2632 = vmatpush1.xpose.msra.mxu0 0.0
    %2633 = vmatprep.subr.mxu0 0.0
    %2634 = vmatpush1.xpose.msra.mxu0 0.0
    %2635 = vmatprep.subr.mxu0 0.0
    %2636 = vmatpush1.xpose.msra.mxu0 0.0
    %2637 = vmatprep.subr.mxu0 0.0
    %2638 = vmatpush1.xpose.msra.mxu0 0.0
    %2639 = vmatprep.subr.mxu0 0.0
    %2640 = vmatpush1.xpose.msra.mxu0 0.0
    %2641 = vmatprep.subr.mxu0 0.0
    %2642 = vmatpush1.xpose.msra.mxu0 0.0
    %2643 = vmatprep.subr.mxu0 0.0
    %2644 = vmatpush1.xpose.msra.mxu0 0.0
    %2645 = vmatprep.subr.mxu0 0.0
    %2646 = vmatpush1.xpose.msra.mxu0 %v2613
    %2647 = vmatprep.subr.mxu0 0.0
    %2648 = vmatpush2.xpose.msra.mxu0 0.0
    %2649 = vmatprep.subr.mxu0 0.0
    %2650 = vmatpush2.xpose.msra.mxu0 0.0
    %2651 = vmatprep.subr.mxu0 0.0
    %2652 = vmatpush2.xpose.msra.mxu0 0.0
    %2653 = vmatprep.subr.mxu0 0.0
    %2654 = vmatpush2.xpose.msra.mxu0 0.0
    %2655 = vmatprep.subr.mxu0 0.0
    %2656 = vmatpush2.xpose.msra.mxu0 0.0
    %2657 = vmatprep.subr.mxu0 0.0
    %2658 = vmatpush2.xpose.msra.mxu0 0.0
    %2659 = vmatprep.subr.mxu0 0.0
    %2660 = vmatpush2.xpose.msra.mxu0 0.0
    %2661 = vmatprep.subr.mxu0 0.0
    %2662 = vmatpush2.xpose.msra.mxu0 0.0
    %2663 = vmatprep.subr.mxu0 0.0
    %2664 = vmatpush2.xpose.msra.mxu0 0.0
    %2665 = vmatprep.subr.mxu0 0.0
    %2666 = vmatpush2.xpose.msra.mxu0 0.0
    %2667 = vmatprep.subr.mxu0 0.0
    %2668 = vmatpush2.xpose.msra.mxu0 0.0
    %2669 = vmatprep.subr.mxu0 0.0
    %2670 = vmatpush2.xpose.msra.mxu0 0.0
    %2671 = vmatprep.subr.mxu0 0.0
    %2672 = vmatpush2.xpose.msra.mxu0 0.0
    %2673 = vmatprep.subr.mxu0 0.0
    %2674 = vmatpush2.xpose.msra.mxu0 0.0
    %2675 = vmatprep.subr.mxu0 0.0
    %2676 = vmatpush2.xpose.msra.mxu0 0.0
    %2677 = vmatprep.subr.mxu0 0.0
    %2678 = vmatpush2.xpose.msra.mxu0 0.0
    %2679 = vmatprep.mubr.f32.mxu0 0.0
    %2680 = vmatmul.mubr.f32.gmra.mxu0 %v2611
    %v2681 = vpop.f32.mrf.mxu0
    %v2682 = vadd.f32 %v344, %v2681
    %v2683 = vpop.f32.mrf.mxu0
    %2684 = vdwg.mxu0
    %2685 = vrot.lane.b32.xlu0 %v2276, 120
    %v2686 = vpop.permute.xlu0 %2685
    %2687 = vrot.lane.b32.xlu0 %v2276, 88
    %v2688 = vpop.permute.xlu0 %2687
    %v2689 = vsel %vm446, %v2686, 0
    %v2691 = vsel %vm446, %v2688, 0
    %2693 = vmatprep.subr.mxu0 0.0
    %2694 = vmatpush1.xpose.msra.mxu0 0.0
    %2695 = vmatprep.subr.mxu0 0.0
    %2696 = vmatpush1.xpose.msra.mxu0 0.0
    %2697 = vmatprep.subr.mxu0 0.0
    %2698 = vmatpush1.xpose.msra.mxu0 0.0
    %2699 = vmatprep.subr.mxu0 0.0
    %2700 = vmatpush1.xpose.msra.mxu0 0.0
    %2701 = vmatprep.subr.mxu0 0.0
    %2702 = vmatpush1.xpose.msra.mxu0 0.0
    %2703 = vmatprep.subr.mxu0 0.0
    %2704 = vmatpush1.xpose.msra.mxu0 0.0
    %2705 = vmatprep.subr.mxu0 0.0
    %2706 = vmatpush1.xpose.msra.mxu0 0.0
    %2707 = vmatprep.subr.mxu0 0.0
    %2708 = vmatpush1.xpose.msra.mxu0 0.0
    %2709 = vmatprep.subr.mxu0 0.0
    %2710 = vmatpush1.xpose.msra.mxu0 0.0
    %2711 = vmatprep.subr.mxu0 0.0
    %2712 = vmatpush1.xpose.msra.mxu0 0.0
    %2713 = vmatprep.subr.mxu0 0.0
    %2714 = vmatpush1.xpose.msra.mxu0 0.0
    %2715 = vmatprep.subr.mxu0 0.0
    %2716 = vmatpush1.xpose.msra.mxu0 0.0
    %2717 = vmatprep.subr.mxu0 0.0
    %2718 = vmatpush1.xpose.msra.mxu0 0.0
    %2719 = vmatprep.subr.mxu0 0.0
    %2720 = vmatpush1.xpose.msra.mxu0 0.0
    %2721 = vmatprep.subr.mxu0 0.0
    %2722 = vmatpush1.xpose.msra.mxu0 0.0
    %2723 = vmatprep.subr.mxu0 0.0
    %2724 = vmatpush1.xpose.msra.mxu0 %v2691
    %2725 = vmatprep.subr.mxu0 0.0
    %2726 = vmatpush2.xpose.msra.mxu0 0.0
    %2727 = vmatprep.subr.mxu0 0.0
    %2728 = vmatpush2.xpose.msra.mxu0 0.0
    %2729 = vmatprep.subr.mxu0 0.0
    %2730 = vmatpush2.xpose.msra.mxu0 0.0
    %2731 = vmatprep.subr.mxu0 0.0
    %2732 = vmatpush2.xpose.msra.mxu0 0.0
    %2733 = vmatprep.subr.mxu0 0.0
    %2734 = vmatpush2.xpose.msra.mxu0 0.0
    %2735 = vmatprep.subr.mxu0 0.0
    %2736 = vmatpush2.xpose.msra.mxu0 0.0
    %2737 = vmatprep.subr.mxu0 0.0
    %2738 = vmatpush2.xpose.msra.mxu0 0.0
    %2739 = vmatprep.subr.mxu0 0.0
    %2740 = vmatpush2.xpose.msra.mxu0 0.0
    %2741 = vmatprep.subr.mxu0 0.0
    %2742 = vmatpush2.xpose.msra.mxu0 0.0
    %2743 = vmatprep.subr.mxu0 0.0
    %2744 = vmatpush2.xpose.msra.mxu0 0.0
    %2745 = vmatprep.subr.mxu0 0.0
    %2746 = vmatpush2.xpose.msra.mxu0 0.0
    %2747 = vmatprep.subr.mxu0 0.0
    %2748 = vmatpush2.xpose.msra.mxu0 0.0
    %2749 = vmatprep.subr.mxu0 0.0
    %2750 = vmatpush2.xpose.msra.mxu0 0.0
    %2751 = vmatprep.subr.mxu0 0.0
    %2752 = vmatpush2.xpose.msra.mxu0 0.0
    %2753 = vmatprep.subr.mxu0 0.0
    %2754 = vmatpush2.xpose.msra.mxu0 0.0
    %2755 = vmatprep.subr.mxu0 0.0
    %2756 = vmatpush2.xpose.msra.mxu0 0.0
    %2757 = vmatprep.mubr.f32.mxu0 0.0
    %2758 = vmatmul.mubr.f32.gmra.mxu0 %v2689
    %v2759 = vpop.f32.mrf.mxu0
    %v2760 = vadd.f32 %v348, %v2759
    %v2761 = vpop.f32.mrf.mxu0
    %2762 = vdwg.mxu0
    %v2763 = vsel %vm446, %v2682, -inf
    %2764 = vmax.xlane.f32.xlu0 %v2763
    %v2765 = vpop.xlane.xlu0 %2764
    %v2766 = vsel %vm446, %v2760, -inf
    %2767 = vmax.xlane.f32.xlu0 %v2766
    %v2768 = vpop.xlane.xlu0 %2767
    %v2769 = vsub.f32 %v2682, %v2765
    %v2770 = vsub.f32 %v2760, %v2768
    %v2771 = vmul.f32 %v2769, 1.442695
    %v2772 = vpow.pop %v2771
    %v2773 = vmul.f32 %v2770, 1.442695
    %v2774 = vpow.pop %v2773
    %v2775 = vsel %vm446, %v2772, 0.0
    %2776 = vadd.xlane.f32.xlu0 %v2775
    %v2777 = vpop.xlane.xlu0 %2776
    %v2778 = vsel %vm446, %v2774, 0.0
    %2779 = vadd.xlane.f32.xlu0 %v2778
    %v2780 = vpop.xlane.xlu0 %2779
    %v2781 = vrcp.pop %v2777
    %v2782 = vmul.f32 %v2772, %v2781
    %v2783 = vrcp.pop %v2780
    %v2784 = vmul.f32 %v2774, %v2783
    %2785 = vrot.lane.b32.xlu0 %v2271, 56
    %v2786 = vpop.permute.xlu0 %2785
    %v2789 = vsel %vm446, %v2782, 0
    %2791 = vmatprep.subr.mxu0 0.0
    %2792 = vmatpush1.msra.mxu0 0.0
    %2793 = vmatprep.subr.mxu0 0.0
    %2794 = vmatpush1.msra.mxu0 0.0
    %2795 = vmatprep.subr.mxu0 0.0
    %2796 = vmatpush1.msra.mxu0 0.0
    %2797 = vmatprep.subr.mxu0 0.0
    %2798 = vmatpush1.msra.mxu0 0.0
    %2799 = vmatprep.subr.mxu0 0.0
    %2800 = vmatpush1.msra.mxu0 0.0
    %2801 = vmatprep.subr.mxu0 0.0
    %2802 = vmatpush1.msra.mxu0 0.0
    %2803 = vmatprep.subr.mxu0 0.0
    %2804 = vmatpush1.msra.mxu0 0.0
    %2805 = vmatprep.subr.mxu0 0.0
    %2806 = vmatpush1.msra.mxu0 0.0
    %2807 = vmatprep.subr.mxu0 0.0
    %2808 = vmatpush1.msra.mxu0 0.0
    %2809 = vmatprep.subr.mxu0 0.0
    %2810 = vmatpush1.msra.mxu0 0.0
    %2811 = vmatprep.subr.mxu0 0.0
    %2812 = vmatpush1.msra.mxu0 0.0
    %2813 = vmatprep.subr.mxu0 0.0
    %2814 = vmatpush1.msra.mxu0 0.0
    %2815 = vmatprep.subr.mxu0 0.0
    %2816 = vmatpush1.msra.mxu0 0.0
    %2817 = vmatprep.subr.mxu0 0.0
    %2818 = vmatpush1.msra.mxu0 0.0
    %2819 = vmatprep.subr.mxu0 0.0
    %2820 = vmatpush1.msra.mxu0 0.0
    %2821 = vmatprep.subr.mxu0 0.0
    %2822 = vmatpush1.msra.mxu0 %v2786
    %2823 = vmatprep.subr.mxu0 0.0
    %2824 = vmatpush2.msra.mxu0 0.0
    %2825 = vmatprep.subr.mxu0 0.0
    %2826 = vmatpush2.msra.mxu0 0.0
    %2827 = vmatprep.subr.mxu0 0.0
    %2828 = vmatpush2.msra.mxu0 0.0
    %2829 = vmatprep.subr.mxu0 0.0
    %2830 = vmatpush2.msra.mxu0 0.0
    %2831 = vmatprep.subr.mxu0 0.0
    %2832 = vmatpush2.msra.mxu0 0.0
    %2833 = vmatprep.subr.mxu0 0.0
    %2834 = vmatpush2.msra.mxu0 0.0
    %2835 = vmatprep.subr.mxu0 0.0
    %2836 = vmatpush2.msra.mxu0 0.0
    %2837 = vmatprep.subr.mxu0 0.0
    %2838 = vmatpush2.msra.mxu0 0.0
    %2839 = vmatprep.subr.mxu0 0.0
    %2840 = vmatpush2.msra.mxu0 0.0
    %2841 = vmatprep.subr.mxu0 0.0
    %2842 = vmatpush2.msra.mxu0 0.0
    %2843 = vmatprep.subr.mxu0 0.0
    %2844 = vmatpush2.msra.mxu0 0.0
    %2845 = vmatprep.subr.mxu0 0.0
    %2846 = vmatpush2.msra.mxu0 0.0
    %2847 = vmatprep.subr.mxu0 0.0
    %2848 = vmatpush2.msra.mxu0 0.0
    %2849 = vmatprep.subr.mxu0 0.0
    %2850 = vmatpush2.msra.mxu0 0.0
    %2851 = vmatprep.subr.mxu0 0.0
    %2852 = vmatpush2.msra.mxu0 0.0
    %2853 = vmatprep.subr.mxu0 0.0
    %2854 = vmatpush2.msra.mxu0 0.0
    %2855 = vmatprep.mubr.f32.mxu0 0.0
    %2856 = vmatmul.mubr.f32.gmra.mxu0 %v2789
    %v2857 = vpop.f32.mrf.mxu0
    %v2858 = vadd.f32 0.0, %v2857
    %v2859 = vpop.f32.mrf.mxu0
    %2860 = vdwg.mxu0
    %2861 = vrot.lane.b32.xlu0 %v2276, 56
    %v2862 = vpop.permute.xlu0 %2861
    %v2865 = vsel %vm446, %v2784, 0
    %2867 = vmatprep.subr.mxu0 0.0
    %2868 = vmatpush1.msra.mxu0 0.0
    %2869 = vmatprep.subr.mxu0 0.0
    %2870 = vmatpush1.msra.mxu0 0.0
    %2871 = vmatprep.subr.mxu0 0.0
    %2872 = vmatpush1.msra.mxu0 0.0
    %2873 = vmatprep.subr.mxu0 0.0
    %2874 = vmatpush1.msra.mxu0 0.0
    %2875 = vmatprep.subr.mxu0 0.0
    %2876 = vmatpush1.msra.mxu0 0.0
    %2877 = vmatprep.subr.mxu0 0.0
    %2878 = vmatpush1.msra.mxu0 0.0
    %2879 = vmatprep.subr.mxu0 0.0
    %2880 = vmatpush1.msra.mxu0 0.0
    %2881 = vmatprep.subr.mxu0 0.0
    %2882 = vmatpush1.msra.mxu0 0.0
    %2883 = vmatprep.subr.mxu0 0.0
    %2884 = vmatpush1.msra.mxu0 0.0
    %2885 = vmatprep.subr.mxu0 0.0
    %2886 = vmatpush1.msra.mxu0 0.0
    %2887 = vmatprep.subr.mxu0 0.0
    %2888 = vmatpush1.msra.mxu0 0.0
    %2889 = vmatprep.subr.mxu0 0.0
    %2890 = vmatpush1.msra.mxu0 0.0
    %2891 = vmatprep.subr.mxu0 0.0
    %2892 = vmatpush1.msra.mxu0 0.0
    %2893 = vmatprep.subr.mxu0 0.0
    %2894 = vmatpush1.msra.mxu0 0.0
    %2895 = vmatprep.subr.mxu0 0.0
    %2896 = vmatpush1.msra.mxu0 0.0
    %2897 = vmatprep.subr.mxu0 0.0
    %2898 = vmatpush1.msra.mxu0 %v2862
    %2899 = vmatprep.subr.mxu0 0.0
    %2900 = vmatpush2.msra.mxu0 0.0
    %2901 = vmatprep.subr.mxu0 0.0
    %2902 = vmatpush2.msra.mxu0 0.0
    %2903 = vmatprep.subr.mxu0 0.0
    %2904 = vmatpush2.msra.mxu0 0.0
    %2905 = vmatprep.subr.mxu0 0.0
    %2906 = vmatpush2.msra.mxu0 0.0
    %2907 = vmatprep.subr.mxu0 0.0
    %2908 = vmatpush2.msra.mxu0 0.0
    %2909 = vmatprep.subr.mxu0 0.0
    %2910 = vmatpush2.msra.mxu0 0.0
    %2911 = vmatprep.subr.mxu0 0.0
    %2912 = vmatpush2.msra.mxu0 0.0
    %2913 = vmatprep.subr.mxu0 0.0
    %2914 = vmatpush2.msra.mxu0 0.0
    %2915 = vmatprep.subr.mxu0 0.0
    %2916 = vmatpush2.msra.mxu0 0.0
    %2917 = vmatprep.subr.mxu0 0.0
    %2918 = vmatpush2.msra.mxu0 0.0
    %2919 = vmatprep.subr.mxu0 0.0
    %2920 = vmatpush2.msra.mxu0 0.0
    %2921 = vmatprep.subr.mxu0 0.0
    %2922 = vmatpush2.msra.mxu0 0.0
    %2923 = vmatprep.subr.mxu0 0.0
    %2924 = vmatpush2.msra.mxu0 0.0
    %2925 = vmatprep.subr.mxu0 0.0
    %2926 = vmatpush2.msra.mxu0 0.0
    %2927 = vmatprep.subr.mxu0 0.0
    %2928 = vmatpush2.msra.mxu0 0.0
    %2929 = vmatprep.subr.mxu0 0.0
    %2930 = vmatpush2.msra.mxu0 0.0
    %2931 = vmatprep.mubr.f32.mxu0 0.0
    %2932 = vmatmul.mubr.f32.gmra.mxu0 %v2865
    %v2933 = vpop.f32.mrf.mxu0
    %v2934 = vadd.f32 0.0, %v2933
    %v2935 = vpop.f32.mrf.mxu0
    %2936 = vdwg.mxu0
    %2937 = vrot.lane.b32.xlu0 %v2271, 112
    %v2938 = vpop.permute.xlu0 %2937
    %2939 = vrot.lane.b32.xlu0 %v2271, 80
    %v2940 = vpop.permute.xlu0 %2939
    %v2941 = vsel %vm446, %v2938, 0
    %v2943 = vsel %vm446, %v2940, 0
    %2945 = vmatprep.subr.mxu0 0.0
    %2946 = vmatpush1.xpose.msra.mxu0 0.0
    %2947 = vmatprep.subr.mxu0 0.0
    %2948 = vmatpush1.xpose.msra.mxu0 0.0
    %2949 = vmatprep.subr.mxu0 0.0
    %2950 = vmatpush1.xpose.msra.mxu0 0.0
    %2951 = vmatprep.subr.mxu0 0.0
    %2952 = vmatpush1.xpose.msra.mxu0 0.0
    %2953 = vmatprep.subr.mxu0 0.0
    %2954 = vmatpush1.xpose.msra.mxu0 0.0
    %2955 = vmatprep.subr.mxu0 0.0
    %2956 = vmatpush1.xpose.msra.mxu0 0.0
    %2957 = vmatprep.subr.mxu0 0.0
    %2958 = vmatpush1.xpose.msra.mxu0 0.0
    %2959 = vmatprep.subr.mxu0 0.0
    %2960 = vmatpush1.xpose.msra.mxu0 0.0
    %2961 = vmatprep.subr.mxu0 0.0
    %2962 = vmatpush1.xpose.msra.mxu0 0.0
    %2963 = vmatprep.subr.mxu0 0.0
    %2964 = vmatpush1.xpose.msra.mxu0 0.0
    %2965 = vmatprep.subr.mxu0 0.0
    %2966 = vmatpush1.xpose.msra.mxu0 0.0
    %2967 = vmatprep.subr.mxu0 0.0
    %2968 = vmatpush1.xpose.msra.mxu0 0.0
    %2969 = vmatprep.subr.mxu0 0.0
    %2970 = vmatpush1.xpose.msra.mxu0 0.0
    %2971 = vmatprep.subr.mxu0 0.0
    %2972 = vmatpush1.xpose.msra.mxu0 0.0
    %2973 = vmatprep.subr.mxu0 0.0
    %2974 = vmatpush1.xpose.msra.mxu0 0.0
    %2975 = vmatprep.subr.mxu0 0.0
    %2976 = vmatpush1.xpose.msra.mxu0 %v2943
    %2977 = vmatprep.subr.mxu0 0.0
    %2978 = vmatpush2.xpose.msra.mxu0 0.0
    %2979 = vmatprep.subr.mxu0 0.0
    %2980 = vmatpush2.xpose.msra.mxu0 0.0
    %2981 = vmatprep.subr.mxu0 0.0
    %2982 = vmatpush2.xpose.msra.mxu0 0.0
    %2983 = vmatprep.subr.mxu0 0.0
    %2984 = vmatpush2.xpose.msra.mxu0 0.0
    %2985 = vmatprep.subr.mxu0 0.0
    %2986 = vmatpush2.xpose.msra.mxu0 0.0
    %2987 = vmatprep.subr.mxu0 0.0
    %2988 = vmatpush2.xpose.msra.mxu0 0.0
    %2989 = vmatprep.subr.mxu0 0.0
    %2990 = vmatpush2.xpose.msra.mxu0 0.0
    %2991 = vmatprep.subr.mxu0 0.0
    %2992 = vmatpush2.xpose.msra.mxu0 0.0
    %2993 = vmatprep.subr.mxu0 0.0
    %2994 = vmatpush2.xpose.msra.mxu0 0.0
    %2995 = vmatprep.subr.mxu0 0.0
    %2996 = vmatpush2.xpose.msra.mxu0 0.0
    %2997 = vmatprep.subr.mxu0 0.0
    %2998 = vmatpush2.xpose.msra.mxu0 0.0
    %2999 = vmatprep.subr.mxu0 0.0
    %3000 = vmatpush2.xpose.msra.mxu0 0.0
    %3001 = vmatprep.subr.mxu0 0.0
    %3002 = vmatpush2.xpose.msra.mxu0 0.0
    %3003 = vmatprep.subr.mxu0 0.0
    %3004 = vmatpush2.xpose.msra.mxu0 0.0
    %3005 = vmatprep.subr.mxu0 0.0
    %3006 = vmatpush2.xpose.msra.mxu0 0.0
    %3007 = vmatprep.subr.mxu0 0.0
    %3008 = vmatpush2.xpose.msra.mxu0 0.0
    %3009 = vmatprep.mubr.f32.mxu0 0.0
    %3010 = vmatmul.mubr.f32.gmra.mxu0 %v2941
    %v3011 = vpop.f32.mrf.mxu0
    %v3012 = vadd.f32 %v344, %v3011
    %v3013 = vpop.f32.mrf.mxu0
    %3014 = vdwg.mxu0
    %3015 = vrot.lane.b32.xlu0 %v2276, 112
    %v3016 = vpop.permute.xlu0 %3015
    %3017 = vrot.lane.b32.xlu0 %v2276, 80
    %v3018 = vpop.permute.xlu0 %3017
    %v3019 = vsel %vm446, %v3016, 0
    %v3021 = vsel %vm446, %v3018, 0
    %3023 = vmatprep.subr.mxu0 0.0
    %3024 = vmatpush1.xpose.msra.mxu0 0.0
    %3025 = vmatprep.subr.mxu0 0.0
    %3026 = vmatpush1.xpose.msra.mxu0 0.0
    %3027 = vmatprep.subr.mxu0 0.0
    %3028 = vmatpush1.xpose.msra.mxu0 0.0
    %3029 = vmatprep.subr.mxu0 0.0
    %3030 = vmatpush1.xpose.msra.mxu0 0.0
    %3031 = vmatprep.subr.mxu0 0.0
    %3032 = vmatpush1.xpose.msra.mxu0 0.0
    %3033 = vmatprep.subr.mxu0 0.0
    %3034 = vmatpush1.xpose.msra.mxu0 0.0
    %3035 = vmatprep.subr.mxu0 0.0
    %3036 = vmatpush1.xpose.msra.mxu0 0.0
    %3037 = vmatprep.subr.mxu0 0.0
    %3038 = vmatpush1.xpose.msra.mxu0 0.0
    %3039 = vmatprep.subr.mxu0 0.0
    %3040 = vmatpush1.xpose.msra.mxu0 0.0
    %3041 = vmatprep.subr.mxu0 0.0
    %3042 = vmatpush1.xpose.msra.mxu0 0.0
    %3043 = vmatprep.subr.mxu0 0.0
    %3044 = vmatpush1.xpose.msra.mxu0 0.0
    %3045 = vmatprep.subr.mxu0 0.0
    %3046 = vmatpush1.xpose.msra.mxu0 0.0
    %3047 = vmatprep.subr.mxu0 0.0
    %3048 = vmatpush1.xpose.msra.mxu0 0.0
    %3049 = vmatprep.subr.mxu0 0.0
    %3050 = vmatpush1.xpose.msra.mxu0 0.0
    %3051 = vmatprep.subr.mxu0 0.0
    %3052 = vmatpush1.xpose.msra.mxu0 0.0
    %3053 = vmatprep.subr.mxu0 0.0
    %3054 = vmatpush1.xpose.msra.mxu0 %v3021
    %3055 = vmatprep.subr.mxu0 0.0
    %3056 = vmatpush2.xpose.msra.mxu0 0.0
    %3057 = vmatprep.subr.mxu0 0.0
    %3058 = vmatpush2.xpose.msra.mxu0 0.0
    %3059 = vmatprep.subr.mxu0 0.0
    %3060 = vmatpush2.xpose.msra.mxu0 0.0
    %3061 = vmatprep.subr.mxu0 0.0
    %3062 = vmatpush2.xpose.msra.mxu0 0.0
    %3063 = vmatprep.subr.mxu0 0.0
    %3064 = vmatpush2.xpose.msra.mxu0 0.0
    %3065 = vmatprep.subr.mxu0 0.0
    %3066 = vmatpush2.xpose.msra.mxu0 0.0
    %3067 = vmatprep.subr.mxu0 0.0
    %3068 = vmatpush2.xpose.msra.mxu0 0.0
    %3069 = vmatprep.subr.mxu0 0.0
    %3070 = vmatpush2.xpose.msra.mxu0 0.0
    %3071 = vmatprep.subr.mxu0 0.0
    %3072 = vmatpush2.xpose.msra.mxu0 0.0
    %3073 = vmatprep.subr.mxu0 0.0
    %3074 = vmatpush2.xpose.msra.mxu0 0.0
    %3075 = vmatprep.subr.mxu0 0.0
    %3076 = vmatpush2.xpose.msra.mxu0 0.0
    %3077 = vmatprep.subr.mxu0 0.0
    %3078 = vmatpush2.xpose.msra.mxu0 0.0
    %3079 = vmatprep.subr.mxu0 0.0
    %3080 = vmatpush2.xpose.msra.mxu0 0.0
    %3081 = vmatprep.subr.mxu0 0.0
    %3082 = vmatpush2.xpose.msra.mxu0 0.0
    %3083 = vmatprep.subr.mxu0 0.0
    %3084 = vmatpush2.xpose.msra.mxu0 0.0
    %3085 = vmatprep.subr.mxu0 0.0
    %3086 = vmatpush2.xpose.msra.mxu0 0.0
    %3087 = vmatprep.mubr.f32.mxu0 0.0
    %3088 = vmatmul.mubr.f32.gmra.mxu0 %v3019
    %v3089 = vpop.f32.mrf.mxu0
    %v3090 = vadd.f32 %v348, %v3089
    %v3091 = vpop.f32.mrf.mxu0
    %3092 = vdwg.mxu0
    %v3093 = vsel %vm446, %v3012, -inf
    %3094 = vmax.xlane.f32.xlu0 %v3093
    %v3095 = vpop.xlane.xlu0 %3094
    %v3096 = vsel %vm446, %v3090, -inf
    %3097 = vmax.xlane.f32.xlu0 %v3096
    %v3098 = vpop.xlane.xlu0 %3097
    %v3099 = vsub.f32 %v3012, %v3095
    %v3100 = vsub.f32 %v3090, %v3098
    %v3101 = vmul.f32 %v3099, 1.442695
    %v3102 = vpow.pop %v3101
    %v3103 = vmul.f32 %v3100, 1.442695
    %v3104 = vpow.pop %v3103
    %v3105 = vsel %vm446, %v3102, 0.0
    %3106 = vadd.xlane.f32.xlu0 %v3105
    %v3107 = vpop.xlane.xlu0 %3106
    %v3108 = vsel %vm446, %v3104, 0.0
    %3109 = vadd.xlane.f32.xlu0 %v3108
    %v3110 = vpop.xlane.xlu0 %3109
    %v3111 = vrcp.pop %v3107
    %v3112 = vmul.f32 %v3102, %v3111
    %v3113 = vrcp.pop %v3110
    %v3114 = vmul.f32 %v3104, %v3113
    %3115 = vrot.lane.b32.xlu0 %v2271, 48
    %v3116 = vpop.permute.xlu0 %3115
    %v3119 = vsel %vm446, %v3112, 0
    %3121 = vmatprep.subr.mxu0 0.0
    %3122 = vmatpush1.msra.mxu0 0.0
    %3123 = vmatprep.subr.mxu0 0.0
    %3124 = vmatpush1.msra.mxu0 0.0
    %3125 = vmatprep.subr.mxu0 0.0
    %3126 = vmatpush1.msra.mxu0 0.0
    %3127 = vmatprep.subr.mxu0 0.0
    %3128 = vmatpush1.msra.mxu0 0.0
    %3129 = vmatprep.subr.mxu0 0.0
    %3130 = vmatpush1.msra.mxu0 0.0
    %3131 = vmatprep.subr.mxu0 0.0
    %3132 = vmatpush1.msra.mxu0 0.0
    %3133 = vmatprep.subr.mxu0 0.0
    %3134 = vmatpush1.msra.mxu0 0.0
    %3135 = vmatprep.subr.mxu0 0.0
    %3136 = vmatpush1.msra.mxu0 0.0
    %3137 = vmatprep.subr.mxu0 0.0
    %3138 = vmatpush1.msra.mxu0 0.0
    %3139 = vmatprep.subr.mxu0 0.0
    %3140 = vmatpush1.msra.mxu0 0.0
    %3141 = vmatprep.subr.mxu0 0.0
    %3142 = vmatpush1.msra.mxu0 0.0
    %3143 = vmatprep.subr.mxu0 0.0
    %3144 = vmatpush1.msra.mxu0 0.0
    %3145 = vmatprep.subr.mxu0 0.0
    %3146 = vmatpush1.msra.mxu0 0.0
    %3147 = vmatprep.subr.mxu0 0.0
    %3148 = vmatpush1.msra.mxu0 0.0
    %3149 = vmatprep.subr.mxu0 0.0
    %3150 = vmatpush1.msra.mxu0 0.0
    %3151 = vmatprep.subr.mxu0 0.0
    %3152 = vmatpush1.msra.mxu0 %v3116
    %3153 = vmatprep.subr.mxu0 0.0
    %3154 = vmatpush2.msra.mxu0 0.0
    %3155 = vmatprep.subr.mxu0 0.0
    %3156 = vmatpush2.msra.mxu0 0.0
    %3157 = vmatprep.subr.mxu0 0.0
    %3158 = vmatpush2.msra.mxu0 0.0
    %3159 = vmatprep.subr.mxu0 0.0
    %3160 = vmatpush2.msra.mxu0 0.0
    %3161 = vmatprep.subr.mxu0 0.0
    %3162 = vmatpush2.msra.mxu0 0.0
    %3163 = vmatprep.subr.mxu0 0.0
    %3164 = vmatpush2.msra.mxu0 0.0
    %3165 = vmatprep.subr.mxu0 0.0
    %3166 = vmatpush2.msra.mxu0 0.0
    %3167 = vmatprep.subr.mxu0 0.0
    %3168 = vmatpush2.msra.mxu0 0.0
    %3169 = vmatprep.subr.mxu0 0.0
    %3170 = vmatpush2.msra.mxu0 0.0
    %3171 = vmatprep.subr.mxu0 0.0
    %3172 = vmatpush2.msra.mxu0 0.0
    %3173 = vmatprep.subr.mxu0 0.0
    %3174 = vmatpush2.msra.mxu0 0.0
    %3175 = vmatprep.subr.mxu0 0.0
    %3176 = vmatpush2.msra.mxu0 0.0
    %3177 = vmatprep.subr.mxu0 0.0
    %3178 = vmatpush2.msra.mxu0 0.0
    %3179 = vmatprep.subr.mxu0 0.0
    %3180 = vmatpush2.msra.mxu0 0.0
    %3181 = vmatprep.subr.mxu0 0.0
    %3182 = vmatpush2.msra.mxu0 0.0
    %3183 = vmatprep.subr.mxu0 0.0
    %3184 = vmatpush2.msra.mxu0 0.0
    %3185 = vmatprep.mubr.f32.mxu0 0.0
    %3186 = vmatmul.mubr.f32.gmra.mxu0 %v3119
    %v3187 = vpop.f32.mrf.mxu0
    %v3188 = vadd.f32 0.0, %v3187
    %v3189 = vpop.f32.mrf.mxu0
    %3190 = vdwg.mxu0
    %3191 = vrot.lane.b32.xlu0 %v2276, 48
    %v3192 = vpop.permute.xlu0 %3191
    %v3195 = vsel %vm446, %v3114, 0
    %3197 = vmatprep.subr.mxu0 0.0
    %3198 = vmatpush1.msra.mxu0 0.0
    %3199 = vmatprep.subr.mxu0 0.0
    %3200 = vmatpush1.msra.mxu0 0.0
    %3201 = vmatprep.subr.mxu0 0.0
    %3202 = vmatpush1.msra.mxu0 0.0
    %3203 = vmatprep.subr.mxu0 0.0
    %3204 = vmatpush1.msra.mxu0 0.0
    %3205 = vmatprep.subr.mxu0 0.0
    %3206 = vmatpush1.msra.mxu0 0.0
    %3207 = vmatprep.subr.mxu0 0.0
    %3208 = vmatpush1.msra.mxu0 0.0
    %3209 = vmatprep.subr.mxu0 0.0
    %3210 = vmatpush1.msra.mxu0 0.0
    %3211 = vmatprep.subr.mxu0 0.0
    %3212 = vmatpush1.msra.mxu0 0.0
    %3213 = vmatprep.subr.mxu0 0.0
    %3214 = vmatpush1.msra.mxu0 0.0
    %3215 = vmatprep.subr.mxu0 0.0
    %3216 = vmatpush1.msra.mxu0 0.0
    %3217 = vmatprep.subr.mxu0 0.0
    %3218 = vmatpush1.msra.mxu0 0.0
    %3219 = vmatprep.subr.mxu0 0.0
    %3220 = vmatpush1.msra.mxu0 0.0
    %3221 = vmatprep.subr.mxu0 0.0
    %3222 = vmatpush1.msra.mxu0 0.0
    %3223 = vmatprep.subr.mxu0 0.0
    %3224 = vmatpush1.msra.mxu0 0.0
    %3225 = vmatprep.subr.mxu0 0.0
    %3226 = vmatpush1.msra.mxu0 0.0
    %3227 = vmatprep.subr.mxu0 0.0
    %3228 = vmatpush1.msra.mxu0 %v3192
    %3229 = vmatprep.subr.mxu0 0.0
    %3230 = vmatpush2.msra.mxu0 0.0
    %3231 = vmatprep.subr.mxu0 0.0
    %3232 = vmatpush2.msra.mxu0 0.0
    %3233 = vmatprep.subr.mxu0 0.0
    %3234 = vmatpush2.msra.mxu0 0.0
    %3235 = vmatprep.subr.mxu0 0.0
    %3236 = vmatpush2.msra.mxu0 0.0
    %3237 = vmatprep.subr.mxu0 0.0
    %3238 = vmatpush2.msra.mxu0 0.0
    %3239 = vmatprep.subr.mxu0 0.0
    %3240 = vmatpush2.msra.mxu0 0.0
    %3241 = vmatprep.subr.mxu0 0.0
    %3242 = vmatpush2.msra.mxu0 0.0
    %3243 = vmatprep.subr.mxu0 0.0
    %3244 = vmatpush2.msra.mxu0 0.0
    %3245 = vmatprep.subr.mxu0 0.0
    %3246 = vmatpush2.msra.mxu0 0.0
    %3247 = vmatprep.subr.mxu0 0.0
    %3248 = vmatpush2.msra.mxu0 0.0
    %3249 = vmatprep.subr.mxu0 0.0
    %3250 = vmatpush2.msra.mxu0 0.0
    %3251 = vmatprep.subr.mxu0 0.0
    %3252 = vmatpush2.msra.mxu0 0.0
    %3253 = vmatprep.subr.mxu0 0.0
    %3254 = vmatpush2.msra.mxu0 0.0
    %3255 = vmatprep.subr.mxu0 0.0
    %3256 = vmatpush2.msra.mxu0 0.0
    %3257 = vmatprep.subr.mxu0 0.0
    %3258 = vmatpush2.msra.mxu0 0.0
    %3259 = vmatprep.subr.mxu0 0.0
    %3260 = vmatpush2.msra.mxu0 0.0
    %3261 = vmatprep.mubr.f32.mxu0 0.0
    %3262 = vmatmul.mubr.f32.gmra.mxu0 %v3195
    %v3263 = vpop.f32.mrf.mxu0
    %v3264 = vadd.f32 0.0, %v3263
    %v3265 = vpop.f32.mrf.mxu0
    %3266 = vdwg.mxu0
    %3267 = vrot.lane.b32.xlu0 %v2271, 104
    %v3268 = vpop.permute.xlu0 %3267
    %3269 = vrot.lane.b32.xlu0 %v2271, 72
    %v3270 = vpop.permute.xlu0 %3269
    %v3271 = vsel %vm446, %v3268, 0
    %v3273 = vsel %vm446, %v3270, 0
    %3275 = vmatprep.subr.mxu0 0.0
    %3276 = vmatpush1.xpose.msra.mxu0 0.0
    %3277 = vmatprep.subr.mxu0 0.0
    %3278 = vmatpush1.xpose.msra.mxu0 0.0
    %3279 = vmatprep.subr.mxu0 0.0
    %3280 = vmatpush1.xpose.msra.mxu0 0.0
    %3281 = vmatprep.subr.mxu0 0.0
    %3282 = vmatpush1.xpose.msra.mxu0 0.0
    %3283 = vmatprep.subr.mxu0 0.0
    %3284 = vmatpush1.xpose.msra.mxu0 0.0
    %3285 = vmatprep.subr.mxu0 0.0
    %3286 = vmatpush1.xpose.msra.mxu0 0.0
    %3287 = vmatprep.subr.mxu0 0.0
    %3288 = vmatpush1.xpose.msra.mxu0 0.0
    %3289 = vmatprep.subr.mxu0 0.0
    %3290 = vmatpush1.xpose.msra.mxu0 0.0
    %3291 = vmatprep.subr.mxu0 0.0
    %3292 = vmatpush1.xpose.msra.mxu0 0.0
    %3293 = vmatprep.subr.mxu0 0.0
    %3294 = vmatpush1.xpose.msra.mxu0 0.0
    %3295 = vmatprep.subr.mxu0 0.0
    %3296 = vmatpush1.xpose.msra.mxu0 0.0
    %3297 = vmatprep.subr.mxu0 0.0
    %3298 = vmatpush1.xpose.msra.mxu0 0.0
    %3299 = vmatprep.subr.mxu0 0.0
    %3300 = vmatpush1.xpose.msra.mxu0 0.0
    %3301 = vmatprep.subr.mxu0 0.0
    %3302 = vmatpush1.xpose.msra.mxu0 0.0
    %3303 = vmatprep.subr.mxu0 0.0
    %3304 = vmatpush1.xpose.msra.mxu0 0.0
    %3305 = vmatprep.subr.mxu0 0.0
    %3306 = vmatpush1.xpose.msra.mxu0 %v3273
    %3307 = vmatprep.subr.mxu0 0.0
    %3308 = vmatpush2.xpose.msra.mxu0 0.0
    %3309 = vmatprep.subr.mxu0 0.0
    %3310 = vmatpush2.xpose.msra.mxu0 0.0
    %3311 = vmatprep.subr.mxu0 0.0
    %3312 = vmatpush2.xpose.msra.mxu0 0.0
    %3313 = vmatprep.subr.mxu0 0.0
    %3314 = vmatpush2.xpose.msra.mxu0 0.0
    %3315 = vmatprep.subr.mxu0 0.0
    %3316 = vmatpush2.xpose.msra.mxu0 0.0
    %3317 = vmatprep.subr.mxu0 0.0
    %3318 = vmatpush2.xpose.msra.mxu0 0.0
    %3319 = vmatprep.subr.mxu0 0.0
    %3320 = vmatpush2.xpose.msra.mxu0 0.0
    %3321 = vmatprep.subr.mxu0 0.0
    %3322 = vmatpush2.xpose.msra.mxu0 0.0
    %3323 = vmatprep.subr.mxu0 0.0
    %3324 = vmatpush2.xpose.msra.mxu0 0.0
    %3325 = vmatprep.subr.mxu0 0.0
    %3326 = vmatpush2.xpose.msra.mxu0 0.0
    %3327 = vmatprep.subr.mxu0 0.0
    %3328 = vmatpush2.xpose.msra.mxu0 0.0
    %3329 = vmatprep.subr.mxu0 0.0
    %3330 = vmatpush2.xpose.msra.mxu0 0.0
    %3331 = vmatprep.subr.mxu0 0.0
    %3332 = vmatpush2.xpose.msra.mxu0 0.0
    %3333 = vmatprep.subr.mxu0 0.0
    %3334 = vmatpush2.xpose.msra.mxu0 0.0
    %3335 = vmatprep.subr.mxu0 0.0
    %3336 = vmatpush2.xpose.msra.mxu0 0.0
    %3337 = vmatprep.subr.mxu0 0.0
    %3338 = vmatpush2.xpose.msra.mxu0 0.0
    %3339 = vmatprep.mubr.f32.mxu0 0.0
    %3340 = vmatmul.mubr.f32.gmra.mxu0 %v3271
    %v3341 = vpop.f32.mrf.mxu0
    %v3342 = vadd.f32 %v344, %v3341
    %v3343 = vpop.f32.mrf.mxu0
    %3344 = vdwg.mxu0
    %3345 = vrot.lane.b32.xlu0 %v2276, 104
    %v3346 = vpop.permute.xlu0 %3345
    %3347 = vrot.lane.b32.xlu0 %v2276, 72
    %v3348 = vpop.permute.xlu0 %3347
    %v3349 = vsel %vm446, %v3346, 0
    %v3351 = vsel %vm446, %v3348, 0
    %3353 = vmatprep.subr.mxu0 0.0
    %3354 = vmatpush1.xpose.msra.mxu0 0.0
    %3355 = vmatprep.subr.mxu0 0.0
    %3356 = vmatpush1.xpose.msra.mxu0 0.0
    %3357 = vmatprep.subr.mxu0 0.0
    %3358 = vmatpush1.xpose.msra.mxu0 0.0
    %3359 = vmatprep.subr.mxu0 0.0
    %3360 = vmatpush1.xpose.msra.mxu0 0.0
    %3361 = vmatprep.subr.mxu0 0.0
    %3362 = vmatpush1.xpose.msra.mxu0 0.0
    %3363 = vmatprep.subr.mxu0 0.0
    %3364 = vmatpush1.xpose.msra.mxu0 0.0
    %3365 = vmatprep.subr.mxu0 0.0
    %3366 = vmatpush1.xpose.msra.mxu0 0.0
    %3367 = vmatprep.subr.mxu0 0.0
    %3368 = vmatpush1.xpose.msra.mxu0 0.0
    %3369 = vmatprep.subr.mxu0 0.0
    %3370 = vmatpush1.xpose.msra.mxu0 0.0
    %3371 = vmatprep.subr.mxu0 0.0
    %3372 = vmatpush1.xpose.msra.mxu0 0.0
    %3373 = vmatprep.subr.mxu0 0.0
    %3374 = vmatpush1.xpose.msra.mxu0 0.0
    %3375 = vmatprep.subr.mxu0 0.0
    %3376 = vmatpush1.xpose.msra.mxu0 0.0
    %3377 = vmatprep.subr.mxu0 0.0
    %3378 = vmatpush1.xpose.msra.mxu0 0.0
    %3379 = vmatprep.subr.mxu0 0.0
    %3380 = vmatpush1.xpose.msra.mxu0 0.0
    %3381 = vmatprep.subr.mxu0 0.0
    %3382 = vmatpush1.xpose.msra.mxu0 0.0
    %3383 = vmatprep.subr.mxu0 0.0
    %3384 = vmatpush1.xpose.msra.mxu0 %v3351
    %3385 = vmatprep.subr.mxu0 0.0
    %3386 = vmatpush2.xpose.msra.mxu0 0.0
    %3387 = vmatprep.subr.mxu0 0.0
    %3388 = vmatpush2.xpose.msra.mxu0 0.0
    %3389 = vmatprep.subr.mxu0 0.0
    %3390 = vmatpush2.xpose.msra.mxu0 0.0
    %3391 = vmatprep.subr.mxu0 0.0
    %3392 = vmatpush2.xpose.msra.mxu0 0.0
    %3393 = vmatprep.subr.mxu0 0.0
    %3394 = vmatpush2.xpose.msra.mxu0 0.0
    %3395 = vmatprep.subr.mxu0 0.0
    %3396 = vmatpush2.xpose.msra.mxu0 0.0
    %3397 = vmatprep.subr.mxu0 0.0
    %3398 = vmatpush2.xpose.msra.mxu0 0.0
    %3399 = vmatprep.subr.mxu0 0.0
    %3400 = vmatpush2.xpose.msra.mxu0 0.0
    %3401 = vmatprep.subr.mxu0 0.0
    %3402 = vmatpush2.xpose.msra.mxu0 0.0
    %3403 = vmatprep.subr.mxu0 0.0
    %3404 = vmatpush2.xpose.msra.mxu0 0.0
    %3405 = vmatprep.subr.mxu0 0.0
    %3406 = vmatpush2.xpose.msra.mxu0 0.0
    %3407 = vmatprep.subr.mxu0 0.0
    %3408 = vmatpush2.xpose.msra.mxu0 0.0
    %3409 = vmatprep.subr.mxu0 0.0
    %3410 = vmatpush2.xpose.msra.mxu0 0.0
    %3411 = vmatprep.subr.mxu0 0.0
    %3412 = vmatpush2.xpose.msra.mxu0 0.0
    %3413 = vmatprep.subr.mxu0 0.0
    %3414 = vmatpush2.xpose.msra.mxu0 0.0
    %3415 = vmatprep.subr.mxu0 0.0
    %3416 = vmatpush2.xpose.msra.mxu0 0.0
    %3417 = vmatprep.mubr.f32.mxu0 0.0
    %3418 = vmatmul.mubr.f32.gmra.mxu0 %v3349
    %v3419 = vpop.f32.mrf.mxu0
    %v3420 = vadd.f32 %v348, %v3419
    %v3421 = vpop.f32.mrf.mxu0
    %3422 = vdwg.mxu0
    %v3423 = vsel %vm446, %v3342, -inf
    %3424 = vmax.xlane.f32.xlu0 %v3423
    %v3425 = vpop.xlane.xlu0 %3424
    %v3426 = vsel %vm446, %v3420, -inf
    %3427 = vmax.xlane.f32.xlu0 %v3426
    %v3428 = vpop.xlane.xlu0 %3427
    %v3429 = vsub.f32 %v3342, %v3425
    %v3430 = vsub.f32 %v3420, %v3428
    %v3431 = vmul.f32 %v3429, 1.442695
    %v3432 = vpow.pop %v3431
    %v3433 = vmul.f32 %v3430, 1.442695
    %v3434 = vpow.pop %v3433
    %v3435 = vsel %vm446, %v3432, 0.0
    %3436 = vadd.xlane.f32.xlu0 %v3435
    %v3437 = vpop.xlane.xlu0 %3436
    %v3438 = vsel %vm446, %v3434, 0.0
    %3439 = vadd.xlane.f32.xlu0 %v3438
    %v3440 = vpop.xlane.xlu0 %3439
    %v3441 = vrcp.pop %v3437
    %v3442 = vmul.f32 %v3432, %v3441
    %v3443 = vrcp.pop %v3440
    %v3444 = vmul.f32 %v3434, %v3443
    %3445 = vrot.lane.b32.xlu0 %v2271, 40
    %v3446 = vpop.permute.xlu0 %3445
    %v3449 = vsel %vm446, %v3442, 0
    %3451 = vmatprep.subr.mxu0 0.0
    %3452 = vmatpush1.msra.mxu0 0.0
    %3453 = vmatprep.subr.mxu0 0.0
    %3454 = vmatpush1.msra.mxu0 0.0
    %3455 = vmatprep.subr.mxu0 0.0
    %3456 = vmatpush1.msra.mxu0 0.0
    %3457 = vmatprep.subr.mxu0 0.0
    %3458 = vmatpush1.msra.mxu0 0.0
    %3459 = vmatprep.subr.mxu0 0.0
    %3460 = vmatpush1.msra.mxu0 0.0
    %3461 = vmatprep.subr.mxu0 0.0
    %3462 = vmatpush1.msra.mxu0 0.0
    %3463 = vmatprep.subr.mxu0 0.0
    %3464 = vmatpush1.msra.mxu0 0.0
    %3465 = vmatprep.subr.mxu0 0.0
    %3466 = vmatpush1.msra.mxu0 0.0
    %3467 = vmatprep.subr.mxu0 0.0
    %3468 = vmatpush1.msra.mxu0 0.0
    %3469 = vmatprep.subr.mxu0 0.0
    %3470 = vmatpush1.msra.mxu0 0.0
    %3471 = vmatprep.subr.mxu0 0.0
    %3472 = vmatpush1.msra.mxu0 0.0
    %3473 = vmatprep.subr.mxu0 0.0
    %3474 = vmatpush1.msra.mxu0 0.0
    %3475 = vmatprep.subr.mxu0 0.0
    %3476 = vmatpush1.msra.mxu0 0.0
    %3477 = vmatprep.subr.mxu0 0.0
    %3478 = vmatpush1.msra.mxu0 0.0
    %3479 = vmatprep.subr.mxu0 0.0
    %3480 = vmatpush1.msra.mxu0 0.0
    %3481 = vmatprep.subr.mxu0 0.0
    %3482 = vmatpush1.msra.mxu0 %v3446
    %3483 = vmatprep.subr.mxu0 0.0
    %3484 = vmatpush2.msra.mxu0 0.0
    %3485 = vmatprep.subr.mxu0 0.0
    %3486 = vmatpush2.msra.mxu0 0.0
    %3487 = vmatprep.subr.mxu0 0.0
    %3488 = vmatpush2.msra.mxu0 0.0
    %3489 = vmatprep.subr.mxu0 0.0
    %3490 = vmatpush2.msra.mxu0 0.0
    %3491 = vmatprep.subr.mxu0 0.0
    %3492 = vmatpush2.msra.mxu0 0.0
    %3493 = vmatprep.subr.mxu0 0.0
    %3494 = vmatpush2.msra.mxu0 0.0
    %3495 = vmatprep.subr.mxu0 0.0
    %3496 = vmatpush2.msra.mxu0 0.0
    %3497 = vmatprep.subr.mxu0 0.0
    %3498 = vmatpush2.msra.mxu0 0.0
    %3499 = vmatprep.subr.mxu0 0.0
    %3500 = vmatpush2.msra.mxu0 0.0
    %3501 = vmatprep.subr.mxu0 0.0
    %3502 = vmatpush2.msra.mxu0 0.0
    %3503 = vmatprep.subr.mxu0 0.0
    %3504 = vmatpush2.msra.mxu0 0.0
    %3505 = vmatprep.subr.mxu0 0.0
    %3506 = vmatpush2.msra.mxu0 0.0
    %3507 = vmatprep.subr.mxu0 0.0
    %3508 = vmatpush2.msra.mxu0 0.0
    %3509 = vmatprep.subr.mxu0 0.0
    %3510 = vmatpush2.msra.mxu0 0.0
    %3511 = vmatprep.subr.mxu0 0.0
    %3512 = vmatpush2.msra.mxu0 0.0
    %3513 = vmatprep.subr.mxu0 0.0
    %3514 = vmatpush2.msra.mxu0 0.0
    %3515 = vmatprep.mubr.f32.mxu0 0.0
    %3516 = vmatmul.mubr.f32.gmra.mxu0 %v3449
    %v3517 = vpop.f32.mrf.mxu0
    %v3518 = vadd.f32 0.0, %v3517
    %v3519 = vpop.f32.mrf.mxu0
    %3520 = vdwg.mxu0
    %3521 = vrot.lane.b32.xlu0 %v2276, 40
    %v3522 = vpop.permute.xlu0 %3521
    %v3525 = vsel %vm446, %v3444, 0
    %3527 = vmatprep.subr.mxu0 0.0
    %3528 = vmatpush1.msra.mxu0 0.0
    %3529 = vmatprep.subr.mxu0 0.0
    %3530 = vmatpush1.msra.mxu0 0.0
    %3531 = vmatprep.subr.mxu0 0.0
    %3532 = vmatpush1.msra.mxu0 0.0
    %3533 = vmatprep.subr.mxu0 0.0
    %3534 = vmatpush1.msra.mxu0 0.0
    %3535 = vmatprep.subr.mxu0 0.0
    %3536 = vmatpush1.msra.mxu0 0.0
    %3537 = vmatprep.subr.mxu0 0.0
    %3538 = vmatpush1.msra.mxu0 0.0
    %3539 = vmatprep.subr.mxu0 0.0
    %3540 = vmatpush1.msra.mxu0 0.0
    %3541 = vmatprep.subr.mxu0 0.0
    %3542 = vmatpush1.msra.mxu0 0.0
    %3543 = vmatprep.subr.mxu0 0.0
    %3544 = vmatpush1.msra.mxu0 0.0
    %3545 = vmatprep.subr.mxu0 0.0
    %3546 = vmatpush1.msra.mxu0 0.0
    %3547 = vmatprep.subr.mxu0 0.0
    %3548 = vmatpush1.msra.mxu0 0.0
    %3549 = vmatprep.subr.mxu0 0.0
    %3550 = vmatpush1.msra.mxu0 0.0
    %3551 = vmatprep.subr.mxu0 0.0
    %3552 = vmatpush1.msra.mxu0 0.0
    %3553 = vmatprep.subr.mxu0 0.0
    %3554 = vmatpush1.msra.mxu0 0.0
    %3555 = vmatprep.subr.mxu0 0.0
    %3556 = vmatpush1.msra.mxu0 0.0
    %3557 = vmatprep.subr.mxu0 0.0
    %3558 = vmatpush1.msra.mxu0 %v3522
    %3559 = vmatprep.subr.mxu0 0.0
    %3560 = vmatpush2.msra.mxu0 0.0
    %3561 = vmatprep.subr.mxu0 0.0
    %3562 = vmatpush2.msra.mxu0 0.0
    %3563 = vmatprep.subr.mxu0 0.0
    %3564 = vmatpush2.msra.mxu0 0.0
    %3565 = vmatprep.subr.mxu0 0.0
    %3566 = vmatpush2.msra.mxu0 0.0
    %3567 = vmatprep.subr.mxu0 0.0
    %3568 = vmatpush2.msra.mxu0 0.0
    %3569 = vmatprep.subr.mxu0 0.0
    %3570 = vmatpush2.msra.mxu0 0.0
    %3571 = vmatprep.subr.mxu0 0.0
    %3572 = vmatpush2.msra.mxu0 0.0
    %3573 = vmatprep.subr.mxu0 0.0
    %3574 = vmatpush2.msra.mxu0 0.0
    %3575 = vmatprep.subr.mxu0 0.0
    %3576 = vmatpush2.msra.mxu0 0.0
    %3577 = vmatprep.subr.mxu0 0.0
    %3578 = vmatpush2.msra.mxu0 0.0
    %3579 = vmatprep.subr.mxu0 0.0
    %3580 = vmatpush2.msra.mxu0 0.0
    %3581 = vmatprep.subr.mxu0 0.0
    %3582 = vmatpush2.msra.mxu0 0.0
    %3583 = vmatprep.subr.mxu0 0.0
    %3584 = vmatpush2.msra.mxu0 0.0
    %3585 = vmatprep.subr.mxu0 0.0
    %3586 = vmatpush2.msra.mxu0 0.0
    %3587 = vmatprep.subr.mxu0 0.0
    %3588 = vmatpush2.msra.mxu0 0.0
    %3589 = vmatprep.subr.mxu0 0.0
    %3590 = vmatpush2.msra.mxu0 0.0
    %3591 = vmatprep.mubr.f32.mxu0 0.0
    %3592 = vmatmul.mubr.f32.gmra.mxu0 %v3525
    %v3593 = vpop.f32.mrf.mxu0
    %v3594 = vadd.f32 0.0, %v3593
    %v3595 = vpop.f32.mrf.mxu0
    %3596 = vdwg.mxu0
    %3599 = vrot.lane.b32.xlu0 %v2858, 8
    %v3600 = vpop.permute.xlu0 %3599
    %3601 = vrot.lane.b32.xlu0 %v2934, 8
    %v3602 = vpop.permute.xlu0 %3601
    %3607 = vrot.lane.b32.xlu0 %v3188, 16
    %v3608 = vpop.permute.xlu0 %3607
    %3609 = vrot.lane.b32.xlu0 %v3264, 16
    %v3610 = vpop.permute.xlu0 %3609
    %3615 = vrot.lane.b32.xlu0 %v3518, 24
    %v3616 = vpop.permute.xlu0 %3615
    %3617 = vrot.lane.b32.xlu0 %v3594, 24
    %v3618 = vpop.permute.xlu0 %3617
    %v3621 = vsel %vm446, %v2528, %v3600
    %v3622 = vsel %vm446, %v2604, %v3602
    %v3623 = vsel %vm1788, %v3621, %v3608
    %v3624 = vsel %vm1788, %v3622, %v3610
    %v3625 = vsel %vm1791, %v3623, %v3616
    %v3626 = vsel %vm1791, %v3624, %v3618
    %s3627 = scalar_lea.vmem %s10, 32
    %v3628 = vld [vmem:[%s3627] sm:$0xff]
    %v3629 = vld [vmem:[%s3627 + $0x8] sm:$0xff]
    %v3630 = vld [vmem:[%s3627 + $0x10] sm:$0xff]
    %v3631 = vld [vmem:[%s3627 + $0x18] sm:$0xff]
    %s3632 = scalar_lea.vmem %s11, 1
    %v3633 = vld [vmem:[%s3632] sm:$0x1]
    %v3635 = vlaneseq
    %v3636 = vshrl.u32 %v3635, 7
    %v3637 = vsub.s32 0, %v3636
    %v3638 = vrot.slane %v3633, %v3637
    %v3641 = vsel %vm293, %v3625, 0
    %v3644 = vsel %vm293, %v3626, 0
    %3646 = vmatprep.subr.mxu0 0.0
    %3647 = vmatpush1.msra.mxu0 0.0
    %3648 = vmatprep.subr.mxu0 0.0
    %3649 = vmatpush1.msra.mxu0 0.0
    %3650 = vmatprep.subr.mxu0 0.0
    %3651 = vmatpush1.msra.mxu0 0.0
    %3652 = vmatprep.subr.mxu0 0.0
    %3653 = vmatpush1.msra.mxu0 0.0
    %3654 = vmatprep.subr.mxu0 0.0
    %3655 = vmatpush1.msra.mxu0 0.0
    %3656 = vmatprep.subr.mxu0 0.0
    %3657 = vmatpush1.msra.mxu0 0.0
    %3658 = vmatprep.subr.mxu0 0.0
    %3659 = vmatpush1.msra.mxu0 0.0
    %3660 = vmatprep.subr.mxu0 0.0
    %3661 = vmatpush1.msra.mxu0 0.0
    %3662 = vmatprep.subr.mxu0 0.0
    %3663 = vmatpush1.msra.mxu0 0.0
    %3664 = vmatprep.subr.mxu0 0.0
    %3665 = vmatpush1.msra.mxu0 0.0
    %3666 = vmatprep.subr.mxu0 0.0
    %3667 = vmatpush1.msra.mxu0 0.0
    %3668 = vmatprep.subr.mxu0 0.0
    %3669 = vmatpush1.msra.mxu0 0.0
    %3670 = vmatprep.subr.mxu0 0.0
    %3671 = vmatpush1.msra.mxu0 %v3631
    %3672 = vmatprep.subr.mxu0 0.0
    %3673 = vmatpush1.msra.mxu0 %v3630
    %3674 = vmatprep.subr.mxu0 0.0
    %3675 = vmatpush1.msra.mxu0 %v3629
    %3676 = vmatprep.subr.mxu0 0.0
    %3677 = vmatpush1.msra.mxu0 %v3628
    %3678 = vmatprep.subr.mxu0 0.0
    %3679 = vmatpush2.msra.mxu0 0.0
    %3680 = vmatprep.subr.mxu0 0.0
    %3681 = vmatpush2.msra.mxu0 0.0
    %3682 = vmatprep.subr.mxu0 0.0
    %3683 = vmatpush2.msra.mxu0 0.0
    %3684 = vmatprep.subr.mxu0 0.0
    %3685 = vmatpush2.msra.mxu0 0.0
    %3686 = vmatprep.subr.mxu0 0.0
    %3687 = vmatpush2.msra.mxu0 0.0
    %3688 = vmatprep.subr.mxu0 0.0
    %3689 = vmatpush2.msra.mxu0 0.0
    %3690 = vmatprep.subr.mxu0 0.0
    %3691 = vmatpush2.msra.mxu0 0.0
    %3692 = vmatprep.subr.mxu0 0.0
    %3693 = vmatpush2.msra.mxu0 0.0
    %3694 = vmatprep.subr.mxu0 0.0
    %3695 = vmatpush2.msra.mxu0 0.0
    %3696 = vmatprep.subr.mxu0 0.0
    %3697 = vmatpush2.msra.mxu0 0.0
    %3698 = vmatprep.subr.mxu0 0.0
    %3699 = vmatpush2.msra.mxu0 0.0
    %3700 = vmatprep.subr.mxu0 0.0
    %3701 = vmatpush2.msra.mxu0 0.0
    %3702 = vmatprep.subr.mxu0 0.0
    %3703 = vmatpush2.msra.mxu0 0.0
    %3704 = vmatprep.subr.mxu0 0.0
    %3705 = vmatpush2.msra.mxu0 0.0
    %3706 = vmatprep.subr.mxu0 0.0
    %3707 = vmatpush2.msra.mxu0 0.0
    %3708 = vmatprep.subr.mxu0 0.0
    %3709 = vmatpush2.msra.mxu0 0.0
    %3710 = vmatprep.mubr.f32.mxu0 0.0
    %3711 = vmatmul.mubr.f32.gmra.mxu0 %v3641
    %v3712 = vpop.f32.mrf.mxu0
    %v3713 = vadd.f32 %v3638, %v3712
    %v3714 = vpop.f32.mrf.mxu0
    %3715 = vmatprep.mubr.f32.mxu0 0.0
    %3716 = vmatmul.mubr.f32.gmra.mxu0 %v3644
    %v3717 = vpop.f32.mrf.mxu0
    %v3718 = vadd.f32 %v3638, %v3717
    %v3719 = vpop.f32.mrf.mxu0
    %3720 = vdwg.mxu0
    %v3721 = vadd.f32 %v3713, %v2183
    %v3722 = vadd.f32 %v3718, %v2184
    %s3723 = scalar_lea.vmem %s12, 1
    %v3724 = vld [vmem:[%s3723] sm:$0x1]
    %s3725 = scalar_lea.vmem %s13, 1
    %v3726 = vld [vmem:[%s3725] sm:$0x1]
    %v3727 = vsel %vm293, %v3721, 0.0
    %3728 = vadd.xlane.f32.xlu0 %v3727
    %v3729 = vpop.xlane.xlu0 %3728
    %v3730 = vsel %vm293, %v3722, 0.0
    %3731 = vadd.xlane.f32.xlu0 %v3730
    %v3732 = vpop.xlane.xlu0 %3731
    %v3733 = vmul.f32 %v3729, %v300
    %v3734 = vmul.f32 %v3732, %v300
    %v3735 = vsub.f32 %v3721, %v3733
    %v3736 = vsub.f32 %v3722, %v3734
    %v3737 = vmul.f32 %v3735, %v3735
    %v3738 = vmul.f32 %v3736, %v3736
    %v3739 = vsel %vm293, %v3737, 0.0
    %3740 = vadd.xlane.f32.xlu0 %v3739
    %v3741 = vpop.xlane.xlu0 %3740
    %v3742 = vsel %vm293, %v3738, 0.0
    %3743 = vadd.xlane.f32.xlu0 %v3742
    %v3744 = vpop.xlane.xlu0 %3743
    %v3745 = vmul.f32 %v3741, %v300
    %v3746 = vmul.f32 %v3744, %v300
    %v3747 = vadd.f32 %v3745, 1e-12
    %v3748 = vadd.f32 %v3746, 1e-12
    %v3749 = vrsqrt.pop %v3747
    %v3750 = vrsqrt.pop %v3748
    %v3751 = vmul.f32 %v3735, %v3749
    %v3752 = vmul.f32 %v3736, %v3750
    %v3754 = vlaneseq
    %v3755 = vshrl.u32 %v3754, 7
    %v3756 = vsub.s32 0, %v3755
    %v3757 = vrot.slane %v3724, %v3756
    %v3759 = vmul.f32 %v3751, %v3757
    %v3760 = vmul.f32 %v3752, %v3757
    %v3762 = vlaneseq
    %v3763 = vshrl.u32 %v3762, 7
    %v3764 = vsub.s32 0, %v3763
    %v3765 = vrot.slane %v3726, %v3764
    %v3767 = vadd.f32 %v3759, %v3765
    %v3768 = vadd.f32 %v3760, %v3765
    %s3769 = scalar_lea.vmem %s14, 32
    %v3770 = vld [vmem:[%s3769] sm:$0xff]
    %v3771 = vld [vmem:[%s3769 + $0x8] sm:$0xff]
    %v3772 = vld [vmem:[%s3769 + $0x10] sm:$0xff]
    %v3773 = vld [vmem:[%s3769 + $0x18] sm:$0xff]
    %s3774 = scalar_lea.vmem %s15, 1
    %v3775 = vld [vmem:[%s3774] sm:$0x1]
    %v3777 = vlaneseq
    %v3778 = vshrl.u32 %v3777, 7
    %v3779 = vsub.s32 0, %v3778
    %v3780 = vrot.slane %v3775, %v3779
    %v3783 = vsel %vm293, %v3767, 0
    %v3786 = vsel %vm293, %v3768, 0
    %3788 = vmatprep.subr.mxu0 0.0
    %3789 = vmatpush1.msra.mxu0 0.0
    %3790 = vmatprep.subr.mxu0 0.0
    %3791 = vmatpush1.msra.mxu0 0.0
    %3792 = vmatprep.subr.mxu0 0.0
    %3793 = vmatpush1.msra.mxu0 0.0
    %3794 = vmatprep.subr.mxu0 0.0
    %3795 = vmatpush1.msra.mxu0 0.0
    %3796 = vmatprep.subr.mxu0 0.0
    %3797 = vmatpush1.msra.mxu0 0.0
    %3798 = vmatprep.subr.mxu0 0.0
    %3799 = vmatpush1.msra.mxu0 0.0
    %3800 = vmatprep.subr.mxu0 0.0
    %3801 = vmatpush1.msra.mxu0 0.0
    %3802 = vmatprep.subr.mxu0 0.0
    %3803 = vmatpush1.msra.mxu0 0.0
    %3804 = vmatprep.subr.mxu0 0.0
    %3805 = vmatpush1.msra.mxu0 0.0
    %3806 = vmatprep.subr.mxu0 0.0
    %3807 = vmatpush1.msra.mxu0 0.0
    %3808 = vmatprep.subr.mxu0 0.0
    %3809 = vmatpush1.msra.mxu0 0.0
    %3810 = vmatprep.subr.mxu0 0.0
    %3811 = vmatpush1.msra.mxu0 0.0
    %3812 = vmatprep.subr.mxu0 0.0
    %3813 = vmatpush1.msra.mxu0 %v3773
    %3814 = vmatprep.subr.mxu0 0.0
    %3815 = vmatpush1.msra.mxu0 %v3772
    %3816 = vmatprep.subr.mxu0 0.0
    %3817 = vmatpush1.msra.mxu0 %v3771
    %3818 = vmatprep.subr.mxu0 0.0
    %3819 = vmatpush1.msra.mxu0 %v3770
    %3820 = vmatprep.subr.mxu0 0.0
    %3821 = vmatpush2.msra.mxu0 0.0
    %3822 = vmatprep.subr.mxu0 0.0
    %3823 = vmatpush2.msra.mxu0 0.0
    %3824 = vmatprep.subr.mxu0 0.0
    %3825 = vmatpush2.msra.mxu0 0.0
    %3826 = vmatprep.subr.mxu0 0.0
    %3827 = vmatpush2.msra.mxu0 0.0
    %3828 = vmatprep.subr.mxu0 0.0
    %3829 = vmatpush2.msra.mxu0 0.0
    %3830 = vmatprep.subr.mxu0 0.0
    %3831 = vmatpush2.msra.mxu0 0.0
    %3832 = vmatprep.subr.mxu0 0.0
    %3833 = vmatpush2.msra.mxu0 0.0
    %3834 = vmatprep.subr.mxu0 0.0
    %3835 = vmatpush2.msra.mxu0 0.0
    %3836 = vmatprep.subr.mxu0 0.0
    %3837 = vmatpush2.msra.mxu0 0.0
    %3838 = vmatprep.subr.mxu0 0.0
    %3839 = vmatpush2.msra.mxu0 0.0
    %3840 = vmatprep.subr.mxu0 0.0
    %3841 = vmatpush2.msra.mxu0 0.0
    %3842 = vmatprep.subr.mxu0 0.0
    %3843 = vmatpush2.msra.mxu0 0.0
    %3844 = vmatprep.subr.mxu0 0.0
    %3845 = vmatpush2.msra.mxu0 0.0
    %3846 = vmatprep.subr.mxu0 0.0
    %3847 = vmatpush2.msra.mxu0 0.0
    %3848 = vmatprep.subr.mxu0 0.0
    %3849 = vmatpush2.msra.mxu0 0.0
    %3850 = vmatprep.subr.mxu0 0.0
    %3851 = vmatpush2.msra.mxu0 0.0
    %3852 = vmatprep.mubr.f32.mxu0 0.0
    %3853 = vmatmul.mubr.f32.gmra.mxu0 %v3783
    %v3854 = vpop.f32.mrf.mxu0
    %v3855 = vadd.f32 %v3780, %v3854
    %v3856 = vpop.f32.mrf.mxu0
    %3857 = vmatprep.mubr.f32.mxu0 0.0
    %3858 = vmatmul.mubr.f32.gmra.mxu0 %v3786
    %v3859 = vpop.f32.mrf.mxu0
    %v3860 = vadd.f32 %v3780, %v3859
    %v3861 = vpop.f32.mrf.mxu0
    %3862 = vdwg.mxu0
    %v3863 = vmul.f32 %v3855, 0.5
    %v3864 = vmul.f32 %v3860, 0.5
    %v3865 = vmul.f32 %v3855, 0.044715
    %v3866 = vmul.f32 %v3860, 0.044715
    %v3867 = vmul.f32 %v3865, %v3855
    %v3868 = vmul.f32 %v3866, %v3860
    %v3869 = vmul.f32 %v3867, %v3855
    %v3870 = vmul.f32 %v3868, %v3860
    %v3871 = vadd.f32 %v3855, %v3869
    %v3872 = vadd.f32 %v3860, %v3870
    %v3873 = vmul.f32 %v3871, 0.7978846
    %v3874 = vmul.f32 %v3872, 0.7978846
    %v3875 = vtanh.pop %v3873
    %v3876 = vtanh.pop %v3874
    %v3877 = vadd.f32 %v3875, 1.0
    %v3878 = vadd.f32 %v3876, 1.0
    %v3879 = vmul.f32 %v3863, %v3877
    %v3880 = vmul.f32 %v3864, %v3878
    %s3881 = scalar_lea.vmem %s16, 64
    %v3882 = vld [vmem:[%s3881] sm:$0xff]
    %v3883 = vld [vmem:[%s3881 + $0x8] sm:$0xff]
    %v3884 = vld [vmem:[%s3881 + $0x10] sm:$0xff]
    %v3885 = vld [vmem:[%s3881 + $0x18] sm:$0xff]
    %v3886 = vld [vmem:[%s3881 + $0x20] sm:$0xff]
    %v3887 = vld [vmem:[%s3881 + $0x28] sm:$0xff]
    %v3888 = vld [vmem:[%s3881 + $0x30] sm:$0xff]
    %v3889 = vld [vmem:[%s3881 + $0x38] sm:$0xff]
    %s3890 = scalar_lea.vmem %s17, 1
    %v3891 = vld [vmem:[%s3890] sm:$0x1]
    %v3893 = vlaneseq
    %v3894 = vshrl.u32 %v3893, 7
    %v3895 = vsub.s32 0, %v3894
    %v3896 = vrot.slane %v3891, %v3895
    %v3899 = vsel %vm2057, %v3879, 0
    %v3902 = vsel %vm2057, %v3880, 0
    %3904 = vmatprep.subr.mxu0 0.0
    %3905 = vmatpush1.msra.mxu0 0.0
    %3906 = vmatprep.subr.mxu0 0.0
    %3907 = vmatpush1.msra.mxu0 0.0
    %3908 = vmatprep.subr.mxu0 0.0
    %3909 = vmatpush1.msra.mxu0 0.0
    %3910 = vmatprep.subr.mxu0 0.0
    %3911 = vmatpush1.msra.mxu0 0.0
    %3912 = vmatprep.subr.mxu0 0.0
    %3913 = vmatpush1.msra.mxu0 0.0
    %3914 = vmatprep.subr.mxu0 0.0
    %3915 = vmatpush1.msra.mxu0 0.0
    %3916 = vmatprep.subr.mxu0 0.0
    %3917 = vmatpush1.msra.mxu0 0.0
    %3918 = vmatprep.subr.mxu0 0.0
    %3919 = vmatpush1.msra.mxu0 0.0
    %3920 = vmatprep.subr.mxu0 0.0
    %3921 = vmatpush1.msra.mxu0 %v3889
    %3922 = vmatprep.subr.mxu0 0.0
    %3923 = vmatpush1.msra.mxu0 %v3888
    %3924 = vmatprep.subr.mxu0 0.0
    %3925 = vmatpush1.msra.mxu0 %v3887
    %3926 = vmatprep.subr.mxu0 0.0
    %3927 = vmatpush1.msra.mxu0 %v3886
    %3928 = vmatprep.subr.mxu0 0.0
    %3929 = vmatpush1.msra.mxu0 %v3885
    %3930 = vmatprep.subr.mxu0 0.0
    %3931 = vmatpush1.msra.mxu0 %v3884
    %3932 = vmatprep.subr.mxu0 0.0
    %3933 = vmatpush1.msra.mxu0 %v3883
    %3934 = vmatprep.subr.mxu0 0.0
    %3935 = vmatpush1.msra.mxu0 %v3882
    %3936 = vmatprep.subr.mxu0 0.0
    %3937 = vmatpush2.msra.mxu0 0.0
    %3938 = vmatprep.subr.mxu0 0.0
    %3939 = vmatpush2.msra.mxu0 0.0
    %3940 = vmatprep.subr.mxu0 0.0
    %3941 = vmatpush2.msra.mxu0 0.0
    %3942 = vmatprep.subr.mxu0 0.0
    %3943 = vmatpush2.msra.mxu0 0.0
    %3944 = vmatprep.subr.mxu0 0.0
    %3945 = vmatpush2.msra.mxu0 0.0
    %3946 = vmatprep.subr.mxu0 0.0
    %3947 = vmatpush2.msra.mxu0 0.0
    %3948 = vmatprep.subr.mxu0 0.0
    %3949 = vmatpush2.msra.mxu0 0.0
    %3950 = vmatprep.subr.mxu0 0.0
    %3951 = vmatpush2.msra.mxu0 0.0
    %3952 = vmatprep.subr.mxu0 0.0
    %3953 = vmatpush2.msra.mxu0 0.0
    %3954 = vmatprep.subr.mxu0 0.0
    %3955 = vmatpush2.msra.mxu0 0.0
    %3956 = vmatprep.subr.mxu0 0.0
    %3957 = vmatpush2.msra.mxu0 0.0
    %3958 = vmatprep.subr.mxu0 0.0
    %3959 = vmatpush2.msra.mxu0 0.0
    %3960 = vmatprep.subr.mxu0 0.0
    %3961 = vmatpush2.msra.mxu0 0.0
    %3962 = vmatprep.subr.mxu0 0.0
    %3963 = vmatpush2.msra.mxu0 0.0
    %3964 = vmatprep.subr.mxu0 0.0
    %3965 = vmatpush2.msra.mxu0 0.0
    %3966 = vmatprep.subr.mxu0 0.0
    %3967 = vmatpush2.msra.mxu0 0.0
    %3968 = vmatprep.mubr.f32.mxu0 0.0
    %3969 = vmatmul.mubr.f32.gmra.mxu0 %v3899
    %v3970 = vpop.f32.mrf.mxu0
    %v3971 = vadd.f32 %v3896, %v3970
    %v3972 = vpop.f32.mrf.mxu0
    %3973 = vmatprep.mubr.f32.mxu0 0.0
    %3974 = vmatmul.mubr.f32.gmra.mxu0 %v3902
    %v3975 = vpop.f32.mrf.mxu0
    %v3976 = vadd.f32 %v3896, %v3975
    %v3977 = vpop.f32.mrf.mxu0
    %3978 = vdwg.mxu0
    %v3979 = vadd.f32 %v3971, %v3767
    %v3980 = vadd.f32 %v3976, %v3768
    %s3981 = scalar_lea.vmem %s18, 1
    %v3982 = vld [vmem:[%s3981] sm:$0x1]
    %s3983 = scalar_lea.vmem %s19, 1
    %v3984 = vld [vmem:[%s3983] sm:$0x1]
    %v3985 = vsel %vm293, %v3979, 0.0
    %3986 = vadd.xlane.f32.xlu0 %v3985
    %v3987 = vpop.xlane.xlu0 %3986
    %v3988 = vsel %vm293, %v3980, 0.0
    %3989 = vadd.xlane.f32.xlu0 %v3988
    %v3990 = vpop.xlane.xlu0 %3989
    %v3991 = vmul.f32 %v3987, %v300
    %v3992 = vmul.f32 %v3990, %v300
    %v3993 = vsub.f32 %v3979, %v3991
    %v3994 = vsub.f32 %v3980, %v3992
    %v3995 = vmul.f32 %v3993, %v3993
    %v3996 = vmul.f32 %v3994, %v3994
    %v3997 = vsel %vm293, %v3995, 0.0
    %3998 = vadd.xlane.f32.xlu0 %v3997
    %v3999 = vpop.xlane.xlu0 %3998
    %v4000 = vsel %vm293, %v3996, 0.0
    %4001 = vadd.xlane.f32.xlu0 %v4000
    %v4002 = vpop.xlane.xlu0 %4001
    %v4003 = vmul.f32 %v3999, %v300
    %v4004 = vmul.f32 %v4002, %v300
    %v4005 = vadd.f32 %v4003, 1e-12
    %v4006 = vadd.f32 %v4004, 1e-12
    %v4007 = vrsqrt.pop %v4005
    %v4008 = vrsqrt.pop %v4006
    %v4009 = vmul.f32 %v3993, %v4007
    %v4010 = vmul.f32 %v3994, %v4008
    %v4012 = vlaneseq
    %v4013 = vshrl.u32 %v4012, 7
    %v4014 = vsub.s32 0, %v4013
    %v4015 = vrot.slane %v3982, %v4014
    %v4017 = vmul.f32 %v4009, %v4015
    %v4018 = vmul.f32 %v4010, %v4015
    %v4020 = vlaneseq
    %v4021 = vshrl.u32 %v4020, 7
    %v4022 = vsub.s32 0, %v4021
    %v4023 = vrot.slane %v3984, %v4022
    %v4025 = vadd.f32 %v4017, %v4023
    %v4026 = vadd.f32 %v4018, %v4023
    %v4027 = vld [vmem:[%s20] sm:$0xff]
    %v4028 = vld [vmem:[%s20 + $0x8] sm:$0xff]
    %v4029 = vld [vmem:[%s20 + $0x10] sm:$0xff]
    %v4030 = vld [vmem:[%s20 + $0x18] sm:$0xff]
    %v4031 = vld [vmem:[%s21] sm:$0x1]
    %v4033 = vlaneseq
    %v4034 = vshrl.u32 %v4033, 7
    %v4035 = vsub.s32 0, %v4034
    %v4036 = vrot.slane %v4031, %v4035
    %v4040 = vrot.slane %v4026, 7
    %vm4041 = vcmask 1041409
    %v4042 = vsel %vm4041, %v4040, %v4025
    %v4043 = vsel %vm293, %v4042, 0
    %4045 = vmatprep.subr.mxu0 0.0
    %4046 = vmatpush1.msra.mxu0 0.0
    %4047 = vmatprep.subr.mxu0 0.0
    %4048 = vmatpush1.msra.mxu0 0.0
    %4049 = vmatprep.subr.mxu0 0.0
    %4050 = vmatpush1.msra.mxu0 0.0
    %4051 = vmatprep.subr.mxu0 0.0
    %4052 = vmatpush1.msra.mxu0 0.0
    %4053 = vmatprep.subr.mxu0 0.0
    %4054 = vmatpush1.msra.mxu0 0.0
    %4055 = vmatprep.subr.mxu0 0.0
    %4056 = vmatpush1.msra.mxu0 0.0
    %4057 = vmatprep.subr.mxu0 0.0
    %4058 = vmatpush1.msra.mxu0 0.0
    %4059 = vmatprep.subr.mxu0 0.0
    %4060 = vmatpush1.msra.mxu0 0.0
    %4061 = vmatprep.subr.mxu0 0.0
    %4062 = vmatpush1.msra.mxu0 0.0
    %4063 = vmatprep.subr.mxu0 0.0
    %4064 = vmatpush1.msra.mxu0 0.0
    %4065 = vmatprep.subr.mxu0 0.0
    %4066 = vmatpush1.msra.mxu0 0.0
    %4067 = vmatprep.subr.mxu0 0.0
    %4068 = vmatpush1.msra.mxu0 0.0
    %4069 = vmatprep.subr.mxu0 0.0
    %4070 = vmatpush1.msra.mxu0 %v4030
    %4071 = vmatprep.subr.mxu0 0.0
    %4072 = vmatpush1.msra.mxu0 %v4029
    %4073 = vmatprep.subr.mxu0 0.0
    %4074 = vmatpush1.msra.mxu0 %v4028
    %4075 = vmatprep.subr.mxu0 0.0
    %4076 = vmatpush1.msra.mxu0 %v4027
    %4077 = vmatprep.subr.mxu0 0.0
    %4078 = vmatpush2.msra.mxu0 0.0
    %4079 = vmatprep.subr.mxu0 0.0
    %4080 = vmatpush2.msra.mxu0 0.0
    %4081 = vmatprep.subr.mxu0 0.0
    %4082 = vmatpush2.msra.mxu0 0.0
    %4083 = vmatprep.subr.mxu0 0.0
    %4084 = vmatpush2.msra.mxu0 0.0
    %4085 = vmatprep.subr.mxu0 0.0
    %4086 = vmatpush2.msra.mxu0 0.0
    %4087 = vmatprep.subr.mxu0 0.0
    %4088 = vmatpush2.msra.mxu0 0.0
    %4089 = vmatprep.subr.mxu0 0.0
    %4090 = vmatpush2.msra.mxu0 0.0
    %4091 = vmatprep.subr.mxu0 0.0
    %4092 = vmatpush2.msra.mxu0 0.0
    %4093 = vmatprep.subr.mxu0 0.0
    %4094 = vmatpush2.msra.mxu0 0.0
    %4095 = vmatprep.subr.mxu0 0.0
    %4096 = vmatpush2.msra.mxu0 0.0
    %4097 = vmatprep.subr.mxu0 0.0
    %4098 = vmatpush2.msra.mxu0 0.0
    %4099 = vmatprep.subr.mxu0 0.0
    %4100 = vmatpush2.msra.mxu0 0.0
    %4101 = vmatprep.subr.mxu0 0.0
    %4102 = vmatpush2.msra.mxu0 0.0
    %4103 = vmatprep.subr.mxu0 0.0
    %4104 = vmatpush2.msra.mxu0 0.0
    %4105 = vmatprep.subr.mxu0 0.0
    %4106 = vmatpush2.msra.mxu0 0.0
    %4107 = vmatprep.subr.mxu0 0.0
    %4108 = vmatpush2.msra.mxu0 0.0
    %4109 = vmatprep.mubr.f32.mxu0 0.0
    %4110 = vmatmul.mubr.f32.gmra.mxu0 %v4043
    %v4111 = vpop.f32.mrf.mxu0
    %v4112 = vadd.f32 %v4036, %v4111
    %v4113 = vpop.f32.mrf.mxu0
    %4114 = vdwg.mxu0
    %v4115 = vtanh.pop %v4112
    %vm4116 = vcmask 254976
    %4117 = vst.msk [vmem:[#allocation2] sm:$0x3] %vm4116, %v4115
    // Predicated region
    $region90: #{text_encoder_forward.1} parent=1 // pred_check
      _
    $region91: #{text_encoder_forward.1} parent=1 // pred_check_branch
      %4119 = sbr.rel (0) target = $region93
    $region92: #{text_encoder_forward.1} parent=1 // pred_region
      %s4121 = ssub.s32 32, 32
      %4122 = vsyncadd [#allocation3], %s4121
      %s4124 = sshll.u32 [#allocation2], 4
      %s4125 = int_to_ptr.vmem [resolvable:$true] %s4124
      %4127 = dma.vmem_to_hbm [thread:$0]  %s4125, 32, %s22, [#allocation3]
    $region93: #{text_encoder_forward.1} parent=1 // pred_fallthru
      _
    // Predicated region
    $region94: #{text_encoder_forward.1} parent=1 // pred_check
      _
    $region95: #{text_encoder_forward.1} parent=1 // pred_check_branch
      %4129 = sbr.rel (0) target = $region97
    $region96: #{text_encoder_forward.1} parent=1 // pred_region
      %4130 = dma.done [#allocation3], 32
    $region97: #{text_encoder_forward.1} parent=1 // pred_fallthru
      _
    %4131 = vsyncpa [#allocation3], 1

</llo_original>
